<compile_context>
chip_gen: v7x
topology: tpu7x:2x2x1
jax: 0.10.0
libtpu: 0.0.40
codegen_flags: <defaults>
</compile_context>

<pallas_src>
import jax
import jax.numpy as jnp
from jax import lax
from jax.experimental import pallas as pl
from jax.experimental.pallas import tpu as pltpu

INPUT = 20
HIDDEN = 20
NUM_CLASSES = 2
BATCH = 1
PACKED = 2 * HIDDEN  # 40


def birnn_fc_kernel(x_ref, wih_ref, whh_ref, b_ref, fcwf_ref, fcwb_ref,
                    fcb_ref, out_ref, xproj_scr, yf_scr, yb_scr):
    seq = x_ref.shape[0]

    # ---- Pre-loop: both directions' input projections in ONE MXU matmul. ----
    #   wih_ref = [Wih_f^T | Wih_b^T]  (20, 40)
    #   xproj[i] = [x[i] @ Wih_f^T | x[i] @ Wih_b^T]
    xproj = jnp.dot(x_ref[...], wih_ref[...],
                    preferred_element_type=jnp.float32)          # (seq, 40)

    # Time-reverse via a tiny in-kernel reversal matrix (iota-built, MXU):
    #   xproj_rev[i] = xproj[seq - 1 - i]
    rows = lax.broadcasted_iota(jnp.int32, (seq, seq), 0)
    cols = lax.broadcasted_iota(jnp.int32, (seq, seq), 1)
    rev = jnp.where(rows + cols == seq - 1,
                    jnp.float32(1.0), jnp.float32(0.0))          # (seq, seq)
    xproj_rev = jnp.dot(rev, xproj, preferred_element_type=jnp.float32)

    # Pack: forward lanes time-aligned, backward lanes time-reversed; add the
    # fused biases (b_ref = [b_ih_f + b_hh_f | b_ih_b + b_hh_b]).
    lane = lax.broadcasted_iota(jnp.int32, (seq, PACKED), 1)
    xproj_scr[...] = jnp.where(lane < HIDDEN, xproj, xproj_rev) + b_ref[...]

    # ---- Hoist loop-invariant weights into vregs (loaded once). ----
    whh = whh_ref[...]    # blockdiag(Whh_f^T, Whh_b^T), (40, 40)
    fcwf = fcwf_ref[...]  # (40, 2), zero rows for backward lanes
    fcwb = fcwb_ref[...]  # (40, 2), zero rows for forward lanes

    h0 = jnp.zeros((1, PACKED), jnp.float32)

    def step(i, h):
        # One packed (1,40)@(40,40) dot + one tanh covers both directions.
        pre = xproj_scr[pl.ds(i, 1), :] + jnp.dot(
            h, whh, preferred_element_type=jnp.float32)
        h_new = jnp.tanh(pre)
        # FC head folded into the loop: per-direction contributions go to the
        # time-aligned (fwd) / time-reversed (bwd) rows of tiny (seq,2)
        # scratches.  Zero-padded FC weights make this exact.
        yf_scr[pl.ds(i, 1), :] = jnp.dot(
            h_new, fcwf, preferred_element_type=jnp.float32)
        yb_scr[pl.ds(seq - 1 - i, 1), :] = jnp.dot(
            h_new, fcwb, preferred_element_type=jnp.float32)
        return h_new

    # seq is static (20): fully unroll so the scheduler overlaps the per-step
    # row load / FC dots / stores with the MXU->VPU->EUP recurrence latency.
    lax.fori_loop(0, seq, step, h0, unroll=True)

    # Pure-VPU epilogue: y[t] = Hf[t]@Wfc[:, :20]^T + Hb[t]@Wfc[:, 20:]^T + b.
    out_ref[...] = yf_scr[...] + yb_scr[...] + fcb_ref[...]


def model_forward(x, packed_params):
    """x: any array with batch=1 and numel divisible by 20 (like the torch view)."""
    seq = x.size // (BATCH * INPUT)
    x2 = x.reshape(seq, INPUT).astype(jnp.float32)

    wih_cat, whh_bd, b_pk, fcw_f, fcw_b, fcb = packed_params
    vmem = pl.BlockSpec(memory_space=pltpu.MemorySpace.VMEM)

    # Advisory cost hint so XLA overlaps this few-microsecond kernel instead of
    # serializing it with surrounding ops.
    flops = (2 * seq * INPUT * PACKED          # input projection
             + 2 * seq * seq * PACKED          # in-kernel time reversal
             + 2 * seq * PACKED * PACKED       # recurrence
             + 2 * 2 * seq * PACKED * NUM_CLASSES)  # folded FC head
    bytes_accessed = 4 * (seq * INPUT + INPUT * PACKED + PACKED * PACKED
                          + PACKED + 2 * PACKED * NUM_CLASSES + NUM_CLASSES
                          + seq * NUM_CLASSES)

    out = pl.pallas_call(
        birnn_fc_kernel,
        out_shape=jax.ShapeDtypeStruct((seq, NUM_CLASSES), jnp.float32),
        in_specs=[vmem] * 7,
        out_specs=vmem,
        scratch_shapes=[
            pltpu.VMEM((seq, PACKED), jnp.float32),       # packed input proj
            pltpu.VMEM((seq, NUM_CLASSES), jnp.float32),  # fwd FC contribution
            pltpu.VMEM((seq, NUM_CLASSES), jnp.float32),  # bwd FC contribution
        ],
        cost_estimate=pl.CostEstimate(
            flops=flops, transcendentals=seq * PACKED,
            bytes_accessed=bytes_accessed),
    )(x2, wih_cat, whh_bd, b_pk, fcw_f, fcw_b, fcb)
    return out  # (seq, 2) == torch fc(out.view(-1, 40))


def init_torch_params(key):
    """Deterministic init mimicking PyTorch's U(-1/sqrt(H), 1/sqrt(H)), torch layouts."""
    bound = 1.0 / jnp.sqrt(jnp.float32(HIDDEN))
    ks = jax.random.split(key, 10)
    u = lambda k, shape: jax.random.uniform(k, shape, jnp.float32, -bound, bound)
    wih_f = u(ks[0], (HIDDEN, INPUT))
    whh_f = u(ks[1], (HIDDEN, HIDDEN))
    bih_f = u(ks[2], (HIDDEN,))
    bhh_f = u(ks[3], (HIDDEN,))
    wih_b = u(ks[4], (HIDDEN, INPUT))
    whh_b = u(ks[5], (HIDDEN, HIDDEN))
    bih_b = u(ks[6], (HIDDEN,))
    bhh_b = u(ks[7], (HIDDEN,))
    fcw = u(ks[8], (NUM_CLASSES, 2 * HIDDEN))
    fcb = u(ks[9], (NUM_CLASSES,))
    return (wih_f, whh_f, bih_f, bhh_f, wih_b, whh_b, bih_b, bhh_b, fcw, fcb)


def pack_params(tp):
    """Packed / block-diagonal / zero-padded weights for the fused kernel."""
    (wih_f, whh_f, bih_f, bhh_f, wih_b, whh_b, bih_b, bhh_b, fcw, fcb) = tp

    # Both directions' input projections share one (20, 40) RHS.
    wih_cat = jnp.concatenate([wih_f.T, wih_b.T], axis=1)  # (20, 40)

    whh_bd = jnp.zeros((PACKED, PACKED), jnp.float32)
    whh_bd = whh_bd.at[:HIDDEN, :HIDDEN].set(whh_f.T)
    whh_bd = whh_bd.at[HIDDEN:, HIDDEN:].set(whh_b.T)

    b_pk = jnp.concatenate([bih_f + bhh_f, bih_b + bhh_b]).reshape(1, PACKED)

    fcw_t = fcw.T  # (40, 2)
    fcw_fwd = fcw_t.at[HIDDEN:, :].set(0.0)  # only forward lanes contribute
    fcw_bwd = fcw_t.at[:HIDDEN, :].set(0.0)  # only backward lanes contribute
    fcb2 = fcb.reshape(1, NUM_CLASSES)

    return (wih_cat, whh_bd, b_pk, fcw_fwd, fcw_bwd, fcb2)


def ref_forward(x, tp):
    """Pure-JAX reference matching torch nn.RNN(bidirectional) + Linear."""
    (wih_f, whh_f, bih_f, bhh_f, wih_b, whh_b, bih_b, bhh_b, fcw, fcb) = tp
    seq = x.size // (BATCH * INPUT)
    x2 = x.reshape(seq, INPUT).astype(jnp.float32)

    h = jnp.zeros((HIDDEN,), jnp.float32)
    hf = []
    for t in range(seq):
        h = jnp.tanh(x2[t] @ wih_f.T + bih_f + h @ whh_f.T + bhh_f)
        hf.append(h)
    h = jnp.zeros((HIDDEN,), jnp.float32)
    hb = [None] * seq
    for t in range(seq - 1, -1, -1):
        h = jnp.tanh(x2[t] @ wih_b.T + bih_b + h @ whh_b.T + bhh_b)
        hb[t] = h
    out = jnp.concatenate([jnp.stack(hf), jnp.stack(hb)], axis=1)  # (seq, 40)
    return out @ fcw.T + fcb


if __name__ == "__main__":
    key = jax.random.PRNGKey(0)
    k_x, k_p = jax.random.split(key)

    # Input consistent with the module: views to (batch=1, seq=20, feat=20).
    x = jax.random.normal(k_x, (BATCH, 20, 20), jnp.float32)
    torch_params = init_torch_params(k_p)
    packed_params = pack_params(torch_params)

    out = model_forward(x, packed_params)
    out = jax.block_until_ready(out)

    ref = ref_forward(x, torch_params)
    assert out.shape == (20, NUM_CLASSES), out.shape
    assert jnp.allclose(out, ref, atol=1e-5, rtol=1e-5), (
        float(jnp.max(jnp.abs(out - ref))))

    print("KERNEL_OK")
</pallas_src>

<mosaic_0001>
module attributes {stable_mosaic.version = 11 : i64} {
  func.func @birnn_fc_kernel(%arg0: memref<20x20xf32, #tpu.memory_space<vmem>>, %arg1: memref<20x40xf32, #tpu.memory_space<vmem>>, %arg2: memref<40x40xf32, #tpu.memory_space<vmem>>, %arg3: memref<1x40xf32, #tpu.memory_space<vmem>>, %arg4: memref<40x2xf32, #tpu.memory_space<vmem>>, %arg5: memref<40x2xf32, #tpu.memory_space<vmem>>, %arg6: memref<1x2xf32, #tpu.memory_space<vmem>>, %arg7: memref<20x2xf32, #tpu.memory_space<vmem>>, %arg8: memref<20x40xf32, #tpu.memory_space<vmem>>, %arg9: memref<20x2xf32, #tpu.memory_space<vmem>>, %arg10: memref<20x2xf32, #tpu.memory_space<vmem>>) attributes {dimension_semantics = [], scalar_prefetch = 0 : i64, scratch_operands = 3 : i64, tpu.core_type = #tpu.core_type<tc>} {
    %c0 = arith.constant 0 : index
    %c0_0 = arith.constant 0 : index
    %0 = vector.load %arg0[%c0, %c0_0] : memref<20x20xf32, #tpu.memory_space<vmem>>, vector<20x20xf32>
    %c0_1 = arith.constant 0 : index
    %c0_2 = arith.constant 0 : index
    %1 = vector.load %arg1[%c0_1, %c0_2] : memref<20x40xf32, #tpu.memory_space<vmem>>, vector<20x40xf32>
    %cst = arith.constant dense<0.000000e+00> : vector<20x40xf32>
    %2 = tpu.matmul %0, %1, %cst {dimension_numbers = #tpu.dot_dimension_numbers<[1], [0], [0], [1], [0, 0, 1, 1], [], []>} : vector<20x20xf32>, vector<20x40xf32>, vector<20x40xf32> -> vector<20x40xf32>
    %3 = tpu.iota {dimensions = array<i32: 0>} : vector<20x20xi32>
    %4 = tpu.iota {dimensions = array<i32: 1>} : vector<20x20xi32>
    %5 = arith.addi %3, %4 : vector<20x20xi32>
    %c19_i32 = arith.constant 19 : i32
    %6 = vector.broadcast %c19_i32 : i32 to vector<20x20xi32>
    %7 = arith.cmpi eq, %5, %6 : vector<20x20xi32>
    %cst_3 = arith.constant 1.000000e+00 : f32
    %cst_4 = arith.constant 0.000000e+00 : f32
    %8 = vector.broadcast %cst_3 : f32 to vector<20x20xf32>
    %9 = vector.broadcast %cst_4 : f32 to vector<20x20xf32>
    %10 = arith.select %7, %8, %9 : vector<20x20xi1>, vector<20x20xf32>
    %cst_5 = arith.constant dense<0.000000e+00> : vector<20x40xf32>
    %11 = tpu.matmul %10, %2, %cst_5 {dimension_numbers = #tpu.dot_dimension_numbers<[1], [0], [0], [1], [0, 0, 1, 1], [], []>} : vector<20x20xf32>, vector<20x40xf32>, vector<20x40xf32> -> vector<20x40xf32>
    %12 = tpu.iota {dimensions = array<i32: 1>} : vector<20x40xi32>
    %c20_i32 = arith.constant 20 : i32
    %13 = vector.broadcast %c20_i32 : i32 to vector<20x40xi32>
    %14 = arith.cmpi slt, %12, %13 : vector<20x40xi32>
    %15 = arith.select %14, %2, %11 : vector<20x40xi1>, vector<20x40xf32>
    %c0_6 = arith.constant 0 : index
    %c0_7 = arith.constant 0 : index
    %16 = vector.load %arg3[%c0_6, %c0_7] : memref<1x40xf32, #tpu.memory_space<vmem>>, vector<1x40xf32>
    %17 = vector.broadcast %16 : vector<1x40xf32> to vector<20x40xf32>
    %18 = arith.addf %15, %17 : vector<20x40xf32>
    %c0_8 = arith.constant 0 : index
    %c0_9 = arith.constant 0 : index
    %19 = vector.load %arg8[%c0_8, %c0_9] : memref<20x40xf32, #tpu.memory_space<vmem>>, vector<20x40xf32>
    tpu.vector_store %arg8[%c0_8, %c0_9], %18 {strides = array<i32>} : memref<20x40xf32, #tpu.memory_space<vmem>>, vector<20x40xf32>,
    %c0_10 = arith.constant 0 : index
    %c0_11 = arith.constant 0 : index
    %20 = vector.load %arg2[%c0_10, %c0_11] : memref<40x40xf32, #tpu.memory_space<vmem>>, vector<40x40xf32>
    %c0_12 = arith.constant 0 : index
    %c0_13 = arith.constant 0 : index
    %21 = vector.load %arg4[%c0_12, %c0_13] : memref<40x2xf32, #tpu.memory_space<vmem>>, vector<40x2xf32>
    %c0_14 = arith.constant 0 : index
    %c0_15 = arith.constant 0 : index
    %22 = vector.load %arg5[%c0_14, %c0_15] : memref<40x2xf32, #tpu.memory_space<vmem>>, vector<40x2xf32>
    %cst_16 = arith.constant 0.000000e+00 : f32
    %23 = vector.broadcast %cst_16 : f32 to vector<1x40xf32>
    %c0_i32 = arith.constant 0 : i32
    %24 = arith.index_cast %c0_i32 : i32 to index
    %c0_17 = arith.constant 0 : index
    %25 = vector.load %arg8[%24, %c0_17] : memref<20x40xf32, #tpu.memory_space<vmem>>, vector<1x40xf32>
    %cst_18 = arith.constant dense<0.000000e+00> : vector<1x40xf32>
    %26 = tpu.matmul %23, %20, %cst_18 {dimension_numbers = #tpu.dot_dimension_numbers<[1], [0], [0], [1], [0, 0, 1, 1], [], []>} : vector<1x40xf32>, vector<40x40xf32>, vector<1x40xf32> -> vector<1x40xf32>
    %27 = arith.addf %25, %26 : vector<1x40xf32>
    %28 = math.tanh %27 : vector<1x40xf32>
    %cst_19 = arith.constant dense<0.000000e+00> : vector<1x2xf32>
    %29 = tpu.matmul %28, %21, %cst_19 {dimension_numbers = #tpu.dot_dimension_numbers<[1], [0], [0], [1], [0, 0, 1, 1], [], []>} : vector<1x40xf32>, vector<40x2xf32>, vector<1x2xf32> -> vector<1x2xf32>
    %30 = arith.index_cast %c0_i32 : i32 to index
    %c0_20 = arith.constant 0 : index
    %31 = vector.load %arg9[%30, %c0_20] : memref<20x2xf32, #tpu.memory_space<vmem>>, vector<1x2xf32>
    tpu.vector_store %arg9[%30, %c0_20], %29 {strides = array<i32>} : memref<20x2xf32, #tpu.memory_space<vmem>>, vector<1x2xf32>,
    %cst_21 = arith.constant dense<0.000000e+00> : vector<1x2xf32>
    %32 = tpu.matmul %28, %22, %cst_21 {dimension_numbers = #tpu.dot_dimension_numbers<[1], [0], [0], [1], [0, 0, 1, 1], [], []>} : vector<1x40xf32>, vector<40x2xf32>, vector<1x2xf32> -> vector<1x2xf32>
    %c19_i32_22 = arith.constant 19 : i32
    %33 = arith.subi %c19_i32_22, %c0_i32 : i32
    %34 = arith.index_cast %33 : i32 to index
    %c0_23 = arith.constant 0 : index
    %35 = vector.load %arg10[%34, %c0_23] : memref<20x2xf32, #tpu.memory_space<vmem>>, vector<1x2xf32>
    tpu.vector_store %arg10[%34, %c0_23], %32 {strides = array<i32>} : memref<20x2xf32, #tpu.memory_space<vmem>>, vector<1x2xf32>,
    %c1_i32 = arith.constant 1 : i32
    %36 = arith.index_cast %c1_i32 : i32 to index
    %c0_24 = arith.constant 0 : index
    %37 = vector.load %arg8[%36, %c0_24] : memref<20x40xf32, #tpu.memory_space<vmem>>, vector<1x40xf32>
    %cst_25 = arith.constant dense<0.000000e+00> : vector<1x40xf32>
    %38 = tpu.matmul %28, %20, %cst_25 {dimension_numbers = #tpu.dot_dimension_numbers<[1], [0], [0], [1], [0, 0, 1, 1], [], []>} : vector<1x40xf32>, vector<40x40xf32>, vector<1x40xf32> -> vector<1x40xf32>
    %39 = arith.addf %37, %38 : vector<1x40xf32>
    %40 = math.tanh %39 : vector<1x40xf32>
    %cst_26 = arith.constant dense<0.000000e+00> : vector<1x2xf32>
    %41 = tpu.matmul %40, %21, %cst_26 {dimension_numbers = #tpu.dot_dimension_numbers<[1], [0], [0], [1], [0, 0, 1, 1], [], []>} : vector<1x40xf32>, vector<40x2xf32>, vector<1x2xf32> -> vector<1x2xf32>
    %42 = arith.index_cast %c1_i32 : i32 to index
    %c0_27 = arith.constant 0 : index
    %43 = vector.load %arg9[%42, %c0_27] : memref<20x2xf32, #tpu.memory_space<vmem>>, vector<1x2xf32>
    tpu.vector_store %arg9[%42, %c0_27], %41 {strides = array<i32>} : memref<20x2xf32, #tpu.memory_space<vmem>>, vector<1x2xf32>,
    %cst_28 = arith.constant dense<0.000000e+00> : vector<1x2xf32>
    %44 = tpu.matmul %40, %22, %cst_28 {dimension_numbers = #tpu.dot_dimension_numbers<[1], [0], [0], [1], [0, 0, 1, 1], [], []>} : vector<1x40xf32>, vector<40x2xf32>, vector<1x2xf32> -> vector<1x2xf32>
    %c19_i32_29 = arith.constant 19 : i32
    %45 = arith.subi %c19_i32_29, %c1_i32 : i32
    %46 = arith.index_cast %45 : i32 to index
    %c0_30 = arith.constant 0 : index
    %47 = vector.load %arg10[%46, %c0_30] : memref<20x2xf32, #tpu.memory_space<vmem>>, vector<1x2xf32>
    tpu.vector_store %arg10[%46, %c0_30], %44 {strides = array<i32>} : memref<20x2xf32, #tpu.memory_space<vmem>>, vector<1x2xf32>,
    %c2_i32 = arith.constant 2 : i32
    %48 = arith.index_cast %c2_i32 : i32 to index
    %c0_31 = arith.constant 0 : index
    %49 = vector.load %arg8[%48, %c0_31] : memref<20x40xf32, #tpu.memory_space<vmem>>, vector<1x40xf32>
    %cst_32 = arith.constant dense<0.000000e+00> : vector<1x40xf32>
    %50 = tpu.matmul %40, %20, %cst_32 {dimension_numbers = #tpu.dot_dimension_numbers<[1], [0], [0], [1], [0, 0, 1, 1], [], []>} : vector<1x40xf32>, vector<40x40xf32>, vector<1x40xf32> -> vector<1x40xf32>
    %51 = arith.addf %49, %50 : vector<1x40xf32>
    %52 = math.tanh %51 : vector<1x40xf32>
    %cst_33 = arith.constant dense<0.000000e+00> : vector<1x2xf32>
    %53 = tpu.matmul %52, %21, %cst_33 {dimension_numbers = #tpu.dot_dimension_numbers<[1], [0], [0], [1], [0, 0, 1, 1], [], []>} : vector<1x40xf32>, vector<40x2xf32>, vector<1x2xf32> -> vector<1x2xf32>
    %54 = arith.index_cast %c2_i32 : i32 to index
    %c0_34 = arith.constant 0 : index
    %55 = vector.load %arg9[%54, %c0_34] : memref<20x2xf32, #tpu.memory_space<vmem>>, vector<1x2xf32>
    tpu.vector_store %arg9[%54, %c0_34], %53 {strides = array<i32>} : memref<20x2xf32, #tpu.memory_space<vmem>>, vector<1x2xf32>,
    %cst_35 = arith.constant dense<0.000000e+00> : vector<1x2xf32>
    %56 = tpu.matmul %52, %22, %cst_35 {dimension_numbers = #tpu.dot_dimension_numbers<[1], [0], [0], [1], [0, 0, 1, 1], [], []>} : vector<1x40xf32>, vector<40x2xf32>, vector<1x2xf32> -> vector<1x2xf32>
    %c19_i32_36 = arith.constant 19 : i32
    %57 = arith.subi %c19_i32_36, %c2_i32 : i32
    %58 = arith.index_cast %57 : i32 to index
    %c0_37 = arith.constant 0 : index
    %59 = vector.load %arg10[%58, %c0_37] : memref<20x2xf32, #tpu.memory_space<vmem>>, vector<1x2xf32>
    tpu.vector_store %arg10[%58, %c0_37], %56 {strides = array<i32>} : memref<20x2xf32, #tpu.memory_space<vmem>>, vector<1x2xf32>,
    %c3_i32 = arith.constant 3 : i32
    %60 = arith.index_cast %c3_i32 : i32 to index
    %c0_38 = arith.constant 0 : index
    %61 = vector.load %arg8[%60, %c0_38] : memref<20x40xf32, #tpu.memory_space<vmem>>, vector<1x40xf32>
    %cst_39 = arith.constant dense<0.000000e+00> : vector<1x40xf32>
    %62 = tpu.matmul %52, %20, %cst_39 {dimension_numbers = #tpu.dot_dimension_numbers<[1], [0], [0], [1], [0, 0, 1, 1], [], []>} : vector<1x40xf32>, vector<40x40xf32>, vector<1x40xf32> -> vector<1x40xf32>
    %63 = arith.addf %61, %62 : vector<1x40xf32>
    %64 = math.tanh %63 : vector<1x40xf32>
    %cst_40 = arith.constant dense<0.000000e+00> : vector<1x2xf32>
    %65 = tpu.matmul %64, %21, %cst_40 {dimension_numbers = #tpu.dot_dimension_numbers<[1], [0], [0], [1], [0, 0, 1, 1], [], []>} : vector<1x40xf32>, vector<40x2xf32>, vector<1x2xf32> -> vector<1x2xf32>
    %66 = arith.index_cast %c3_i32 : i32 to index
    %c0_41 = arith.constant 0 : index
    %67 = vector.load %arg9[%66, %c0_41] : memref<20x2xf32, #tpu.memory_space<vmem>>, vector<1x2xf32>
    tpu.vector_store %arg9[%66, %c0_41], %65 {strides = array<i32>} : memref<20x2xf32, #tpu.memory_space<vmem>>, vector<1x2xf32>,
    %cst_42 = arith.constant dense<0.000000e+00> : vector<1x2xf32>
    %68 = tpu.matmul %64, %22, %cst_42 {dimension_numbers = #tpu.dot_dimension_numbers<[1], [0], [0], [1], [0, 0, 1, 1], [], []>} : vector<1x40xf32>, vector<40x2xf32>, vector<1x2xf32> -> vector<1x2xf32>
    %c19_i32_43 = arith.constant 19 : i32
    %69 = arith.subi %c19_i32_43, %c3_i32 : i32
    %70 = arith.index_cast %69 : i32 to index
    %c0_44 = arith.constant 0 : index
    %71 = vector.load %arg10[%70, %c0_44] : memref<20x2xf32, #tpu.memory_space<vmem>>, vector<1x2xf32>
    tpu.vector_store %arg10[%70, %c0_44], %68 {strides = array<i32>} : memref<20x2xf32, #tpu.memory_space<vmem>>, vector<1x2xf32>,
    %c4_i32 = arith.constant 4 : i32
    %72 = arith.index_cast %c4_i32 : i32 to index
    %c0_45 = arith.constant 0 : index
    %73 = vector.load %arg8[%72, %c0_45] : memref<20x40xf32, #tpu.memory_space<vmem>>, vector<1x40xf32>
    %cst_46 = arith.constant dense<0.000000e+00> : vector<1x40xf32>
    %74 = tpu.matmul %64, %20, %cst_46 {dimension_numbers = #tpu.dot_dimension_numbers<[1], [0], [0], [1], [0, 0, 1, 1], [], []>} : vector<1x40xf32>, vector<40x40xf32>, vector<1x40xf32> -> vector<1x40xf32>
    %75 = arith.addf %73, %74 : vector<1x40xf32>
    %76 = math.tanh %75 : vector<1x40xf32>
    %cst_47 = arith.constant dense<0.000000e+00> : vector<1x2xf32>
    %77 = tpu.matmul %76, %21, %cst_47 {dimension_numbers = #tpu.dot_dimension_numbers<[1], [0], [0], [1], [0, 0, 1, 1], [], []>} : vector<1x40xf32>, vector<40x2xf32>, vector<1x2xf32> -> vector<1x2xf32>
    %78 = arith.index_cast %c4_i32 : i32 to index
    %c0_48 = arith.constant 0 : index
    %79 = vector.load %arg9[%78, %c0_48] : memref<20x2xf32, #tpu.memory_space<vmem>>, vector<1x2xf32>
    tpu.vector_store %arg9[%78, %c0_48], %77 {strides = array<i32>} : memref<20x2xf32, #tpu.memory_space<vmem>>, vector<1x2xf32>,
    %cst_49 = arith.constant dense<0.000000e+00> : vector<1x2xf32>
    %80 = tpu.matmul %76, %22, %cst_49 {dimension_numbers = #tpu.dot_dimension_numbers<[1], [0], [0], [1], [0, 0, 1, 1], [], []>} : vector<1x40xf32>, vector<40x2xf32>, vector<1x2xf32> -> vector<1x2xf32>
    %c19_i32_50 = arith.constant 19 : i32
    %81 = arith.subi %c19_i32_50, %c4_i32 : i32
    %82 = arith.index_cast %81 : i32 to index
    %c0_51 = arith.constant 0 : index
    %83 = vector.load %arg10[%82, %c0_51] : memref<20x2xf32, #tpu.memory_space<vmem>>, vector<1x2xf32>
    tpu.vector_store %arg10[%82, %c0_51], %80 {strides = array<i32>} : memref<20x2xf32, #tpu.memory_space<vmem>>, vector<1x2xf32>,
    %c5_i32 = arith.constant 5 : i32
    %84 = arith.index_cast %c5_i32 : i32 to index
    %c0_52 = arith.constant 0 : index
    %85 = vector.load %arg8[%84, %c0_52] : memref<20x40xf32, #tpu.memory_space<vmem>>, vector<1x40xf32>
    %cst_53 = arith.constant dense<0.000000e+00> : vector<1x40xf32>
    %86 = tpu.matmul %76, %20, %cst_53 {dimension_numbers = #tpu.dot_dimension_numbers<[1], [0], [0], [1], [0, 0, 1, 1], [], []>} : vector<1x40xf32>, vector<40x40xf32>, vector<1x40xf32> -> vector<1x40xf32>
    %87 = arith.addf %85, %86 : vector<1x40xf32>
    %88 = math.tanh %87 : vector<1x40xf32>
    %cst_54 = arith.constant dense<0.000000e+00> : vector<1x2xf32>
    %89 = tpu.matmul %88, %21, %cst_54 {dimension_numbers = #tpu.dot_dimension_numbers<[1], [0], [0], [1], [0, 0, 1, 1], [], []>} : vector<1x40xf32>, vector<40x2xf32>, vector<1x2xf32> -> vector<1x2xf32>
    %90 = arith.index_cast %c5_i32 : i32 to index
    %c0_55 = arith.constant 0 : index
    %91 = vector.load %arg9[%90, %c0_55] : memref<20x2xf32, #tpu.memory_space<vmem>>, vector<1x2xf32>
    tpu.vector_store %arg9[%90, %c0_55], %89 {strides = array<i32>} : memref<20x2xf32, #tpu.memory_space<vmem>>, vector<1x2xf32>,
    %cst_56 = arith.constant dense<0.000000e+00> : vector<1x2xf32>
    %92 = tpu.matmul %88, %22, %cst_56 {dimension_numbers = #tpu.dot_dimension_numbers<[1], [0], [0], [1], [0, 0, 1, 1], [], []>} : vector<1x40xf32>, vector<40x2xf32>, vector<1x2xf32> -> vector<1x2xf32>
    %c19_i32_57 = arith.constant 19 : i32
    %93 = arith.subi %c19_i32_57, %c5_i32 : i32
    %94 = arith.index_cast %93 : i32 to index
    %c0_58 = arith.constant 0 : index
    %95 = vector.load %arg10[%94, %c0_58] : memref<20x2xf32, #tpu.memory_space<vmem>>, vector<1x2xf32>
    tpu.vector_store %arg10[%94, %c0_58], %92 {strides = array<i32>} : memref<20x2xf32, #tpu.memory_space<vmem>>, vector<1x2xf32>,
    %c6_i32 = arith.constant 6 : i32
    %96 = arith.index_cast %c6_i32 : i32 to index
    %c0_59 = arith.constant 0 : index
    %97 = vector.load %arg8[%96, %c0_59] : memref<20x40xf32, #tpu.memory_space<vmem>>, vector<1x40xf32>
    %cst_60 = arith.constant dense<0.000000e+00> : vector<1x40xf32>
    %98 = tpu.matmul %88, %20, %cst_60 {dimension_numbers = #tpu.dot_dimension_numbers<[1], [0], [0], [1], [0, 0, 1, 1], [], []>} : vector<1x40xf32>, vector<40x40xf32>, vector<1x40xf32> -> vector<1x40xf32>
    %99 = arith.addf %97, %98 : vector<1x40xf32>
    %100 = math.tanh %99 : vector<1x40xf32>
    %cst_61 = arith.constant dense<0.000000e+00> : vector<1x2xf32>
    %101 = tpu.matmul %100, %21, %cst_61 {dimension_numbers = #tpu.dot_dimension_numbers<[1], [0], [0], [1], [0, 0, 1, 1], [], []>} : vector<1x40xf32>, vector<40x2xf32>, vector<1x2xf32> -> vector<1x2xf32>
    %102 = arith.index_cast %c6_i32 : i32 to index
    %c0_62 = arith.constant 0 : index
    %103 = vector.load %arg9[%102, %c0_62] : memref<20x2xf32, #tpu.memory_space<vmem>>, vector<1x2xf32>
    tpu.vector_store %arg9[%102, %c0_62], %101 {strides = array<i32>} : memref<20x2xf32, #tpu.memory_space<vmem>>, vector<1x2xf32>,
    %cst_63 = arith.constant dense<0.000000e+00> : vector<1x2xf32>
    %104 = tpu.matmul %100, %22, %cst_63 {dimension_numbers = #tpu.dot_dimension_numbers<[1], [0], [0], [1], [0, 0, 1, 1], [], []>} : vector<1x40xf32>, vector<40x2xf32>, vector<1x2xf32> -> vector<1x2xf32>
    %c19_i32_64 = arith.constant 19 : i32
    %105 = arith.subi %c19_i32_64, %c6_i32 : i32
    %106 = arith.index_cast %105 : i32 to index
    %c0_65 = arith.constant 0 : index
    %107 = vector.load %arg10[%106, %c0_65] : memref<20x2xf32, #tpu.memory_space<vmem>>, vector<1x2xf32>
    tpu.vector_store %arg10[%106, %c0_65], %104 {strides = array<i32>} : memref<20x2xf32, #tpu.memory_space<vmem>>, vector<1x2xf32>,
    %c7_i32 = arith.constant 7 : i32
    %108 = arith.index_cast %c7_i32 : i32 to index
    %c0_66 = arith.constant 0 : index
    %109 = vector.load %arg8[%108, %c0_66] : memref<20x40xf32, #tpu.memory_space<vmem>>, vector<1x40xf32>
    %cst_67 = arith.constant dense<0.000000e+00> : vector<1x40xf32>
    %110 = tpu.matmul %100, %20, %cst_67 {dimension_numbers = #tpu.dot_dimension_numbers<[1], [0], [0], [1], [0, 0, 1, 1], [], []>} : vector<1x40xf32>, vector<40x40xf32>, vector<1x40xf32> -> vector<1x40xf32>
    %111 = arith.addf %109, %110 : vector<1x40xf32>
    %112 = math.tanh %111 : vector<1x40xf32>
    %cst_68 = arith.constant dense<0.000000e+00> : vector<1x2xf32>
    %113 = tpu.matmul %112, %21, %cst_68 {dimension_numbers = #tpu.dot_dimension_numbers<[1], [0], [0], [1], [0, 0, 1, 1], [], []>} : vector<1x40xf32>, vector<40x2xf32>, vector<1x2xf32> -> vector<1x2xf32>
    %114 = arith.index_cast %c7_i32 : i32 to index
    %c0_69 = arith.constant 0 : index
    %115 = vector.load %arg9[%114, %c0_69] : memref<20x2xf32, #tpu.memory_space<vmem>>, vector<1x2xf32>
    tpu.vector_store %arg9[%114, %c0_69], %113 {strides = array<i32>} : memref<20x2xf32, #tpu.memory_space<vmem>>, vector<1x2xf32>,
    %cst_70 = arith.constant dense<0.000000e+00> : vector<1x2xf32>
    %116 = tpu.matmul %112, %22, %cst_70 {dimension_numbers = #tpu.dot_dimension_numbers<[1], [0], [0], [1], [0, 0, 1, 1], [], []>} : vector<1x40xf32>, vector<40x2xf32>, vector<1x2xf32> -> vector<1x2xf32>
    %c19_i32_71 = arith.constant 19 : i32
    %117 = arith.subi %c19_i32_71, %c7_i32 : i32
    %118 = arith.index_cast %117 : i32 to index
    %c0_72 = arith.constant 0 : index
    %119 = vector.load %arg10[%118, %c0_72] : memref<20x2xf32, #tpu.memory_space<vmem>>, vector<1x2xf32>
    tpu.vector_store %arg10[%118, %c0_72], %116 {strides = array<i32>} : memref<20x2xf32, #tpu.memory_space<vmem>>, vector<1x2xf32>,
    %c8_i32 = arith.constant 8 : i32
    %120 = arith.index_cast %c8_i32 : i32 to index
    %c0_73 = arith.constant 0 : index
    %121 = vector.load %arg8[%120, %c0_73] : memref<20x40xf32, #tpu.memory_space<vmem>>, vector<1x40xf32>
    %cst_74 = arith.constant dense<0.000000e+00> : vector<1x40xf32>
    %122 = tpu.matmul %112, %20, %cst_74 {dimension_numbers = #tpu.dot_dimension_numbers<[1], [0], [0], [1], [0, 0, 1, 1], [], []>} : vector<1x40xf32>, vector<40x40xf32>, vector<1x40xf32> -> vector<1x40xf32>
    %123 = arith.addf %121, %122 : vector<1x40xf32>
    %124 = math.tanh %123 : vector<1x40xf32>
    %cst_75 = arith.constant dense<0.000000e+00> : vector<1x2xf32>
    %125 = tpu.matmul %124, %21, %cst_75 {dimension_numbers = #tpu.dot_dimension_numbers<[1], [0], [0], [1], [0, 0, 1, 1], [], []>} : vector<1x40xf32>, vector<40x2xf32>, vector<1x2xf32> -> vector<1x2xf32>
    %126 = arith.index_cast %c8_i32 : i32 to index
    %c0_76 = arith.constant 0 : index
    %127 = vector.load %arg9[%126, %c0_76] : memref<20x2xf32, #tpu.memory_space<vmem>>, vector<1x2xf32>
    tpu.vector_store %arg9[%126, %c0_76], %125 {strides = array<i32>} : memref<20x2xf32, #tpu.memory_space<vmem>>, vector<1x2xf32>,
    %cst_77 = arith.constant dense<0.000000e+00> : vector<1x2xf32>
    %128 = tpu.matmul %124, %22, %cst_77 {dimension_numbers = #tpu.dot_dimension_numbers<[1], [0], [0], [1], [0, 0, 1, 1], [], []>} : vector<1x40xf32>, vector<40x2xf32>, vector<1x2xf32> -> vector<1x2xf32>
    %c19_i32_78 = arith.constant 19 : i32
    %129 = arith.subi %c19_i32_78, %c8_i32 : i32
    %130 = arith.index_cast %129 : i32 to index
    %c0_79 = arith.constant 0 : index
    %131 = vector.load %arg10[%130, %c0_79] : memref<20x2xf32, #tpu.memory_space<vmem>>, vector<1x2xf32>
    tpu.vector_store %arg10[%130, %c0_79], %128 {strides = array<i32>} : memref<20x2xf32, #tpu.memory_space<vmem>>, vector<1x2xf32>,
    %c9_i32 = arith.constant 9 : i32
    %132 = arith.index_cast %c9_i32 : i32 to index
    %c0_80 = arith.constant 0 : index
    %133 = vector.load %arg8[%132, %c0_80] : memref<20x40xf32, #tpu.memory_space<vmem>>, vector<1x40xf32>
    %cst_81 = arith.constant dense<0.000000e+00> : vector<1x40xf32>
    %134 = tpu.matmul %124, %20, %cst_81 {dimension_numbers = #tpu.dot_dimension_numbers<[1], [0], [0], [1], [0, 0, 1, 1], [], []>} : vector<1x40xf32>, vector<40x40xf32>, vector<1x40xf32> -> vector<1x40xf32>
    %135 = arith.addf %133, %134 : vector<1x40xf32>
    %136 = math.tanh %135 : vector<1x40xf32>
    %cst_82 = arith.constant dense<0.000000e+00> : vector<1x2xf32>
    %137 = tpu.matmul %136, %21, %cst_82 {dimension_numbers = #tpu.dot_dimension_numbers<[1], [0], [0], [1], [0, 0, 1, 1], [], []>} : vector<1x40xf32>, vector<40x2xf32>, vector<1x2xf32> -> vector<1x2xf32>
    %138 = arith.index_cast %c9_i32 : i32 to index
    %c0_83 = arith.constant 0 : index
    %139 = vector.load %arg9[%138, %c0_83] : memref<20x2xf32, #tpu.memory_space<vmem>>, vector<1x2xf32>
    tpu.vector_store %arg9[%138, %c0_83], %137 {strides = array<i32>} : memref<20x2xf32, #tpu.memory_space<vmem>>, vector<1x2xf32>,
    %cst_84 = arith.constant dense<0.000000e+00> : vector<1x2xf32>
    %140 = tpu.matmul %136, %22, %cst_84 {dimension_numbers = #tpu.dot_dimension_numbers<[1], [0], [0], [1], [0, 0, 1, 1], [], []>} : vector<1x40xf32>, vector<40x2xf32>, vector<1x2xf32> -> vector<1x2xf32>
    %c19_i32_85 = arith.constant 19 : i32
    %141 = arith.subi %c19_i32_85, %c9_i32 : i32
    %142 = arith.index_cast %141 : i32 to index
    %c0_86 = arith.constant 0 : index
    %143 = vector.load %arg10[%142, %c0_86] : memref<20x2xf32, #tpu.memory_space<vmem>>, vector<1x2xf32>
    tpu.vector_store %arg10[%142, %c0_86], %140 {strides = array<i32>} : memref<20x2xf32, #tpu.memory_space<vmem>>, vector<1x2xf32>,
    %c10_i32 = arith.constant 10 : i32
    %144 = arith.index_cast %c10_i32 : i32 to index
    %c0_87 = arith.constant 0 : index
    %145 = vector.load %arg8[%144, %c0_87] : memref<20x40xf32, #tpu.memory_space<vmem>>, vector<1x40xf32>
    %cst_88 = arith.constant dense<0.000000e+00> : vector<1x40xf32>
    %146 = tpu.matmul %136, %20, %cst_88 {dimension_numbers = #tpu.dot_dimension_numbers<[1], [0], [0], [1], [0, 0, 1, 1], [], []>} : vector<1x40xf32>, vector<40x40xf32>, vector<1x40xf32> -> vector<1x40xf32>
    %147 = arith.addf %145, %146 : vector<1x40xf32>
    %148 = math.tanh %147 : vector<1x40xf32>
    %cst_89 = arith.constant dense<0.000000e+00> : vector<1x2xf32>
    %149 = tpu.matmul %148, %21, %cst_89 {dimension_numbers = #tpu.dot_dimension_numbers<[1], [0], [0], [1], [0, 0, 1, 1], [], []>} : vector<1x40xf32>, vector<40x2xf32>, vector<1x2xf32> -> vector<1x2xf32>
    %150 = arith.index_cast %c10_i32 : i32 to index
    %c0_90 = arith.constant 0 : index
    %151 = vector.load %arg9[%150, %c0_90] : memref<20x2xf32, #tpu.memory_space<vmem>>, vector<1x2xf32>
    tpu.vector_store %arg9[%150, %c0_90], %149 {strides = array<i32>} : memref<20x2xf32, #tpu.memory_space<vmem>>, vector<1x2xf32>,
    %cst_91 = arith.constant dense<0.000000e+00> : vector<1x2xf32>
    %152 = tpu.matmul %148, %22, %cst_91 {dimension_numbers = #tpu.dot_dimension_numbers<[1], [0], [0], [1], [0, 0, 1, 1], [], []>} : vector<1x40xf32>, vector<40x2xf32>, vector<1x2xf32> -> vector<1x2xf32>
    %c19_i32_92 = arith.constant 19 : i32
    %153 = arith.subi %c19_i32_92, %c10_i32 : i32
    %154 = arith.index_cast %153 : i32 to index
    %c0_93 = arith.constant 0 : index
    %155 = vector.load %arg10[%154, %c0_93] : memref<20x2xf32, #tpu.memory_space<vmem>>, vector<1x2xf32>
    tpu.vector_store %arg10[%154, %c0_93], %152 {strides = array<i32>} : memref<20x2xf32, #tpu.memory_space<vmem>>, vector<1x2xf32>,
    %c11_i32 = arith.constant 11 : i32
    %156 = arith.index_cast %c11_i32 : i32 to index
    %c0_94 = arith.constant 0 : index
    %157 = vector.load %arg8[%156, %c0_94] : memref<20x40xf32, #tpu.memory_space<vmem>>, vector<1x40xf32>
    %cst_95 = arith.constant dense<0.000000e+00> : vector<1x40xf32>
    %158 = tpu.matmul %148, %20, %cst_95 {dimension_numbers = #tpu.dot_dimension_numbers<[1], [0], [0], [1], [0, 0, 1, 1], [], []>} : vector<1x40xf32>, vector<40x40xf32>, vector<1x40xf32> -> vector<1x40xf32>
    %159 = arith.addf %157, %158 : vector<1x40xf32>
    %160 = math.tanh %159 : vector<1x40xf32>
    %cst_96 = arith.constant dense<0.000000e+00> : vector<1x2xf32>
    %161 = tpu.matmul %160, %21, %cst_96 {dimension_numbers = #tpu.dot_dimension_numbers<[1], [0], [0], [1], [0, 0, 1, 1], [], []>} : vector<1x40xf32>, vector<40x2xf32>, vector<1x2xf32> -> vector<1x2xf32>
    %162 = arith.index_cast %c11_i32 : i32 to index
    %c0_97 = arith.constant 0 : index
    %163 = vector.load %arg9[%162, %c0_97] : memref<20x2xf32, #tpu.memory_space<vmem>>, vector<1x2xf32>
    tpu.vector_store %arg9[%162, %c0_97], %161 {strides = array<i32>} : memref<20x2xf32, #tpu.memory_space<vmem>>, vector<1x2xf32>,
    %cst_98 = arith.constant dense<0.000000e+00> : vector<1x2xf32>
    %164 = tpu.matmul %160, %22, %cst_98 {dimension_numbers = #tpu.dot_dimension_numbers<[1], [0], [0], [1], [0, 0, 1, 1], [], []>} : vector<1x40xf32>, vector<40x2xf32>, vector<1x2xf32> -> vector<1x2xf32>
    %c19_i32_99 = arith.constant 19 : i32
    %165 = arith.subi %c19_i32_99, %c11_i32 : i32
    %166 = arith.index_cast %165 : i32 to index
    %c0_100 = arith.constant 0 : index
    %167 = vector.load %arg10[%166, %c0_100] : memref<20x2xf32, #tpu.memory_space<vmem>>, vector<1x2xf32>
    tpu.vector_store %arg10[%166, %c0_100], %164 {strides = array<i32>} : memref<20x2xf32, #tpu.memory_space<vmem>>, vector<1x2xf32>,
    %c12_i32 = arith.constant 12 : i32
    %168 = arith.index_cast %c12_i32 : i32 to index
    %c0_101 = arith.constant 0 : index
    %169 = vector.load %arg8[%168, %c0_101] : memref<20x40xf32, #tpu.memory_space<vmem>>, vector<1x40xf32>
    %cst_102 = arith.constant dense<0.000000e+00> : vector<1x40xf32>
    %170 = tpu.matmul %160, %20, %cst_102 {dimension_numbers = #tpu.dot_dimension_numbers<[1], [0], [0], [1], [0, 0, 1, 1], [], []>} : vector<1x40xf32>, vector<40x40xf32>, vector<1x40xf32> -> vector<1x40xf32>
    %171 = arith.addf %169, %170 : vector<1x40xf32>
    %172 = math.tanh %171 : vector<1x40xf32>
    %cst_103 = arith.constant dense<0.000000e+00> : vector<1x2xf32>
    %173 = tpu.matmul %172, %21, %cst_103 {dimension_numbers = #tpu.dot_dimension_numbers<[1], [0], [0], [1], [0, 0, 1, 1], [], []>} : vector<1x40xf32>, vector<40x2xf32>, vector<1x2xf32> -> vector<1x2xf32>
    %174 = arith.index_cast %c12_i32 : i32 to index
    %c0_104 = arith.constant 0 : index
    %175 = vector.load %arg9[%174, %c0_104] : memref<20x2xf32, #tpu.memory_space<vmem>>, vector<1x2xf32>
    tpu.vector_store %arg9[%174, %c0_104], %173 {strides = array<i32>} : memref<20x2xf32, #tpu.memory_space<vmem>>, vector<1x2xf32>,
    %cst_105 = arith.constant dense<0.000000e+00> : vector<1x2xf32>
    %176 = tpu.matmul %172, %22, %cst_105 {dimension_numbers = #tpu.dot_dimension_numbers<[1], [0], [0], [1], [0, 0, 1, 1], [], []>} : vector<1x40xf32>, vector<40x2xf32>, vector<1x2xf32> -> vector<1x2xf32>
    %c19_i32_106 = arith.constant 19 : i32
    %177 = arith.subi %c19_i32_106, %c12_i32 : i32
    %178 = arith.index_cast %177 : i32 to index
    %c0_107 = arith.constant 0 : index
    %179 = vector.load %arg10[%178, %c0_107] : memref<20x2xf32, #tpu.memory_space<vmem>>, vector<1x2xf32>
    tpu.vector_store %arg10[%178, %c0_107], %176 {strides = array<i32>} : memref<20x2xf32, #tpu.memory_space<vmem>>, vector<1x2xf32>,
    %c13_i32 = arith.constant 13 : i32
    %180 = arith.index_cast %c13_i32 : i32 to index
    %c0_108 = arith.constant 0 : index
    %181 = vector.load %arg8[%180, %c0_108] : memref<20x40xf32, #tpu.memory_space<vmem>>, vector<1x40xf32>
    %cst_109 = arith.constant dense<0.000000e+00> : vector<1x40xf32>
    %182 = tpu.matmul %172, %20, %cst_109 {dimension_numbers = #tpu.dot_dimension_numbers<[1], [0], [0], [1], [0, 0, 1, 1], [], []>} : vector<1x40xf32>, vector<40x40xf32>, vector<1x40xf32> -> vector<1x40xf32>
    %183 = arith.addf %181, %182 : vector<1x40xf32>
    %184 = math.tanh %183 : vector<1x40xf32>
    %cst_110 = arith.constant dense<0.000000e+00> : vector<1x2xf32>
    %185 = tpu.matmul %184, %21, %cst_110 {dimension_numbers = #tpu.dot_dimension_numbers<[1], [0], [0], [1], [0, 0, 1, 1], [], []>} : vector<1x40xf32>, vector<40x2xf32>, vector<1x2xf32> -> vector<1x2xf32>
    %186 = arith.index_cast %c13_i32 : i32 to index
    %c0_111 = arith.constant 0 : index
    %187 = vector.load %arg9[%186, %c0_111] : memref<20x2xf32, #tpu.memory_space<vmem>>, vector<1x2xf32>
    tpu.vector_store %arg9[%186, %c0_111], %185 {strides = array<i32>} : memref<20x2xf32, #tpu.memory_space<vmem>>, vector<1x2xf32>,
    %cst_112 = arith.constant dense<0.000000e+00> : vector<1x2xf32>
    %188 = tpu.matmul %184, %22, %cst_112 {dimension_numbers = #tpu.dot_dimension_numbers<[1], [0], [0], [1], [0, 0, 1, 1], [], []>} : vector<1x40xf32>, vector<40x2xf32>, vector<1x2xf32> -> vector<1x2xf32>
    %c19_i32_113 = arith.constant 19 : i32
    %189 = arith.subi %c19_i32_113, %c13_i32 : i32
    %190 = arith.index_cast %189 : i32 to index
    %c0_114 = arith.constant 0 : index
    %191 = vector.load %arg10[%190, %c0_114] : memref<20x2xf32, #tpu.memory_space<vmem>>, vector<1x2xf32>
    tpu.vector_store %arg10[%190, %c0_114], %188 {strides = array<i32>} : memref<20x2xf32, #tpu.memory_space<vmem>>, vector<1x2xf32>,
    %c14_i32 = arith.constant 14 : i32
    %192 = arith.index_cast %c14_i32 : i32 to index
    %c0_115 = arith.constant 0 : index
    %193 = vector.load %arg8[%192, %c0_115] : memref<20x40xf32, #tpu.memory_space<vmem>>, vector<1x40xf32>
    %cst_116 = arith.constant dense<0.000000e+00> : vector<1x40xf32>
    %194 = tpu.matmul %184, %20, %cst_116 {dimension_numbers = #tpu.dot_dimension_numbers<[1], [0], [0], [1], [0, 0, 1, 1], [], []>} : vector<1x40xf32>, vector<40x40xf32>, vector<1x40xf32> -> vector<1x40xf32>
    %195 = arith.addf %193, %194 : vector<1x40xf32>
    %196 = math.tanh %195 : vector<1x40xf32>
    %cst_117 = arith.constant dense<0.000000e+00> : vector<1x2xf32>
    %197 = tpu.matmul %196, %21, %cst_117 {dimension_numbers = #tpu.dot_dimension_numbers<[1], [0], [0], [1], [0, 0, 1, 1], [], []>} : vector<1x40xf32>, vector<40x2xf32>, vector<1x2xf32> -> vector<1x2xf32>
    %198 = arith.index_cast %c14_i32 : i32 to index
    %c0_118 = arith.constant 0 : index
    %199 = vector.load %arg9[%198, %c0_118] : memref<20x2xf32, #tpu.memory_space<vmem>>, vector<1x2xf32>
    tpu.vector_store %arg9[%198, %c0_118], %197 {strides = array<i32>} : memref<20x2xf32, #tpu.memory_space<vmem>>, vector<1x2xf32>,
    %cst_119 = arith.constant dense<0.000000e+00> : vector<1x2xf32>
    %200 = tpu.matmul %196, %22, %cst_119 {dimension_numbers = #tpu.dot_dimension_numbers<[1], [0], [0], [1], [0, 0, 1, 1], [], []>} : vector<1x40xf32>, vector<40x2xf32>, vector<1x2xf32> -> vector<1x2xf32>
    %c19_i32_120 = arith.constant 19 : i32
    %201 = arith.subi %c19_i32_120, %c14_i32 : i32
    %202 = arith.index_cast %201 : i32 to index
    %c0_121 = arith.constant 0 : index
    %203 = vector.load %arg10[%202, %c0_121] : memref<20x2xf32, #tpu.memory_space<vmem>>, vector<1x2xf32>
    tpu.vector_store %arg10[%202, %c0_121], %200 {strides = array<i32>} : memref<20x2xf32, #tpu.memory_space<vmem>>, vector<1x2xf32>,
    %c15_i32 = arith.constant 15 : i32
    %204 = arith.index_cast %c15_i32 : i32 to index
    %c0_122 = arith.constant 0 : index
    %205 = vector.load %arg8[%204, %c0_122] : memref<20x40xf32, #tpu.memory_space<vmem>>, vector<1x40xf32>
    %cst_123 = arith.constant dense<0.000000e+00> : vector<1x40xf32>
    %206 = tpu.matmul %196, %20, %cst_123 {dimension_numbers = #tpu.dot_dimension_numbers<[1], [0], [0], [1], [0, 0, 1, 1], [], []>} : vector<1x40xf32>, vector<40x40xf32>, vector<1x40xf32> -> vector<1x40xf32>
    %207 = arith.addf %205, %206 : vector<1x40xf32>
    %208 = math.tanh %207 : vector<1x40xf32>
    %cst_124 = arith.constant dense<0.000000e+00> : vector<1x2xf32>
    %209 = tpu.matmul %208, %21, %cst_124 {dimension_numbers = #tpu.dot_dimension_numbers<[1], [0], [0], [1], [0, 0, 1, 1], [], []>} : vector<1x40xf32>, vector<40x2xf32>, vector<1x2xf32> -> vector<1x2xf32>
    %210 = arith.index_cast %c15_i32 : i32 to index
    %c0_125 = arith.constant 0 : index
    %211 = vector.load %arg9[%210, %c0_125] : memref<20x2xf32, #tpu.memory_space<vmem>>, vector<1x2xf32>
    tpu.vector_store %arg9[%210, %c0_125], %209 {strides = array<i32>} : memref<20x2xf32, #tpu.memory_space<vmem>>, vector<1x2xf32>,
    %cst_126 = arith.constant dense<0.000000e+00> : vector<1x2xf32>
    %212 = tpu.matmul %208, %22, %cst_126 {dimension_numbers = #tpu.dot_dimension_numbers<[1], [0], [0], [1], [0, 0, 1, 1], [], []>} : vector<1x40xf32>, vector<40x2xf32>, vector<1x2xf32> -> vector<1x2xf32>
    %c19_i32_127 = arith.constant 19 : i32
    %213 = arith.subi %c19_i32_127, %c15_i32 : i32
    %214 = arith.index_cast %213 : i32 to index
    %c0_128 = arith.constant 0 : index
    %215 = vector.load %arg10[%214, %c0_128] : memref<20x2xf32, #tpu.memory_space<vmem>>, vector<1x2xf32>
    tpu.vector_store %arg10[%214, %c0_128], %212 {strides = array<i32>} : memref<20x2xf32, #tpu.memory_space<vmem>>, vector<1x2xf32>,
    %c16_i32 = arith.constant 16 : i32
    %216 = arith.index_cast %c16_i32 : i32 to index
    %c0_129 = arith.constant 0 : index
    %217 = vector.load %arg8[%216, %c0_129] : memref<20x40xf32, #tpu.memory_space<vmem>>, vector<1x40xf32>
    %cst_130 = arith.constant dense<0.000000e+00> : vector<1x40xf32>
    %218 = tpu.matmul %208, %20, %cst_130 {dimension_numbers = #tpu.dot_dimension_numbers<[1], [0], [0], [1], [0, 0, 1, 1], [], []>} : vector<1x40xf32>, vector<40x40xf32>, vector<1x40xf32> -> vector<1x40xf32>
    %219 = arith.addf %217, %218 : vector<1x40xf32>
    %220 = math.tanh %219 : vector<1x40xf32>
    %cst_131 = arith.constant dense<0.000000e+00> : vector<1x2xf32>
    %221 = tpu.matmul %220, %21, %cst_131 {dimension_numbers = #tpu.dot_dimension_numbers<[1], [0], [0], [1], [0, 0, 1, 1], [], []>} : vector<1x40xf32>, vector<40x2xf32>, vector<1x2xf32> -> vector<1x2xf32>
    %222 = arith.index_cast %c16_i32 : i32 to index
    %c0_132 = arith.constant 0 : index
    %223 = vector.load %arg9[%222, %c0_132] : memref<20x2xf32, #tpu.memory_space<vmem>>, vector<1x2xf32>
    tpu.vector_store %arg9[%222, %c0_132], %221 {strides = array<i32>} : memref<20x2xf32, #tpu.memory_space<vmem>>, vector<1x2xf32>,
    %cst_133 = arith.constant dense<0.000000e+00> : vector<1x2xf32>
    %224 = tpu.matmul %220, %22, %cst_133 {dimension_numbers = #tpu.dot_dimension_numbers<[1], [0], [0], [1], [0, 0, 1, 1], [], []>} : vector<1x40xf32>, vector<40x2xf32>, vector<1x2xf32> -> vector<1x2xf32>
    %c19_i32_134 = arith.constant 19 : i32
    %225 = arith.subi %c19_i32_134, %c16_i32 : i32
    %226 = arith.index_cast %225 : i32 to index
    %c0_135 = arith.constant 0 : index
    %227 = vector.load %arg10[%226, %c0_135] : memref<20x2xf32, #tpu.memory_space<vmem>>, vector<1x2xf32>
    tpu.vector_store %arg10[%226, %c0_135], %224 {strides = array<i32>} : memref<20x2xf32, #tpu.memory_space<vmem>>, vector<1x2xf32>,
    %c17_i32 = arith.constant 17 : i32
    %228 = arith.index_cast %c17_i32 : i32 to index
    %c0_136 = arith.constant 0 : index
    %229 = vector.load %arg8[%228, %c0_136] : memref<20x40xf32, #tpu.memory_space<vmem>>, vector<1x40xf32>
    %cst_137 = arith.constant dense<0.000000e+00> : vector<1x40xf32>
    %230 = tpu.matmul %220, %20, %cst_137 {dimension_numbers = #tpu.dot_dimension_numbers<[1], [0], [0], [1], [0, 0, 1, 1], [], []>} : vector<1x40xf32>, vector<40x40xf32>, vector<1x40xf32> -> vector<1x40xf32>
    %231 = arith.addf %229, %230 : vector<1x40xf32>
    %232 = math.tanh %231 : vector<1x40xf32>
    %cst_138 = arith.constant dense<0.000000e+00> : vector<1x2xf32>
    %233 = tpu.matmul %232, %21, %cst_138 {dimension_numbers = #tpu.dot_dimension_numbers<[1], [0], [0], [1], [0, 0, 1, 1], [], []>} : vector<1x40xf32>, vector<40x2xf32>, vector<1x2xf32> -> vector<1x2xf32>
    %234 = arith.index_cast %c17_i32 : i32 to index
    %c0_139 = arith.constant 0 : index
    %235 = vector.load %arg9[%234, %c0_139] : memref<20x2xf32, #tpu.memory_space<vmem>>, vector<1x2xf32>
    tpu.vector_store %arg9[%234, %c0_139], %233 {strides = array<i32>} : memref<20x2xf32, #tpu.memory_space<vmem>>, vector<1x2xf32>,
    %cst_140 = arith.constant dense<0.000000e+00> : vector<1x2xf32>
    %236 = tpu.matmul %232, %22, %cst_140 {dimension_numbers = #tpu.dot_dimension_numbers<[1], [0], [0], [1], [0, 0, 1, 1], [], []>} : vector<1x40xf32>, vector<40x2xf32>, vector<1x2xf32> -> vector<1x2xf32>
    %c19_i32_141 = arith.constant 19 : i32
    %237 = arith.subi %c19_i32_141, %c17_i32 : i32
    %238 = arith.index_cast %237 : i32 to index
    %c0_142 = arith.constant 0 : index
    %239 = vector.load %arg10[%238, %c0_142] : memref<20x2xf32, #tpu.memory_space<vmem>>, vector<1x2xf32>
    tpu.vector_store %arg10[%238, %c0_142], %236 {strides = array<i32>} : memref<20x2xf32, #tpu.memory_space<vmem>>, vector<1x2xf32>,
    %c18_i32 = arith.constant 18 : i32
    %240 = arith.index_cast %c18_i32 : i32 to index
    %c0_143 = arith.constant 0 : index
    %241 = vector.load %arg8[%240, %c0_143] : memref<20x40xf32, #tpu.memory_space<vmem>>, vector<1x40xf32>
    %cst_144 = arith.constant dense<0.000000e+00> : vector<1x40xf32>
    %242 = tpu.matmul %232, %20, %cst_144 {dimension_numbers = #tpu.dot_dimension_numbers<[1], [0], [0], [1], [0, 0, 1, 1], [], []>} : vector<1x40xf32>, vector<40x40xf32>, vector<1x40xf32> -> vector<1x40xf32>
    %243 = arith.addf %241, %242 : vector<1x40xf32>
    %244 = math.tanh %243 : vector<1x40xf32>
    %cst_145 = arith.constant dense<0.000000e+00> : vector<1x2xf32>
    %245 = tpu.matmul %244, %21, %cst_145 {dimension_numbers = #tpu.dot_dimension_numbers<[1], [0], [0], [1], [0, 0, 1, 1], [], []>} : vector<1x40xf32>, vector<40x2xf32>, vector<1x2xf32> -> vector<1x2xf32>
    %246 = arith.index_cast %c18_i32 : i32 to index
    %c0_146 = arith.constant 0 : index
    %247 = vector.load %arg9[%246, %c0_146] : memref<20x2xf32, #tpu.memory_space<vmem>>, vector<1x2xf32>
    tpu.vector_store %arg9[%246, %c0_146], %245 {strides = array<i32>} : memref<20x2xf32, #tpu.memory_space<vmem>>, vector<1x2xf32>,
    %cst_147 = arith.constant dense<0.000000e+00> : vector<1x2xf32>
    %248 = tpu.matmul %244, %22, %cst_147 {dimension_numbers = #tpu.dot_dimension_numbers<[1], [0], [0], [1], [0, 0, 1, 1], [], []>} : vector<1x40xf32>, vector<40x2xf32>, vector<1x2xf32> -> vector<1x2xf32>
    %c19_i32_148 = arith.constant 19 : i32
    %249 = arith.subi %c19_i32_148, %c18_i32 : i32
    %250 = arith.index_cast %249 : i32 to index
    %c0_149 = arith.constant 0 : index
    %251 = vector.load %arg10[%250, %c0_149] : memref<20x2xf32, #tpu.memory_space<vmem>>, vector<1x2xf32>
    tpu.vector_store %arg10[%250, %c0_149], %248 {strides = array<i32>} : memref<20x2xf32, #tpu.memory_space<vmem>>, vector<1x2xf32>,
    %c19_i32_150 = arith.constant 19 : i32
    %252 = arith.index_cast %c19_i32_150 : i32 to index
    %c0_151 = arith.constant 0 : index
    %253 = vector.load %arg8[%252, %c0_151] : memref<20x40xf32, #tpu.memory_space<vmem>>, vector<1x40xf32>
    %cst_152 = arith.constant dense<0.000000e+00> : vector<1x40xf32>
    %254 = tpu.matmul %244, %20, %cst_152 {dimension_numbers = #tpu.dot_dimension_numbers<[1], [0], [0], [1], [0, 0, 1, 1], [], []>} : vector<1x40xf32>, vector<40x40xf32>, vector<1x40xf32> -> vector<1x40xf32>
    %255 = arith.addf %253, %254 : vector<1x40xf32>
    %256 = math.tanh %255 : vector<1x40xf32>
    %cst_153 = arith.constant dense<0.000000e+00> : vector<1x2xf32>
    %257 = tpu.matmul %256, %21, %cst_153 {dimension_numbers = #tpu.dot_dimension_numbers<[1], [0], [0], [1], [0, 0, 1, 1], [], []>} : vector<1x40xf32>, vector<40x2xf32>, vector<1x2xf32> -> vector<1x2xf32>
    %258 = arith.index_cast %c19_i32_150 : i32 to index
    %c0_154 = arith.constant 0 : index
    %259 = vector.load %arg9[%258, %c0_154] : memref<20x2xf32, #tpu.memory_space<vmem>>, vector<1x2xf32>
    tpu.vector_store %arg9[%258, %c0_154], %257 {strides = array<i32>} : memref<20x2xf32, #tpu.memory_space<vmem>>, vector<1x2xf32>,
    %cst_155 = arith.constant dense<0.000000e+00> : vector<1x2xf32>
    %260 = tpu.matmul %256, %22, %cst_155 {dimension_numbers = #tpu.dot_dimension_numbers<[1], [0], [0], [1], [0, 0, 1, 1], [], []>} : vector<1x40xf32>, vector<40x2xf32>, vector<1x2xf32> -> vector<1x2xf32>
    %c19_i32_156 = arith.constant 19 : i32
    %261 = arith.subi %c19_i32_156, %c19_i32_150 : i32
    %262 = arith.index_cast %261 : i32 to index
    %c0_157 = arith.constant 0 : index
    %263 = vector.load %arg10[%262, %c0_157] : memref<20x2xf32, #tpu.memory_space<vmem>>, vector<1x2xf32>
    tpu.vector_store %arg10[%262, %c0_157], %260 {strides = array<i32>} : memref<20x2xf32, #tpu.memory_space<vmem>>, vector<1x2xf32>,
    %c20_i32_158 = arith.constant 20 : i32
    %c0_159 = arith.constant 0 : index
    %c0_160 = arith.constant 0 : index
    %264 = vector.load %arg9[%c0_159, %c0_160] : memref<20x2xf32, #tpu.memory_space<vmem>>, vector<20x2xf32>
    %c0_161 = arith.constant 0 : index
    %c0_162 = arith.constant 0 : index
    %265 = vector.load %arg10[%c0_161, %c0_162] : memref<20x2xf32, #tpu.memory_space<vmem>>, vector<20x2xf32>
    %266 = arith.addf %264, %265 : vector<20x2xf32>
    %c0_163 = arith.constant 0 : index
    %c0_164 = arith.constant 0 : index
    %267 = vector.load %arg6[%c0_163, %c0_164] : memref<1x2xf32, #tpu.memory_space<vmem>>, vector<1x2xf32>
    %268 = vector.broadcast %267 : vector<1x2xf32> to vector<20x2xf32>
    %269 = arith.addf %266, %268 : vector<20x2xf32>
    %c0_165 = arith.constant 0 : index
    %c0_166 = arith.constant 0 : index
    %270 = vector.load %arg7[%c0_165, %c0_166] : memref<20x2xf32, #tpu.memory_space<vmem>>, vector<20x2xf32>
    tpu.vector_store %arg7[%c0_165, %c0_166], %269 {strides = array<i32>} : memref<20x2xf32, #tpu.memory_space<vmem>>, vector<20x2xf32>,
    return
  }
}

</mosaic_0001>

<llo_original>
// kernel: tpu_custom_call.1
$region0: #{tpu_custom_call.1}
  #allocation0 [shape = 'u32[]', space=smem, size = 0x4, offset = 0x4, fixed_abs, tag = 'smem constant byte address 0x4 - core index']
  #allocation1 [shape = 'u32[144,128]{1,0:T(1,128)}', space=vmem, size = 0x12000, scoped, tag = 'internal scratch']
  #allocation2 [shape = 'f32[20,40]{1,0:T(8,128)}', space=vmem, size = 0x3000, scoped, tag = 'scratch operand']
  #allocation3 [shape = 'f32[20,2]{1,0:T(8,128)}', space=vmem, size = 0x3000, scoped, tag = 'scratch operand']
  #allocation4 [shape = 'f32[20,2]{1,0:T(8,128)}', space=vmem, size = 0x3000, scoped, tag = 'scratch operand']
  %s0 = inlined_call_operand.vmem [shape: f32[20,20], index: 0, kind: input, shape index: {}]
  %s1 = inlined_call_operand.hbm [shape: f32[20,40], index: 1, kind: input, shape index: {}]
  %s2 = inlined_call_operand.vmem [shape: f32[40,40], index: 2, kind: input, shape index: {}]
  %s3 = inlined_call_operand.vmem [shape: f32[1,40], index: 3, kind: input, shape index: {}]
  %s4 = inlined_call_operand.vmem [shape: f32[40,2], index: 4, kind: input, shape index: {}]
  %s5 = inlined_call_operand.vmem [shape: f32[40,2], index: 5, kind: input, shape index: {}]
  %s6 = inlined_call_operand.vmem [shape: f32[1,2], index: 6, kind: input, shape index: {}]
  %s7 = inlined_call_operand.vmem [shape: f32[20,2], index: 7, kind: output, shape index: {}]
  %s8 = sld [smem:[#allocation0]]
  $region42: #{tpu_custom_call.1} parent=0
    _
  %s10 = ssub.s32 1, %s8
  %s11 = scalar_select 0, %s10, %s8
  $region1: #{tpu_custom_call.1} parent=0
    #allocation5 [shape = 'u8[12288]{0}', space=vmem, size = 0x3000, scoped, tag = 'input window, operand 1, single buffered']
    #allocation6 [shape = 's32[1]{0}', space=sflag, size = 0x4, scoped, tag = 'scoped memory for tpu_custom_call.1']
    %12 = vsyncpa [#allocation6], 0
    // Predicated region
    $region2: #{tpu_custom_call.1} parent=1 // pred_check
      _
    $region3: #{tpu_custom_call.1} parent=1 // pred_check_branch
      %14 = sbr.rel (0) target = $region5
    $region4: #{tpu_custom_call.1} parent=1 // pred_region
      _
    $region5: #{tpu_custom_call.1} parent=1 // pred_fallthru
      _
    // Predicated region
    $region6: #{tpu_custom_call.1} parent=1 // pred_check
      _
    $region7: #{tpu_custom_call.1} parent=1 // pred_check_branch
      %16 = sbr.rel (0) target = $region9
    $region8: #{tpu_custom_call.1} parent=1 // pred_region
      %s18 = ssub.s32 384, 384
      %19 = vsyncadd [#allocation6], %s18
      %s20 = sshll.u32 [#allocation5], 4
      %s21 = int_to_ptr.vmem [resolvable:$true] %s20
      %26 = dma.hbm_to_vmem [thread:$0]  %s1, 384, %s21, [#allocation6], 128, 128, 8
    $region9: #{tpu_custom_call.1} parent=1 // pred_fallthru
      _
    // Predicated region
    $region10: #{tpu_custom_call.1} parent=1 // pred_check
      _
    $region11: #{tpu_custom_call.1} parent=1 // pred_check_branch
      %28 = sbr.rel (0) target = $region13
    $region12: #{tpu_custom_call.1} parent=1 // pred_region
      _
    $region13: #{tpu_custom_call.1} parent=1 // pred_fallthru
      _
    // Predicated region
    $region14: #{tpu_custom_call.1} parent=1 // pred_check
      _
    $region15: #{tpu_custom_call.1} parent=1 // pred_check_branch
      %30 = sbr.rel (0) target = $region17
    $region16: #{tpu_custom_call.1} parent=1 // pred_region
      _
    $region17: #{tpu_custom_call.1} parent=1 // pred_fallthru
      _
    // Predicated region
    $region18: #{tpu_custom_call.1} parent=1 // pred_check
      _
    $region19: #{tpu_custom_call.1} parent=1 // pred_check_branch
      %32 = sbr.rel (0) target = $region21
    $region20: #{tpu_custom_call.1} parent=1 // pred_region
      _
    $region21: #{tpu_custom_call.1} parent=1 // pred_fallthru
      _
    // Predicated region
    $region22: #{tpu_custom_call.1} parent=1 // pred_check
      _
    $region23: #{tpu_custom_call.1} parent=1 // pred_check_branch
      %34 = sbr.rel (0) target = $region25
    $region24: #{tpu_custom_call.1} parent=1 // pred_region
      _
    $region25: #{tpu_custom_call.1} parent=1 // pred_fallthru
      _
    // Predicated region
    $region26: #{tpu_custom_call.1} parent=1 // pred_check
      _
    $region27: #{tpu_custom_call.1} parent=1 // pred_check_branch
      %36 = sbr.rel (0) target = $region29
    $region28: #{tpu_custom_call.1} parent=1 // pred_region
      _
    $region29: #{tpu_custom_call.1} parent=1 // pred_fallthru
      _
    // Predicated region
    $region30: #{tpu_custom_call.1} parent=1 // pred_check
      _
    $region31: #{tpu_custom_call.1} parent=1 // pred_check_branch
      %38 = sbr.rel (0) target = $region33
    $region32: #{tpu_custom_call.1} parent=1 // pred_region
      %39 = dma.done [#allocation6], 384
    $region33: #{tpu_custom_call.1} parent=1 // pred_fallthru
      _
    %v40 = vld [vmem:[%s0] sm:$0xff]
    %v41 = vld [vmem:[%s0 + $0x8] sm:$0xff]
    %v42 = vld [vmem:[%s0 + $0x10] sm:$0xf]
    %v43 = vld [vmem:[#allocation5] sm:$0xff]
    %v44 = vld [vmem:[#allocation5 + $0x8] sm:$0xff]
    %v45 = vld [vmem:[#allocation5 + $0x10] sm:$0xf]
    %vm46 = vcmask 162816
    %v48 = vsel %vm46, %v40, 0
    %v51 = vsel %vm46, %v41, 0
    %v54 = vsel %vm46, %v42, 0
    %vm56 = vcmask 1043456
    %v58 = vsel %vm56, %v45, 0
    %60 = vmatprep.subr.mxu0 0.0
    %61 = vmatpush1.msra.mxu0 %v43
    %62 = vmatprep.subr.mxu0 0.0
    %63 = vmatpush1.msra.mxu0 %v44
    %64 = vmatprep.subr.mxu0 0.0
    %65 = vmatpush1.msra.mxu0 %v58
    %66 = vmatprep.subr.mxu0 0.0
    %67 = vmatpush1.msra.mxu0 0.0
    %68 = vmatprep.subr.mxu0 0.0
    %69 = vmatpush1.msra.mxu0 0.0
    %70 = vmatprep.subr.mxu0 0.0
    %71 = vmatpush1.msra.mxu0 0.0
    %72 = vmatprep.subr.mxu0 0.0
    %73 = vmatpush1.msra.mxu0 0.0
    %74 = vmatprep.subr.mxu0 0.0
    %75 = vmatpush1.msra.mxu0 0.0
    %76 = vmatprep.subr.mxu0 0.0
    %77 = vmatpush1.msra.mxu0 0.0
    %78 = vmatprep.subr.mxu0 0.0
    %79 = vmatpush1.msra.mxu0 0.0
    %80 = vmatprep.subr.mxu0 0.0
    %81 = vmatpush1.msra.mxu0 0.0
    %82 = vmatprep.subr.mxu0 0.0
    %83 = vmatpush1.msra.mxu0 0.0
    %84 = vmatprep.subr.mxu0 0.0
    %85 = vmatpush1.msra.mxu0 0.0
    %86 = vmatprep.subr.mxu0 0.0
    %87 = vmatpush1.msra.mxu0 0.0
    %88 = vmatprep.subr.mxu0 0.0
    %89 = vmatpush1.msra.mxu0 0.0
    %90 = vmatprep.subr.mxu0 0.0
    %91 = vmatpush1.msra.mxu0 0.0
    %92 = vmatprep.subr.mxu0 0.0
    %93 = vmatpush1.msra.mxu0 0.0
    %94 = vmatprep.subr.mxu0 0.0
    %95 = vmatpush1.msra.mxu0 0.0
    %96 = vmatprep.subr.mxu0 0.0
    %97 = vmatpush1.msra.mxu0 0.0
    %98 = vmatprep.subr.mxu0 0.0
    %99 = vmatpush1.msra.mxu0 0.0
    %100 = vmatprep.subr.mxu0 0.0
    %101 = vmatpush1.msra.mxu0 0.0
    %102 = vmatprep.subr.mxu0 0.0
    %103 = vmatpush1.msra.mxu0 0.0
    %104 = vmatprep.subr.mxu0 0.0
    %105 = vmatpush1.msra.mxu0 0.0
    %106 = vmatprep.subr.mxu0 0.0
    %107 = vmatpush1.msra.mxu0 0.0
    %108 = vmatprep.subr.mxu0 0.0
    %109 = vmatpush1.msra.mxu0 0.0
    %110 = vmatprep.subr.mxu0 0.0
    %111 = vmatpush1.msra.mxu0 0.0
    %112 = vmatprep.subr.mxu0 0.0
    %113 = vmatpush1.msra.mxu0 0.0
    %114 = vmatprep.subr.mxu0 0.0
    %115 = vmatpush1.msra.mxu0 0.0
    %116 = vmatprep.subr.mxu0 0.0
    %117 = vmatpush1.msra.mxu0 0.0
    %118 = vmatprep.subr.mxu0 0.0
    %119 = vmatpush1.msra.mxu0 0.0
    %120 = vmatprep.subr.mxu0 0.0
    %121 = vmatpush1.msra.mxu0 0.0
    %122 = vmatprep.subr.mxu0 0.0
    %123 = vmatpush1.msra.mxu0 0.0
    %124 = vmatprep.mubr.f32.mxu0 0.0
    %125 = vmatmul.mubr.f32.gmra.mrb[0].mxu0 %v48
    %v126 = vpop.f32.mrb[0].mxu0
    %v127 = vadd.f32 0.0, %v126
    %v128 = vpop.f32.mrb[0].mxu0
    %129 = vmatprep.mubr.f32.mxu0 0.0
    %130 = vmatmul.mubr.f32.gmra.mrb[0].mxu0 %v51
    %v131 = vpop.f32.mrb[0].mxu0
    %v132 = vadd.f32 0.0, %v131
    %v133 = vpop.f32.mrb[0].mxu0
    %134 = vmatprep.mubr.f32.mxu0 0.0
    %135 = vmatmul.mubr.f32.gmra.mrb[0].mxu0 %v54
    %v136 = vpop.f32.mrb[0].mxu0
    %v137 = vadd.f32 0.0, %v136
    %v138 = vpop.f32.mrb[0].mxu0
    %139 = vdwg.mxu0
    %v140 = vlaneseq
    %v141 = vshrl.u32 %v140, 7
    %v142 = vadd.s32 %v141, 8
    %v143 = vadd.s32 %v141, 16
    %v144 = vlaneseq
    %v145 = vand.u32 %v144, 127
    %v146 = vadd.s32 %v141, %v145
    %v147 = vadd.s32 %v142, %v145
    %v148 = vadd.s32 %v143, %v145
    %vm149 = vcmp.eq.s32.totalorder %v146, 19
    %vm150 = vcmp.eq.s32.totalorder %v147, 19
    %vm151 = vcmp.eq.s32.totalorder %v148, 19
    %v152 = vsel %vm149, 1.0, 0.0
    %v153 = vsel %vm150, 1.0, 0.0
    %v154 = vsel %vm151, 1.0, 0.0
    %v156 = vsel %vm46, %v152, 0
    %v159 = vsel %vm46, %v153, 0
    %v162 = vsel %vm46, %v154, 0
    %v165 = vsel %vm56, %v137, 0
    %167 = vmatprep.subr.mxu0 0.0
    %168 = vmatpush1.msra.mxu0 %v127
    %169 = vmatprep.subr.mxu0 0.0
    %170 = vmatpush1.msra.mxu0 %v132
    %171 = vmatprep.subr.mxu0 0.0
    %172 = vmatpush1.msra.mxu0 %v165
    %173 = vmatprep.subr.mxu0 0.0
    %174 = vmatpush1.msra.mxu0 0.0
    %175 = vmatprep.subr.mxu0 0.0
    %176 = vmatpush1.msra.mxu0 0.0
    %177 = vmatprep.subr.mxu0 0.0
    %178 = vmatpush1.msra.mxu0 0.0
    %179 = vmatprep.subr.mxu0 0.0
    %180 = vmatpush1.msra.mxu0 0.0
    %181 = vmatprep.subr.mxu0 0.0
    %182 = vmatpush1.msra.mxu0 0.0
    %183 = vmatprep.subr.mxu0 0.0
    %184 = vmatpush1.msra.mxu0 0.0
    %185 = vmatprep.subr.mxu0 0.0
    %186 = vmatpush1.msra.mxu0 0.0
    %187 = vmatprep.subr.mxu0 0.0
    %188 = vmatpush1.msra.mxu0 0.0
    %189 = vmatprep.subr.mxu0 0.0
    %190 = vmatpush1.msra.mxu0 0.0
    %191 = vmatprep.subr.mxu0 0.0
    %192 = vmatpush1.msra.mxu0 0.0
    %193 = vmatprep.subr.mxu0 0.0
    %194 = vmatpush1.msra.mxu0 0.0
    %195 = vmatprep.subr.mxu0 0.0
    %196 = vmatpush1.msra.mxu0 0.0
    %197 = vmatprep.subr.mxu0 0.0
    %198 = vmatpush1.msra.mxu0 0.0
    %199 = vmatprep.subr.mxu0 0.0
    %200 = vmatpush1.msra.mxu0 0.0
    %201 = vmatprep.subr.mxu0 0.0
    %202 = vmatpush1.msra.mxu0 0.0
    %203 = vmatprep.subr.mxu0 0.0
    %204 = vmatpush1.msra.mxu0 0.0
    %205 = vmatprep.subr.mxu0 0.0
    %206 = vmatpush1.msra.mxu0 0.0
    %207 = vmatprep.subr.mxu0 0.0
    %208 = vmatpush1.msra.mxu0 0.0
    %209 = vmatprep.subr.mxu0 0.0
    %210 = vmatpush1.msra.mxu0 0.0
    %211 = vmatprep.subr.mxu0 0.0
    %212 = vmatpush1.msra.mxu0 0.0
    %213 = vmatprep.subr.mxu0 0.0
    %214 = vmatpush1.msra.mxu0 0.0
    %215 = vmatprep.subr.mxu0 0.0
    %216 = vmatpush1.msra.mxu0 0.0
    %217 = vmatprep.subr.mxu0 0.0
    %218 = vmatpush1.msra.mxu0 0.0
    %219 = vmatprep.subr.mxu0 0.0
    %220 = vmatpush1.msra.mxu0 0.0
    %221 = vmatprep.subr.mxu0 0.0
    %222 = vmatpush1.msra.mxu0 0.0
    %223 = vmatprep.subr.mxu0 0.0
    %224 = vmatpush1.msra.mxu0 0.0
    %225 = vmatprep.subr.mxu0 0.0
    %226 = vmatpush1.msra.mxu0 0.0
    %227 = vmatprep.subr.mxu0 0.0
    %228 = vmatpush1.msra.mxu0 0.0
    %229 = vmatprep.subr.mxu0 0.0
    %230 = vmatpush1.msra.mxu0 0.0
    %231 = vmatprep.mubr.f32.mxu0 0.0
    %232 = vmatmul.mubr.f32.gmra.mrb[0].mxu0 %v156
    %v233 = vpop.f32.mrb[0].mxu0
    %v234 = vadd.f32 0.0, %v233
    %v235 = vpop.f32.mrb[0].mxu0
    %236 = vmatprep.mubr.f32.mxu0 0.0
    %237 = vmatmul.mubr.f32.gmra.mrb[0].mxu0 %v159
    %v238 = vpop.f32.mrb[0].mxu0
    %v239 = vadd.f32 0.0, %v238
    %v240 = vpop.f32.mrb[0].mxu0
    %241 = vmatprep.mubr.f32.mxu0 0.0
    %242 = vmatmul.mubr.f32.gmra.mrb[0].mxu0 %v162
    %v243 = vpop.f32.mrb[0].mxu0
    %v244 = vadd.f32 0.0, %v243
    %v245 = vpop.f32.mrb[0].mxu0
    %246 = vdwg.mxu0
    %vm247 = vcmp.lt.s32.totalorder %v145, 20
    %v248 = vsel %vm247, %v127, %v234
    %v249 = vsel %vm247, %v132, %v239
    %v250 = vsel %vm247, %v137, %v244
    %v251 = vld [vmem:[%s3] sm:$0x1]
    %v253 = vlaneseq
    %v254 = vshrl.u32 %v253, 7
    %v255 = vsub.s32 0, %v254
    %v256 = vrot.slane %v251, %v255
    %v258 = vadd.f32 %v248, %v256
    %v259 = vadd.f32 %v249, %v256
    %v260 = vadd.f32 %v250, %v256
    %vm261 = vcmask 326656
    %262 = vst.msk [vmem:[#allocation2] sm:$0xff] %vm261, %v258
    %263 = vst.msk [vmem:[#allocation2 + $0x8] sm:$0xff] %vm261, %v259
    %vm264 = vcmask 322560
    %265 = vst.msk [vmem:[#allocation2 + $0x10] sm:$0xf] %vm264, %v260
    %v266 = vld [vmem:[%s2] sm:$0xff]
    %v267 = vld [vmem:[%s2 + $0x8] sm:$0xff]
    %v268 = vld [vmem:[%s2 + $0x10] sm:$0xff]
    %v269 = vld [vmem:[%s2 + $0x18] sm:$0xff]
    %v270 = vld [vmem:[%s2 + $0x20] sm:$0xff]
    %v271 = vld [vmem:[%s4] sm:$0xff]
    %v272 = vld [vmem:[%s4 + $0x8] sm:$0xff]
    %v273 = vld [vmem:[%s4 + $0x10] sm:$0xff]
    %v274 = vld [vmem:[%s4 + $0x18] sm:$0xff]
    %v275 = vld [vmem:[%s4 + $0x20] sm:$0xff]
    %v276 = vld [vmem:[%s5] sm:$0xff]
    %v277 = vld [vmem:[%s5 + $0x8] sm:$0xff]
    %v278 = vld [vmem:[%s5 + $0x10] sm:$0xff]
    %v279 = vld [vmem:[%s5 + $0x18] sm:$0xff]
    %v280 = vld [vmem:[%s5 + $0x20] sm:$0xff]
    %v281 = vld [vmem:[#allocation2] sm:$0x1]
    %v283 = vsel %vm261, 0.0, 0
    %285 = vmatprep.subr.mxu0 0.0
    %286 = vmatpush1.msra.mxu0 %v266
    %287 = vmatprep.subr.mxu0 0.0
    %288 = vmatpush1.msra.mxu0 %v267
    %289 = vmatprep.subr.mxu0 0.0
    %290 = vmatpush1.msra.mxu0 %v268
    %291 = vmatprep.subr.mxu0 0.0
    %292 = vmatpush1.msra.mxu0 %v269
    %293 = vmatprep.subr.mxu0 0.0
    %294 = vmatpush1.msra.mxu0 %v270
    %295 = vmatprep.subr.mxu0 0.0
    %296 = vmatpush1.msra.mxu0 0.0
    %297 = vmatprep.subr.mxu0 0.0
    %298 = vmatpush1.msra.mxu0 0.0
    %299 = vmatprep.subr.mxu0 0.0
    %300 = vmatpush1.msra.mxu0 0.0
    %301 = vmatprep.subr.mxu0 0.0
    %302 = vmatpush1.msra.mxu0 0.0
    %303 = vmatprep.subr.mxu0 0.0
    %304 = vmatpush1.msra.mxu0 0.0
    %305 = vmatprep.subr.mxu0 0.0
    %306 = vmatpush1.msra.mxu0 0.0
    %307 = vmatprep.subr.mxu0 0.0
    %308 = vmatpush1.msra.mxu0 0.0
    %309 = vmatprep.subr.mxu0 0.0
    %310 = vmatpush1.msra.mxu0 0.0
    %311 = vmatprep.subr.mxu0 0.0
    %312 = vmatpush1.msra.mxu0 0.0
    %313 = vmatprep.subr.mxu0 0.0
    %314 = vmatpush1.msra.mxu0 0.0
    %315 = vmatprep.subr.mxu0 0.0
    %316 = vmatpush1.msra.mxu0 0.0
    %317 = vmatprep.subr.mxu0 0.0
    %318 = vmatpush1.msra.mxu0 0.0
    %319 = vmatprep.subr.mxu0 0.0
    %320 = vmatpush1.msra.mxu0 0.0
    %321 = vmatprep.subr.mxu0 0.0
    %322 = vmatpush1.msra.mxu0 0.0
    %323 = vmatprep.subr.mxu0 0.0
    %324 = vmatpush1.msra.mxu0 0.0
    %325 = vmatprep.subr.mxu0 0.0
    %326 = vmatpush1.msra.mxu0 0.0
    %327 = vmatprep.subr.mxu0 0.0
    %328 = vmatpush1.msra.mxu0 0.0
    %329 = vmatprep.subr.mxu0 0.0
    %330 = vmatpush1.msra.mxu0 0.0
    %331 = vmatprep.subr.mxu0 0.0
    %332 = vmatpush1.msra.mxu0 0.0
    %333 = vmatprep.subr.mxu0 0.0
    %334 = vmatpush1.msra.mxu0 0.0
    %335 = vmatprep.subr.mxu0 0.0
    %336 = vmatpush1.msra.mxu0 0.0
    %337 = vmatprep.subr.mxu0 0.0
    %338 = vmatpush1.msra.mxu0 0.0
    %339 = vmatprep.subr.mxu0 0.0
    %340 = vmatpush1.msra.mxu0 0.0
    %341 = vmatprep.subr.mxu0 0.0
    %342 = vmatpush1.msra.mxu0 0.0
    %343 = vmatprep.subr.mxu0 0.0
    %344 = vmatpush1.msra.mxu0 0.0
    %345 = vmatprep.subr.mxu0 0.0
    %346 = vmatpush1.msra.mxu0 0.0
    %347 = vmatprep.subr.mxu0 0.0
    %348 = vmatpush1.msra.mxu0 0.0
    %349 = vmatprep.mubr.f32.mxu0 0.0
    %350 = vmatmul.mubr.f32.gmra.mrb[0].mxu0 %v283
    %v351 = vpop.f32.mrb[0].mxu0
    %v352 = vadd.f32 0.0, %v351
    %v353 = vpop.f32.mrb[0].mxu0
    %354 = vdwg.mxu0
    %v355 = vadd.f32 %v281, %v352
    %v356 = vtanh.pop %v355
    %v358 = vsel %vm261, %v356, 0
    %360 = vmatprep.subr.mxu0 0.0
    %361 = vmatpush1.msra.mxu0 %v271
    %362 = vmatprep.subr.mxu0 0.0
    %363 = vmatpush1.msra.mxu0 %v272
    %364 = vmatprep.subr.mxu0 0.0
    %365 = vmatpush1.msra.mxu0 %v273
    %366 = vmatprep.subr.mxu0 0.0
    %367 = vmatpush1.msra.mxu0 %v274
    %368 = vmatprep.subr.mxu0 0.0
    %369 = vmatpush1.msra.mxu0 %v275
    %370 = vmatprep.subr.mxu0 0.0
    %371 = vmatpush1.msra.mxu0 0.0
    %372 = vmatprep.subr.mxu0 0.0
    %373 = vmatpush1.msra.mxu0 0.0
    %374 = vmatprep.subr.mxu0 0.0
    %375 = vmatpush1.msra.mxu0 0.0
    %376 = vmatprep.subr.mxu0 0.0
    %377 = vmatpush1.msra.mxu0 0.0
    %378 = vmatprep.subr.mxu0 0.0
    %379 = vmatpush1.msra.mxu0 0.0
    %380 = vmatprep.subr.mxu0 0.0
    %381 = vmatpush1.msra.mxu0 0.0
    %382 = vmatprep.subr.mxu0 0.0
    %383 = vmatpush1.msra.mxu0 0.0
    %384 = vmatprep.subr.mxu0 0.0
    %385 = vmatpush1.msra.mxu0 0.0
    %386 = vmatprep.subr.mxu0 0.0
    %387 = vmatpush1.msra.mxu0 0.0
    %388 = vmatprep.subr.mxu0 0.0
    %389 = vmatpush1.msra.mxu0 0.0
    %390 = vmatprep.subr.mxu0 0.0
    %391 = vmatpush1.msra.mxu0 0.0
    %392 = vmatprep.subr.mxu0 0.0
    %393 = vmatpush1.msra.mxu0 0.0
    %394 = vmatprep.subr.mxu0 0.0
    %395 = vmatpush1.msra.mxu0 0.0
    %396 = vmatprep.subr.mxu0 0.0
    %397 = vmatpush1.msra.mxu0 0.0
    %398 = vmatprep.subr.mxu0 0.0
    %399 = vmatpush1.msra.mxu0 0.0
    %400 = vmatprep.subr.mxu0 0.0
    %401 = vmatpush1.msra.mxu0 0.0
    %402 = vmatprep.subr.mxu0 0.0
    %403 = vmatpush1.msra.mxu0 0.0
    %404 = vmatprep.subr.mxu0 0.0
    %405 = vmatpush1.msra.mxu0 0.0
    %406 = vmatprep.subr.mxu0 0.0
    %407 = vmatpush1.msra.mxu0 0.0
    %408 = vmatprep.subr.mxu0 0.0
    %409 = vmatpush1.msra.mxu0 0.0
    %410 = vmatprep.subr.mxu0 0.0
    %411 = vmatpush1.msra.mxu0 0.0
    %412 = vmatprep.subr.mxu0 0.0
    %413 = vmatpush1.msra.mxu0 0.0
    %414 = vmatprep.subr.mxu0 0.0
    %415 = vmatpush1.msra.mxu0 0.0
    %416 = vmatprep.subr.mxu0 0.0
    %417 = vmatpush1.msra.mxu0 0.0
    %418 = vmatprep.subr.mxu0 0.0
    %419 = vmatpush1.msra.mxu0 0.0
    %420 = vmatprep.subr.mxu0 0.0
    %421 = vmatpush1.msra.mxu0 0.0
    %422 = vmatprep.subr.mxu0 0.0
    %423 = vmatpush1.msra.mxu0 0.0
    %424 = vmatprep.mubr.f32.mxu0 0.0
    %425 = vmatmul.mubr.f32.gmra.mrb[0].mxu0 %v358
    %v426 = vpop.f32.mrb[0].mxu0
    %v427 = vadd.f32 0.0, %v426
    %v428 = vpop.f32.mrb[0].mxu0
    %429 = vdwg.mxu0
    %vm430 = vcmask 8192
    %431 = vst.msk [vmem:[#allocation3] sm:$0x1] %vm430, %v427
    %432 = vmatprep.subr.mxu0 0.0
    %433 = vmatpush1.msra.mxu0 %v276
    %434 = vmatprep.subr.mxu0 0.0
    %435 = vmatpush1.msra.mxu0 %v277
    %436 = vmatprep.subr.mxu0 0.0
    %437 = vmatpush1.msra.mxu0 %v278
    %438 = vmatprep.subr.mxu0 0.0
    %439 = vmatpush1.msra.mxu0 %v279
    %440 = vmatprep.subr.mxu0 0.0
    %441 = vmatpush1.msra.mxu0 %v280
    %442 = vmatprep.subr.mxu0 0.0
    %443 = vmatpush1.msra.mxu0 0.0
    %444 = vmatprep.subr.mxu0 0.0
    %445 = vmatpush1.msra.mxu0 0.0
    %446 = vmatprep.subr.mxu0 0.0
    %447 = vmatpush1.msra.mxu0 0.0
    %448 = vmatprep.subr.mxu0 0.0
    %449 = vmatpush1.msra.mxu0 0.0
    %450 = vmatprep.subr.mxu0 0.0
    %451 = vmatpush1.msra.mxu0 0.0
    %452 = vmatprep.subr.mxu0 0.0
    %453 = vmatpush1.msra.mxu0 0.0
    %454 = vmatprep.subr.mxu0 0.0
    %455 = vmatpush1.msra.mxu0 0.0
    %456 = vmatprep.subr.mxu0 0.0
    %457 = vmatpush1.msra.mxu0 0.0
    %458 = vmatprep.subr.mxu0 0.0
    %459 = vmatpush1.msra.mxu0 0.0
    %460 = vmatprep.subr.mxu0 0.0
    %461 = vmatpush1.msra.mxu0 0.0
    %462 = vmatprep.subr.mxu0 0.0
    %463 = vmatpush1.msra.mxu0 0.0
    %464 = vmatprep.subr.mxu0 0.0
    %465 = vmatpush1.msra.mxu0 0.0
    %466 = vmatprep.subr.mxu0 0.0
    %467 = vmatpush1.msra.mxu0 0.0
    %468 = vmatprep.subr.mxu0 0.0
    %469 = vmatpush1.msra.mxu0 0.0
    %470 = vmatprep.subr.mxu0 0.0
    %471 = vmatpush1.msra.mxu0 0.0
    %472 = vmatprep.subr.mxu0 0.0
    %473 = vmatpush1.msra.mxu0 0.0
    %474 = vmatprep.subr.mxu0 0.0
    %475 = vmatpush1.msra.mxu0 0.0
    %476 = vmatprep.subr.mxu0 0.0
    %477 = vmatpush1.msra.mxu0 0.0
    %478 = vmatprep.subr.mxu0 0.0
    %479 = vmatpush1.msra.mxu0 0.0
    %480 = vmatprep.subr.mxu0 0.0
    %481 = vmatpush1.msra.mxu0 0.0
    %482 = vmatprep.subr.mxu0 0.0
    %483 = vmatpush1.msra.mxu0 0.0
    %484 = vmatprep.subr.mxu0 0.0
    %485 = vmatpush1.msra.mxu0 0.0
    %486 = vmatprep.subr.mxu0 0.0
    %487 = vmatpush1.msra.mxu0 0.0
    %488 = vmatprep.subr.mxu0 0.0
    %489 = vmatpush1.msra.mxu0 0.0
    %490 = vmatprep.subr.mxu0 0.0
    %491 = vmatpush1.msra.mxu0 0.0
    %492 = vmatprep.subr.mxu0 0.0
    %493 = vmatpush1.msra.mxu0 0.0
    %494 = vmatprep.subr.mxu0 0.0
    %495 = vmatpush1.msra.mxu0 0.0
    %496 = vmatprep.mubr.f32.mxu0 0.0
    %497 = vmatmul.mubr.f32.gmra.mrb[0].mxu0 %v358
    %v498 = vpop.f32.mrb[0].mxu0
    %v499 = vadd.f32 0.0, %v498
    %v500 = vpop.f32.mrb[0].mxu0
    %501 = vdwg.mxu0
    %502 = vst.msk [vmem:[#allocation4 + $0x13] sm:$0x1] %vm430, %v499
    %v503 = vld [vmem:[#allocation2 + $0x1] sm:$0x1]
    %504 = vmatprep.subr.mxu0 0.0
    %505 = vmatpush1.msra.mxu0 %v266
    %506 = vmatprep.subr.mxu0 0.0
    %507 = vmatpush1.msra.mxu0 %v267
    %508 = vmatprep.subr.mxu0 0.0
    %509 = vmatpush1.msra.mxu0 %v268
    %510 = vmatprep.subr.mxu0 0.0
    %511 = vmatpush1.msra.mxu0 %v269
    %512 = vmatprep.subr.mxu0 0.0
    %513 = vmatpush1.msra.mxu0 %v270
    %514 = vmatprep.subr.mxu0 0.0
    %515 = vmatpush1.msra.mxu0 0.0
    %516 = vmatprep.subr.mxu0 0.0
    %517 = vmatpush1.msra.mxu0 0.0
    %518 = vmatprep.subr.mxu0 0.0
    %519 = vmatpush1.msra.mxu0 0.0
    %520 = vmatprep.subr.mxu0 0.0
    %521 = vmatpush1.msra.mxu0 0.0
    %522 = vmatprep.subr.mxu0 0.0
    %523 = vmatpush1.msra.mxu0 0.0
    %524 = vmatprep.subr.mxu0 0.0
    %525 = vmatpush1.msra.mxu0 0.0
    %526 = vmatprep.subr.mxu0 0.0
    %527 = vmatpush1.msra.mxu0 0.0
    %528 = vmatprep.subr.mxu0 0.0
    %529 = vmatpush1.msra.mxu0 0.0
    %530 = vmatprep.subr.mxu0 0.0
    %531 = vmatpush1.msra.mxu0 0.0
    %532 = vmatprep.subr.mxu0 0.0
    %533 = vmatpush1.msra.mxu0 0.0
    %534 = vmatprep.subr.mxu0 0.0
    %535 = vmatpush1.msra.mxu0 0.0
    %536 = vmatprep.subr.mxu0 0.0
    %537 = vmatpush1.msra.mxu0 0.0
    %538 = vmatprep.subr.mxu0 0.0
    %539 = vmatpush1.msra.mxu0 0.0
    %540 = vmatprep.subr.mxu0 0.0
    %541 = vmatpush1.msra.mxu0 0.0
    %542 = vmatprep.subr.mxu0 0.0
    %543 = vmatpush1.msra.mxu0 0.0
    %544 = vmatprep.subr.mxu0 0.0
    %545 = vmatpush1.msra.mxu0 0.0
    %546 = vmatprep.subr.mxu0 0.0
    %547 = vmatpush1.msra.mxu0 0.0
    %548 = vmatprep.subr.mxu0 0.0
    %549 = vmatpush1.msra.mxu0 0.0
    %550 = vmatprep.subr.mxu0 0.0
    %551 = vmatpush1.msra.mxu0 0.0
    %552 = vmatprep.subr.mxu0 0.0
    %553 = vmatpush1.msra.mxu0 0.0
    %554 = vmatprep.subr.mxu0 0.0
    %555 = vmatpush1.msra.mxu0 0.0
    %556 = vmatprep.subr.mxu0 0.0
    %557 = vmatpush1.msra.mxu0 0.0
    %558 = vmatprep.subr.mxu0 0.0
    %559 = vmatpush1.msra.mxu0 0.0
    %560 = vmatprep.subr.mxu0 0.0
    %561 = vmatpush1.msra.mxu0 0.0
    %562 = vmatprep.subr.mxu0 0.0
    %563 = vmatpush1.msra.mxu0 0.0
    %564 = vmatprep.subr.mxu0 0.0
    %565 = vmatpush1.msra.mxu0 0.0
    %566 = vmatprep.subr.mxu0 0.0
    %567 = vmatpush1.msra.mxu0 0.0
    %568 = vmatprep.mubr.f32.mxu0 0.0
    %569 = vmatmul.mubr.f32.gmra.mrb[0].mxu0 %v358
    %v570 = vpop.f32.mrb[0].mxu0
    %v571 = vadd.f32 0.0, %v570
    %v572 = vpop.f32.mrb[0].mxu0
    %573 = vdwg.mxu0
    %v574 = vadd.f32 %v503, %v571
    %v575 = vtanh.pop %v574
    %v577 = vsel %vm261, %v575, 0
    %579 = vmatprep.subr.mxu0 0.0
    %580 = vmatpush1.msra.mxu0 %v271
    %581 = vmatprep.subr.mxu0 0.0
    %582 = vmatpush1.msra.mxu0 %v272
    %583 = vmatprep.subr.mxu0 0.0
    %584 = vmatpush1.msra.mxu0 %v273
    %585 = vmatprep.subr.mxu0 0.0
    %586 = vmatpush1.msra.mxu0 %v274
    %587 = vmatprep.subr.mxu0 0.0
    %588 = vmatpush1.msra.mxu0 %v275
    %589 = vmatprep.subr.mxu0 0.0
    %590 = vmatpush1.msra.mxu0 0.0
    %591 = vmatprep.subr.mxu0 0.0
    %592 = vmatpush1.msra.mxu0 0.0
    %593 = vmatprep.subr.mxu0 0.0
    %594 = vmatpush1.msra.mxu0 0.0
    %595 = vmatprep.subr.mxu0 0.0
    %596 = vmatpush1.msra.mxu0 0.0
    %597 = vmatprep.subr.mxu0 0.0
    %598 = vmatpush1.msra.mxu0 0.0
    %599 = vmatprep.subr.mxu0 0.0
    %600 = vmatpush1.msra.mxu0 0.0
    %601 = vmatprep.subr.mxu0 0.0
    %602 = vmatpush1.msra.mxu0 0.0
    %603 = vmatprep.subr.mxu0 0.0
    %604 = vmatpush1.msra.mxu0 0.0
    %605 = vmatprep.subr.mxu0 0.0
    %606 = vmatpush1.msra.mxu0 0.0
    %607 = vmatprep.subr.mxu0 0.0
    %608 = vmatpush1.msra.mxu0 0.0
    %609 = vmatprep.subr.mxu0 0.0
    %610 = vmatpush1.msra.mxu0 0.0
    %611 = vmatprep.subr.mxu0 0.0
    %612 = vmatpush1.msra.mxu0 0.0
    %613 = vmatprep.subr.mxu0 0.0
    %614 = vmatpush1.msra.mxu0 0.0
    %615 = vmatprep.subr.mxu0 0.0
    %616 = vmatpush1.msra.mxu0 0.0
    %617 = vmatprep.subr.mxu0 0.0
    %618 = vmatpush1.msra.mxu0 0.0
    %619 = vmatprep.subr.mxu0 0.0
    %620 = vmatpush1.msra.mxu0 0.0
    %621 = vmatprep.subr.mxu0 0.0
    %622 = vmatpush1.msra.mxu0 0.0
    %623 = vmatprep.subr.mxu0 0.0
    %624 = vmatpush1.msra.mxu0 0.0
    %625 = vmatprep.subr.mxu0 0.0
    %626 = vmatpush1.msra.mxu0 0.0
    %627 = vmatprep.subr.mxu0 0.0
    %628 = vmatpush1.msra.mxu0 0.0
    %629 = vmatprep.subr.mxu0 0.0
    %630 = vmatpush1.msra.mxu0 0.0
    %631 = vmatprep.subr.mxu0 0.0
    %632 = vmatpush1.msra.mxu0 0.0
    %633 = vmatprep.subr.mxu0 0.0
    %634 = vmatpush1.msra.mxu0 0.0
    %635 = vmatprep.subr.mxu0 0.0
    %636 = vmatpush1.msra.mxu0 0.0
    %637 = vmatprep.subr.mxu0 0.0
    %638 = vmatpush1.msra.mxu0 0.0
    %639 = vmatprep.subr.mxu0 0.0
    %640 = vmatpush1.msra.mxu0 0.0
    %641 = vmatprep.subr.mxu0 0.0
    %642 = vmatpush1.msra.mxu0 0.0
    %643 = vmatprep.mubr.f32.mxu0 0.0
    %644 = vmatmul.mubr.f32.gmra.mrb[0].mxu0 %v577
    %v645 = vpop.f32.mrb[0].mxu0
    %v646 = vadd.f32 0.0, %v645
    %v647 = vpop.f32.mrb[0].mxu0
    %648 = vdwg.mxu0
    %649 = vst.msk [vmem:[#allocation3 + $0x1] sm:$0x1] %vm430, %v646
    %650 = vmatprep.subr.mxu0 0.0
    %651 = vmatpush1.msra.mxu0 %v276
    %652 = vmatprep.subr.mxu0 0.0
    %653 = vmatpush1.msra.mxu0 %v277
    %654 = vmatprep.subr.mxu0 0.0
    %655 = vmatpush1.msra.mxu0 %v278
    %656 = vmatprep.subr.mxu0 0.0
    %657 = vmatpush1.msra.mxu0 %v279
    %658 = vmatprep.subr.mxu0 0.0
    %659 = vmatpush1.msra.mxu0 %v280
    %660 = vmatprep.subr.mxu0 0.0
    %661 = vmatpush1.msra.mxu0 0.0
    %662 = vmatprep.subr.mxu0 0.0
    %663 = vmatpush1.msra.mxu0 0.0
    %664 = vmatprep.subr.mxu0 0.0
    %665 = vmatpush1.msra.mxu0 0.0
    %666 = vmatprep.subr.mxu0 0.0
    %667 = vmatpush1.msra.mxu0 0.0
    %668 = vmatprep.subr.mxu0 0.0
    %669 = vmatpush1.msra.mxu0 0.0
    %670 = vmatprep.subr.mxu0 0.0
    %671 = vmatpush1.msra.mxu0 0.0
    %672 = vmatprep.subr.mxu0 0.0
    %673 = vmatpush1.msra.mxu0 0.0
    %674 = vmatprep.subr.mxu0 0.0
    %675 = vmatpush1.msra.mxu0 0.0
    %676 = vmatprep.subr.mxu0 0.0
    %677 = vmatpush1.msra.mxu0 0.0
    %678 = vmatprep.subr.mxu0 0.0
    %679 = vmatpush1.msra.mxu0 0.0
    %680 = vmatprep.subr.mxu0 0.0
    %681 = vmatpush1.msra.mxu0 0.0
    %682 = vmatprep.subr.mxu0 0.0
    %683 = vmatpush1.msra.mxu0 0.0
    %684 = vmatprep.subr.mxu0 0.0
    %685 = vmatpush1.msra.mxu0 0.0
    %686 = vmatprep.subr.mxu0 0.0
    %687 = vmatpush1.msra.mxu0 0.0
    %688 = vmatprep.subr.mxu0 0.0
    %689 = vmatpush1.msra.mxu0 0.0
    %690 = vmatprep.subr.mxu0 0.0
    %691 = vmatpush1.msra.mxu0 0.0
    %692 = vmatprep.subr.mxu0 0.0
    %693 = vmatpush1.msra.mxu0 0.0
    %694 = vmatprep.subr.mxu0 0.0
    %695 = vmatpush1.msra.mxu0 0.0
    %696 = vmatprep.subr.mxu0 0.0
    %697 = vmatpush1.msra.mxu0 0.0
    %698 = vmatprep.subr.mxu0 0.0
    %699 = vmatpush1.msra.mxu0 0.0
    %700 = vmatprep.subr.mxu0 0.0
    %701 = vmatpush1.msra.mxu0 0.0
    %702 = vmatprep.subr.mxu0 0.0
    %703 = vmatpush1.msra.mxu0 0.0
    %704 = vmatprep.subr.mxu0 0.0
    %705 = vmatpush1.msra.mxu0 0.0
    %706 = vmatprep.subr.mxu0 0.0
    %707 = vmatpush1.msra.mxu0 0.0
    %708 = vmatprep.subr.mxu0 0.0
    %709 = vmatpush1.msra.mxu0 0.0
    %710 = vmatprep.subr.mxu0 0.0
    %711 = vmatpush1.msra.mxu0 0.0
    %712 = vmatprep.subr.mxu0 0.0
    %713 = vmatpush1.msra.mxu0 0.0
    %714 = vmatprep.mubr.f32.mxu0 0.0
    %715 = vmatmul.mubr.f32.gmra.mrb[0].mxu0 %v577
    %v716 = vpop.f32.mrb[0].mxu0
    %v717 = vadd.f32 0.0, %v716
    %v718 = vpop.f32.mrb[0].mxu0
    %719 = vdwg.mxu0
    %720 = vst.msk [vmem:[#allocation4 + $0x12] sm:$0x1] %vm430, %v717
    %v721 = vld [vmem:[#allocation2 + $0x2] sm:$0x1]
    %722 = vmatprep.subr.mxu0 0.0
    %723 = vmatpush1.msra.mxu0 %v266
    %724 = vmatprep.subr.mxu0 0.0
    %725 = vmatpush1.msra.mxu0 %v267
    %726 = vmatprep.subr.mxu0 0.0
    %727 = vmatpush1.msra.mxu0 %v268
    %728 = vmatprep.subr.mxu0 0.0
    %729 = vmatpush1.msra.mxu0 %v269
    %730 = vmatprep.subr.mxu0 0.0
    %731 = vmatpush1.msra.mxu0 %v270
    %732 = vmatprep.subr.mxu0 0.0
    %733 = vmatpush1.msra.mxu0 0.0
    %734 = vmatprep.subr.mxu0 0.0
    %735 = vmatpush1.msra.mxu0 0.0
    %736 = vmatprep.subr.mxu0 0.0
    %737 = vmatpush1.msra.mxu0 0.0
    %738 = vmatprep.subr.mxu0 0.0
    %739 = vmatpush1.msra.mxu0 0.0
    %740 = vmatprep.subr.mxu0 0.0
    %741 = vmatpush1.msra.mxu0 0.0
    %742 = vmatprep.subr.mxu0 0.0
    %743 = vmatpush1.msra.mxu0 0.0
    %744 = vmatprep.subr.mxu0 0.0
    %745 = vmatpush1.msra.mxu0 0.0
    %746 = vmatprep.subr.mxu0 0.0
    %747 = vmatpush1.msra.mxu0 0.0
    %748 = vmatprep.subr.mxu0 0.0
    %749 = vmatpush1.msra.mxu0 0.0
    %750 = vmatprep.subr.mxu0 0.0
    %751 = vmatpush1.msra.mxu0 0.0
    %752 = vmatprep.subr.mxu0 0.0
    %753 = vmatpush1.msra.mxu0 0.0
    %754 = vmatprep.subr.mxu0 0.0
    %755 = vmatpush1.msra.mxu0 0.0
    %756 = vmatprep.subr.mxu0 0.0
    %757 = vmatpush1.msra.mxu0 0.0
    %758 = vmatprep.subr.mxu0 0.0
    %759 = vmatpush1.msra.mxu0 0.0
    %760 = vmatprep.subr.mxu0 0.0
    %761 = vmatpush1.msra.mxu0 0.0
    %762 = vmatprep.subr.mxu0 0.0
    %763 = vmatpush1.msra.mxu0 0.0
    %764 = vmatprep.subr.mxu0 0.0
    %765 = vmatpush1.msra.mxu0 0.0
    %766 = vmatprep.subr.mxu0 0.0
    %767 = vmatpush1.msra.mxu0 0.0
    %768 = vmatprep.subr.mxu0 0.0
    %769 = vmatpush1.msra.mxu0 0.0
    %770 = vmatprep.subr.mxu0 0.0
    %771 = vmatpush1.msra.mxu0 0.0
    %772 = vmatprep.subr.mxu0 0.0
    %773 = vmatpush1.msra.mxu0 0.0
    %774 = vmatprep.subr.mxu0 0.0
    %775 = vmatpush1.msra.mxu0 0.0
    %776 = vmatprep.subr.mxu0 0.0
    %777 = vmatpush1.msra.mxu0 0.0
    %778 = vmatprep.subr.mxu0 0.0
    %779 = vmatpush1.msra.mxu0 0.0
    %780 = vmatprep.subr.mxu0 0.0
    %781 = vmatpush1.msra.mxu0 0.0
    %782 = vmatprep.subr.mxu0 0.0
    %783 = vmatpush1.msra.mxu0 0.0
    %784 = vmatprep.subr.mxu0 0.0
    %785 = vmatpush1.msra.mxu0 0.0
    %786 = vmatprep.mubr.f32.mxu0 0.0
    %787 = vmatmul.mubr.f32.gmra.mrb[0].mxu0 %v577
    %v788 = vpop.f32.mrb[0].mxu0
    %v789 = vadd.f32 0.0, %v788
    %v790 = vpop.f32.mrb[0].mxu0
    %791 = vdwg.mxu0
    %v792 = vadd.f32 %v721, %v789
    %v793 = vtanh.pop %v792
    %v795 = vsel %vm261, %v793, 0
    %797 = vmatprep.subr.mxu0 0.0
    %798 = vmatpush1.msra.mxu0 %v271
    %799 = vmatprep.subr.mxu0 0.0
    %800 = vmatpush1.msra.mxu0 %v272
    %801 = vmatprep.subr.mxu0 0.0
    %802 = vmatpush1.msra.mxu0 %v273
    %803 = vmatprep.subr.mxu0 0.0
    %804 = vmatpush1.msra.mxu0 %v274
    %805 = vmatprep.subr.mxu0 0.0
    %806 = vmatpush1.msra.mxu0 %v275
    %807 = vmatprep.subr.mxu0 0.0
    %808 = vmatpush1.msra.mxu0 0.0
    %809 = vmatprep.subr.mxu0 0.0
    %810 = vmatpush1.msra.mxu0 0.0
    %811 = vmatprep.subr.mxu0 0.0
    %812 = vmatpush1.msra.mxu0 0.0
    %813 = vmatprep.subr.mxu0 0.0
    %814 = vmatpush1.msra.mxu0 0.0
    %815 = vmatprep.subr.mxu0 0.0
    %816 = vmatpush1.msra.mxu0 0.0
    %817 = vmatprep.subr.mxu0 0.0
    %818 = vmatpush1.msra.mxu0 0.0
    %819 = vmatprep.subr.mxu0 0.0
    %820 = vmatpush1.msra.mxu0 0.0
    %821 = vmatprep.subr.mxu0 0.0
    %822 = vmatpush1.msra.mxu0 0.0
    %823 = vmatprep.subr.mxu0 0.0
    %824 = vmatpush1.msra.mxu0 0.0
    %825 = vmatprep.subr.mxu0 0.0
    %826 = vmatpush1.msra.mxu0 0.0
    %827 = vmatprep.subr.mxu0 0.0
    %828 = vmatpush1.msra.mxu0 0.0
    %829 = vmatprep.subr.mxu0 0.0
    %830 = vmatpush1.msra.mxu0 0.0
    %831 = vmatprep.subr.mxu0 0.0
    %832 = vmatpush1.msra.mxu0 0.0
    %833 = vmatprep.subr.mxu0 0.0
    %834 = vmatpush1.msra.mxu0 0.0
    %835 = vmatprep.subr.mxu0 0.0
    %836 = vmatpush1.msra.mxu0 0.0
    %837 = vmatprep.subr.mxu0 0.0
    %838 = vmatpush1.msra.mxu0 0.0
    %839 = vmatprep.subr.mxu0 0.0
    %840 = vmatpush1.msra.mxu0 0.0
    %841 = vmatprep.subr.mxu0 0.0
    %842 = vmatpush1.msra.mxu0 0.0
    %843 = vmatprep.subr.mxu0 0.0
    %844 = vmatpush1.msra.mxu0 0.0
    %845 = vmatprep.subr.mxu0 0.0
    %846 = vmatpush1.msra.mxu0 0.0
    %847 = vmatprep.subr.mxu0 0.0
    %848 = vmatpush1.msra.mxu0 0.0
    %849 = vmatprep.subr.mxu0 0.0
    %850 = vmatpush1.msra.mxu0 0.0
    %851 = vmatprep.subr.mxu0 0.0
    %852 = vmatpush1.msra.mxu0 0.0
    %853 = vmatprep.subr.mxu0 0.0
    %854 = vmatpush1.msra.mxu0 0.0
    %855 = vmatprep.subr.mxu0 0.0
    %856 = vmatpush1.msra.mxu0 0.0
    %857 = vmatprep.subr.mxu0 0.0
    %858 = vmatpush1.msra.mxu0 0.0
    %859 = vmatprep.subr.mxu0 0.0
    %860 = vmatpush1.msra.mxu0 0.0
    %861 = vmatprep.mubr.f32.mxu0 0.0
    %862 = vmatmul.mubr.f32.gmra.mrb[0].mxu0 %v795
    %v863 = vpop.f32.mrb[0].mxu0
    %v864 = vadd.f32 0.0, %v863
    %v865 = vpop.f32.mrb[0].mxu0
    %866 = vdwg.mxu0
    %867 = vst.msk [vmem:[#allocation3 + $0x2] sm:$0x1] %vm430, %v864
    %868 = vmatprep.subr.mxu0 0.0
    %869 = vmatpush1.msra.mxu0 %v276
    %870 = vmatprep.subr.mxu0 0.0
    %871 = vmatpush1.msra.mxu0 %v277
    %872 = vmatprep.subr.mxu0 0.0
    %873 = vmatpush1.msra.mxu0 %v278
    %874 = vmatprep.subr.mxu0 0.0
    %875 = vmatpush1.msra.mxu0 %v279
    %876 = vmatprep.subr.mxu0 0.0
    %877 = vmatpush1.msra.mxu0 %v280
    %878 = vmatprep.subr.mxu0 0.0
    %879 = vmatpush1.msra.mxu0 0.0
    %880 = vmatprep.subr.mxu0 0.0
    %881 = vmatpush1.msra.mxu0 0.0
    %882 = vmatprep.subr.mxu0 0.0
    %883 = vmatpush1.msra.mxu0 0.0
    %884 = vmatprep.subr.mxu0 0.0
    %885 = vmatpush1.msra.mxu0 0.0
    %886 = vmatprep.subr.mxu0 0.0
    %887 = vmatpush1.msra.mxu0 0.0
    %888 = vmatprep.subr.mxu0 0.0
    %889 = vmatpush1.msra.mxu0 0.0
    %890 = vmatprep.subr.mxu0 0.0
    %891 = vmatpush1.msra.mxu0 0.0
    %892 = vmatprep.subr.mxu0 0.0
    %893 = vmatpush1.msra.mxu0 0.0
    %894 = vmatprep.subr.mxu0 0.0
    %895 = vmatpush1.msra.mxu0 0.0
    %896 = vmatprep.subr.mxu0 0.0
    %897 = vmatpush1.msra.mxu0 0.0
    %898 = vmatprep.subr.mxu0 0.0
    %899 = vmatpush1.msra.mxu0 0.0
    %900 = vmatprep.subr.mxu0 0.0
    %901 = vmatpush1.msra.mxu0 0.0
    %902 = vmatprep.subr.mxu0 0.0
    %903 = vmatpush1.msra.mxu0 0.0
    %904 = vmatprep.subr.mxu0 0.0
    %905 = vmatpush1.msra.mxu0 0.0
    %906 = vmatprep.subr.mxu0 0.0
    %907 = vmatpush1.msra.mxu0 0.0
    %908 = vmatprep.subr.mxu0 0.0
    %909 = vmatpush1.msra.mxu0 0.0
    %910 = vmatprep.subr.mxu0 0.0
    %911 = vmatpush1.msra.mxu0 0.0
    %912 = vmatprep.subr.mxu0 0.0
    %913 = vmatpush1.msra.mxu0 0.0
    %914 = vmatprep.subr.mxu0 0.0
    %915 = vmatpush1.msra.mxu0 0.0
    %916 = vmatprep.subr.mxu0 0.0
    %917 = vmatpush1.msra.mxu0 0.0
    %918 = vmatprep.subr.mxu0 0.0
    %919 = vmatpush1.msra.mxu0 0.0
    %920 = vmatprep.subr.mxu0 0.0
    %921 = vmatpush1.msra.mxu0 0.0
    %922 = vmatprep.subr.mxu0 0.0
    %923 = vmatpush1.msra.mxu0 0.0
    %924 = vmatprep.subr.mxu0 0.0
    %925 = vmatpush1.msra.mxu0 0.0
    %926 = vmatprep.subr.mxu0 0.0
    %927 = vmatpush1.msra.mxu0 0.0
    %928 = vmatprep.subr.mxu0 0.0
    %929 = vmatpush1.msra.mxu0 0.0
    %930 = vmatprep.subr.mxu0 0.0
    %931 = vmatpush1.msra.mxu0 0.0
    %932 = vmatprep.mubr.f32.mxu0 0.0
    %933 = vmatmul.mubr.f32.gmra.mrb[0].mxu0 %v795
    %v934 = vpop.f32.mrb[0].mxu0
    %v935 = vadd.f32 0.0, %v934
    %v936 = vpop.f32.mrb[0].mxu0
    %937 = vdwg.mxu0
    %938 = vst.msk [vmem:[#allocation4 + $0x11] sm:$0x1] %vm430, %v935
    %v939 = vld [vmem:[#allocation2 + $0x3] sm:$0x1]
    %940 = vmatprep.subr.mxu0 0.0
    %941 = vmatpush1.msra.mxu0 %v266
    %942 = vmatprep.subr.mxu0 0.0
    %943 = vmatpush1.msra.mxu0 %v267
    %944 = vmatprep.subr.mxu0 0.0
    %945 = vmatpush1.msra.mxu0 %v268
    %946 = vmatprep.subr.mxu0 0.0
    %947 = vmatpush1.msra.mxu0 %v269
    %948 = vmatprep.subr.mxu0 0.0
    %949 = vmatpush1.msra.mxu0 %v270
    %950 = vmatprep.subr.mxu0 0.0
    %951 = vmatpush1.msra.mxu0 0.0
    %952 = vmatprep.subr.mxu0 0.0
    %953 = vmatpush1.msra.mxu0 0.0
    %954 = vmatprep.subr.mxu0 0.0
    %955 = vmatpush1.msra.mxu0 0.0
    %956 = vmatprep.subr.mxu0 0.0
    %957 = vmatpush1.msra.mxu0 0.0
    %958 = vmatprep.subr.mxu0 0.0
    %959 = vmatpush1.msra.mxu0 0.0
    %960 = vmatprep.subr.mxu0 0.0
    %961 = vmatpush1.msra.mxu0 0.0
    %962 = vmatprep.subr.mxu0 0.0
    %963 = vmatpush1.msra.mxu0 0.0
    %964 = vmatprep.subr.mxu0 0.0
    %965 = vmatpush1.msra.mxu0 0.0
    %966 = vmatprep.subr.mxu0 0.0
    %967 = vmatpush1.msra.mxu0 0.0
    %968 = vmatprep.subr.mxu0 0.0
    %969 = vmatpush1.msra.mxu0 0.0
    %970 = vmatprep.subr.mxu0 0.0
    %971 = vmatpush1.msra.mxu0 0.0
    %972 = vmatprep.subr.mxu0 0.0
    %973 = vmatpush1.msra.mxu0 0.0
    %974 = vmatprep.subr.mxu0 0.0
    %975 = vmatpush1.msra.mxu0 0.0
    %976 = vmatprep.subr.mxu0 0.0
    %977 = vmatpush1.msra.mxu0 0.0
    %978 = vmatprep.subr.mxu0 0.0
    %979 = vmatpush1.msra.mxu0 0.0
    %980 = vmatprep.subr.mxu0 0.0
    %981 = vmatpush1.msra.mxu0 0.0
    %982 = vmatprep.subr.mxu0 0.0
    %983 = vmatpush1.msra.mxu0 0.0
    %984 = vmatprep.subr.mxu0 0.0
    %985 = vmatpush1.msra.mxu0 0.0
    %986 = vmatprep.subr.mxu0 0.0
    %987 = vmatpush1.msra.mxu0 0.0
    %988 = vmatprep.subr.mxu0 0.0
    %989 = vmatpush1.msra.mxu0 0.0
    %990 = vmatprep.subr.mxu0 0.0
    %991 = vmatpush1.msra.mxu0 0.0
    %992 = vmatprep.subr.mxu0 0.0
    %993 = vmatpush1.msra.mxu0 0.0
    %994 = vmatprep.subr.mxu0 0.0
    %995 = vmatpush1.msra.mxu0 0.0
    %996 = vmatprep.subr.mxu0 0.0
    %997 = vmatpush1.msra.mxu0 0.0
    %998 = vmatprep.subr.mxu0 0.0
    %999 = vmatpush1.msra.mxu0 0.0
    %1000 = vmatprep.subr.mxu0 0.0
    %1001 = vmatpush1.msra.mxu0 0.0
    %1002 = vmatprep.subr.mxu0 0.0
    %1003 = vmatpush1.msra.mxu0 0.0
    %1004 = vmatprep.mubr.f32.mxu0 0.0
    %1005 = vmatmul.mubr.f32.gmra.mrb[0].mxu0 %v795
    %v1006 = vpop.f32.mrb[0].mxu0
    %v1007 = vadd.f32 0.0, %v1006
    %v1008 = vpop.f32.mrb[0].mxu0
    %1009 = vdwg.mxu0
    %v1010 = vadd.f32 %v939, %v1007
    %v1011 = vtanh.pop %v1010
    %v1013 = vsel %vm261, %v1011, 0
    %1015 = vmatprep.subr.mxu0 0.0
    %1016 = vmatpush1.msra.mxu0 %v271
    %1017 = vmatprep.subr.mxu0 0.0
    %1018 = vmatpush1.msra.mxu0 %v272
    %1019 = vmatprep.subr.mxu0 0.0
    %1020 = vmatpush1.msra.mxu0 %v273
    %1021 = vmatprep.subr.mxu0 0.0
    %1022 = vmatpush1.msra.mxu0 %v274
    %1023 = vmatprep.subr.mxu0 0.0
    %1024 = vmatpush1.msra.mxu0 %v275
    %1025 = vmatprep.subr.mxu0 0.0
    %1026 = vmatpush1.msra.mxu0 0.0
    %1027 = vmatprep.subr.mxu0 0.0
    %1028 = vmatpush1.msra.mxu0 0.0
    %1029 = vmatprep.subr.mxu0 0.0
    %1030 = vmatpush1.msra.mxu0 0.0
    %1031 = vmatprep.subr.mxu0 0.0
    %1032 = vmatpush1.msra.mxu0 0.0
    %1033 = vmatprep.subr.mxu0 0.0
    %1034 = vmatpush1.msra.mxu0 0.0
    %1035 = vmatprep.subr.mxu0 0.0
    %1036 = vmatpush1.msra.mxu0 0.0
    %1037 = vmatprep.subr.mxu0 0.0
    %1038 = vmatpush1.msra.mxu0 0.0
    %1039 = vmatprep.subr.mxu0 0.0
    %1040 = vmatpush1.msra.mxu0 0.0
    %1041 = vmatprep.subr.mxu0 0.0
    %1042 = vmatpush1.msra.mxu0 0.0
    %1043 = vmatprep.subr.mxu0 0.0
    %1044 = vmatpush1.msra.mxu0 0.0
    %1045 = vmatprep.subr.mxu0 0.0
    %1046 = vmatpush1.msra.mxu0 0.0
    %1047 = vmatprep.subr.mxu0 0.0
    %1048 = vmatpush1.msra.mxu0 0.0
    %1049 = vmatprep.subr.mxu0 0.0
    %1050 = vmatpush1.msra.mxu0 0.0
    %1051 = vmatprep.subr.mxu0 0.0
    %1052 = vmatpush1.msra.mxu0 0.0
    %1053 = vmatprep.subr.mxu0 0.0
    %1054 = vmatpush1.msra.mxu0 0.0
    %1055 = vmatprep.subr.mxu0 0.0
    %1056 = vmatpush1.msra.mxu0 0.0
    %1057 = vmatprep.subr.mxu0 0.0
    %1058 = vmatpush1.msra.mxu0 0.0
    %1059 = vmatprep.subr.mxu0 0.0
    %1060 = vmatpush1.msra.mxu0 0.0
    %1061 = vmatprep.subr.mxu0 0.0
    %1062 = vmatpush1.msra.mxu0 0.0
    %1063 = vmatprep.subr.mxu0 0.0
    %1064 = vmatpush1.msra.mxu0 0.0
    %1065 = vmatprep.subr.mxu0 0.0
    %1066 = vmatpush1.msra.mxu0 0.0
    %1067 = vmatprep.subr.mxu0 0.0
    %1068 = vmatpush1.msra.mxu0 0.0
    %1069 = vmatprep.subr.mxu0 0.0
    %1070 = vmatpush1.msra.mxu0 0.0
    %1071 = vmatprep.subr.mxu0 0.0
    %1072 = vmatpush1.msra.mxu0 0.0
    %1073 = vmatprep.subr.mxu0 0.0
    %1074 = vmatpush1.msra.mxu0 0.0
    %1075 = vmatprep.subr.mxu0 0.0
    %1076 = vmatpush1.msra.mxu0 0.0
    %1077 = vmatprep.subr.mxu0 0.0
    %1078 = vmatpush1.msra.mxu0 0.0
    %1079 = vmatprep.mubr.f32.mxu0 0.0
    %1080 = vmatmul.mubr.f32.gmra.mrb[0].mxu0 %v1013
    %v1081 = vpop.f32.mrb[0].mxu0
    %v1082 = vadd.f32 0.0, %v1081
    %v1083 = vpop.f32.mrb[0].mxu0
    %1084 = vdwg.mxu0
    %1085 = vst.msk [vmem:[#allocation3 + $0x3] sm:$0x1] %vm430, %v1082
    %1086 = vmatprep.subr.mxu0 0.0
    %1087 = vmatpush1.msra.mxu0 %v276
    %1088 = vmatprep.subr.mxu0 0.0
    %1089 = vmatpush1.msra.mxu0 %v277
    %1090 = vmatprep.subr.mxu0 0.0
    %1091 = vmatpush1.msra.mxu0 %v278
    %1092 = vmatprep.subr.mxu0 0.0
    %1093 = vmatpush1.msra.mxu0 %v279
    %1094 = vmatprep.subr.mxu0 0.0
    %1095 = vmatpush1.msra.mxu0 %v280
    %1096 = vmatprep.subr.mxu0 0.0
    %1097 = vmatpush1.msra.mxu0 0.0
    %1098 = vmatprep.subr.mxu0 0.0
    %1099 = vmatpush1.msra.mxu0 0.0
    %1100 = vmatprep.subr.mxu0 0.0
    %1101 = vmatpush1.msra.mxu0 0.0
    %1102 = vmatprep.subr.mxu0 0.0
    %1103 = vmatpush1.msra.mxu0 0.0
    %1104 = vmatprep.subr.mxu0 0.0
    %1105 = vmatpush1.msra.mxu0 0.0
    %1106 = vmatprep.subr.mxu0 0.0
    %1107 = vmatpush1.msra.mxu0 0.0
    %1108 = vmatprep.subr.mxu0 0.0
    %1109 = vmatpush1.msra.mxu0 0.0
    %1110 = vmatprep.subr.mxu0 0.0
    %1111 = vmatpush1.msra.mxu0 0.0
    %1112 = vmatprep.subr.mxu0 0.0
    %1113 = vmatpush1.msra.mxu0 0.0
    %1114 = vmatprep.subr.mxu0 0.0
    %1115 = vmatpush1.msra.mxu0 0.0
    %1116 = vmatprep.subr.mxu0 0.0
    %1117 = vmatpush1.msra.mxu0 0.0
    %1118 = vmatprep.subr.mxu0 0.0
    %1119 = vmatpush1.msra.mxu0 0.0
    %1120 = vmatprep.subr.mxu0 0.0
    %1121 = vmatpush1.msra.mxu0 0.0
    %1122 = vmatprep.subr.mxu0 0.0
    %1123 = vmatpush1.msra.mxu0 0.0
    %1124 = vmatprep.subr.mxu0 0.0
    %1125 = vmatpush1.msra.mxu0 0.0
    %1126 = vmatprep.subr.mxu0 0.0
    %1127 = vmatpush1.msra.mxu0 0.0
    %1128 = vmatprep.subr.mxu0 0.0
    %1129 = vmatpush1.msra.mxu0 0.0
    %1130 = vmatprep.subr.mxu0 0.0
    %1131 = vmatpush1.msra.mxu0 0.0
    %1132 = vmatprep.subr.mxu0 0.0
    %1133 = vmatpush1.msra.mxu0 0.0
    %1134 = vmatprep.subr.mxu0 0.0
    %1135 = vmatpush1.msra.mxu0 0.0
    %1136 = vmatprep.subr.mxu0 0.0
    %1137 = vmatpush1.msra.mxu0 0.0
    %1138 = vmatprep.subr.mxu0 0.0
    %1139 = vmatpush1.msra.mxu0 0.0
    %1140 = vmatprep.subr.mxu0 0.0
    %1141 = vmatpush1.msra.mxu0 0.0
    %1142 = vmatprep.subr.mxu0 0.0
    %1143 = vmatpush1.msra.mxu0 0.0
    %1144 = vmatprep.subr.mxu0 0.0
    %1145 = vmatpush1.msra.mxu0 0.0
    %1146 = vmatprep.subr.mxu0 0.0
    %1147 = vmatpush1.msra.mxu0 0.0
    %1148 = vmatprep.subr.mxu0 0.0
    %1149 = vmatpush1.msra.mxu0 0.0
    %1150 = vmatprep.mubr.f32.mxu0 0.0
    %1151 = vmatmul.mubr.f32.gmra.mrb[0].mxu0 %v1013
    %v1152 = vpop.f32.mrb[0].mxu0
    %v1153 = vadd.f32 0.0, %v1152
    %v1154 = vpop.f32.mrb[0].mxu0
    %1155 = vdwg.mxu0
    %1156 = vst.msk [vmem:[#allocation4 + $0x10] sm:$0x1] %vm430, %v1153
    %v1157 = vld [vmem:[#allocation2 + $0x4] sm:$0x1]
    %1158 = vmatprep.subr.mxu0 0.0
    %1159 = vmatpush1.msra.mxu0 %v266
    %1160 = vmatprep.subr.mxu0 0.0
    %1161 = vmatpush1.msra.mxu0 %v267
    %1162 = vmatprep.subr.mxu0 0.0
    %1163 = vmatpush1.msra.mxu0 %v268
    %1164 = vmatprep.subr.mxu0 0.0
    %1165 = vmatpush1.msra.mxu0 %v269
    %1166 = vmatprep.subr.mxu0 0.0
    %1167 = vmatpush1.msra.mxu0 %v270
    %1168 = vmatprep.subr.mxu0 0.0
    %1169 = vmatpush1.msra.mxu0 0.0
    %1170 = vmatprep.subr.mxu0 0.0
    %1171 = vmatpush1.msra.mxu0 0.0
    %1172 = vmatprep.subr.mxu0 0.0
    %1173 = vmatpush1.msra.mxu0 0.0
    %1174 = vmatprep.subr.mxu0 0.0
    %1175 = vmatpush1.msra.mxu0 0.0
    %1176 = vmatprep.subr.mxu0 0.0
    %1177 = vmatpush1.msra.mxu0 0.0
    %1178 = vmatprep.subr.mxu0 0.0
    %1179 = vmatpush1.msra.mxu0 0.0
    %1180 = vmatprep.subr.mxu0 0.0
    %1181 = vmatpush1.msra.mxu0 0.0
    %1182 = vmatprep.subr.mxu0 0.0
    %1183 = vmatpush1.msra.mxu0 0.0
    %1184 = vmatprep.subr.mxu0 0.0
    %1185 = vmatpush1.msra.mxu0 0.0
    %1186 = vmatprep.subr.mxu0 0.0
    %1187 = vmatpush1.msra.mxu0 0.0
    %1188 = vmatprep.subr.mxu0 0.0
    %1189 = vmatpush1.msra.mxu0 0.0
    %1190 = vmatprep.subr.mxu0 0.0
    %1191 = vmatpush1.msra.mxu0 0.0
    %1192 = vmatprep.subr.mxu0 0.0
    %1193 = vmatpush1.msra.mxu0 0.0
    %1194 = vmatprep.subr.mxu0 0.0
    %1195 = vmatpush1.msra.mxu0 0.0
    %1196 = vmatprep.subr.mxu0 0.0
    %1197 = vmatpush1.msra.mxu0 0.0
    %1198 = vmatprep.subr.mxu0 0.0
    %1199 = vmatpush1.msra.mxu0 0.0
    %1200 = vmatprep.subr.mxu0 0.0
    %1201 = vmatpush1.msra.mxu0 0.0
    %1202 = vmatprep.subr.mxu0 0.0
    %1203 = vmatpush1.msra.mxu0 0.0
    %1204 = vmatprep.subr.mxu0 0.0
    %1205 = vmatpush1.msra.mxu0 0.0
    %1206 = vmatprep.subr.mxu0 0.0
    %1207 = vmatpush1.msra.mxu0 0.0
    %1208 = vmatprep.subr.mxu0 0.0
    %1209 = vmatpush1.msra.mxu0 0.0
    %1210 = vmatprep.subr.mxu0 0.0
    %1211 = vmatpush1.msra.mxu0 0.0
    %1212 = vmatprep.subr.mxu0 0.0
    %1213 = vmatpush1.msra.mxu0 0.0
    %1214 = vmatprep.subr.mxu0 0.0
    %1215 = vmatpush1.msra.mxu0 0.0
    %1216 = vmatprep.subr.mxu0 0.0
    %1217 = vmatpush1.msra.mxu0 0.0
    %1218 = vmatprep.subr.mxu0 0.0
    %1219 = vmatpush1.msra.mxu0 0.0
    %1220 = vmatprep.subr.mxu0 0.0
    %1221 = vmatpush1.msra.mxu0 0.0
    %1222 = vmatprep.mubr.f32.mxu0 0.0
    %1223 = vmatmul.mubr.f32.gmra.mrb[0].mxu0 %v1013
    %v1224 = vpop.f32.mrb[0].mxu0
    %v1225 = vadd.f32 0.0, %v1224
    %v1226 = vpop.f32.mrb[0].mxu0
    %1227 = vdwg.mxu0
    %v1228 = vadd.f32 %v1157, %v1225
    %v1229 = vtanh.pop %v1228
    %v1231 = vsel %vm261, %v1229, 0
    %1233 = vmatprep.subr.mxu0 0.0
    %1234 = vmatpush1.msra.mxu0 %v271
    %1235 = vmatprep.subr.mxu0 0.0
    %1236 = vmatpush1.msra.mxu0 %v272
    %1237 = vmatprep.subr.mxu0 0.0
    %1238 = vmatpush1.msra.mxu0 %v273
    %1239 = vmatprep.subr.mxu0 0.0
    %1240 = vmatpush1.msra.mxu0 %v274
    %1241 = vmatprep.subr.mxu0 0.0
    %1242 = vmatpush1.msra.mxu0 %v275
    %1243 = vmatprep.subr.mxu0 0.0
    %1244 = vmatpush1.msra.mxu0 0.0
    %1245 = vmatprep.subr.mxu0 0.0
    %1246 = vmatpush1.msra.mxu0 0.0
    %1247 = vmatprep.subr.mxu0 0.0
    %1248 = vmatpush1.msra.mxu0 0.0
    %1249 = vmatprep.subr.mxu0 0.0
    %1250 = vmatpush1.msra.mxu0 0.0
    %1251 = vmatprep.subr.mxu0 0.0
    %1252 = vmatpush1.msra.mxu0 0.0
    %1253 = vmatprep.subr.mxu0 0.0
    %1254 = vmatpush1.msra.mxu0 0.0
    %1255 = vmatprep.subr.mxu0 0.0
    %1256 = vmatpush1.msra.mxu0 0.0
    %1257 = vmatprep.subr.mxu0 0.0
    %1258 = vmatpush1.msra.mxu0 0.0
    %1259 = vmatprep.subr.mxu0 0.0
    %1260 = vmatpush1.msra.mxu0 0.0
    %1261 = vmatprep.subr.mxu0 0.0
    %1262 = vmatpush1.msra.mxu0 0.0
    %1263 = vmatprep.subr.mxu0 0.0
    %1264 = vmatpush1.msra.mxu0 0.0
    %1265 = vmatprep.subr.mxu0 0.0
    %1266 = vmatpush1.msra.mxu0 0.0
    %1267 = vmatprep.subr.mxu0 0.0
    %1268 = vmatpush1.msra.mxu0 0.0
    %1269 = vmatprep.subr.mxu0 0.0
    %1270 = vmatpush1.msra.mxu0 0.0
    %1271 = vmatprep.subr.mxu0 0.0
    %1272 = vmatpush1.msra.mxu0 0.0
    %1273 = vmatprep.subr.mxu0 0.0
    %1274 = vmatpush1.msra.mxu0 0.0
    %1275 = vmatprep.subr.mxu0 0.0
    %1276 = vmatpush1.msra.mxu0 0.0
    %1277 = vmatprep.subr.mxu0 0.0
    %1278 = vmatpush1.msra.mxu0 0.0
    %1279 = vmatprep.subr.mxu0 0.0
    %1280 = vmatpush1.msra.mxu0 0.0
    %1281 = vmatprep.subr.mxu0 0.0
    %1282 = vmatpush1.msra.mxu0 0.0
    %1283 = vmatprep.subr.mxu0 0.0
    %1284 = vmatpush1.msra.mxu0 0.0
    %1285 = vmatprep.subr.mxu0 0.0
    %1286 = vmatpush1.msra.mxu0 0.0
    %1287 = vmatprep.subr.mxu0 0.0
    %1288 = vmatpush1.msra.mxu0 0.0
    %1289 = vmatprep.subr.mxu0 0.0
    %1290 = vmatpush1.msra.mxu0 0.0
    %1291 = vmatprep.subr.mxu0 0.0
    %1292 = vmatpush1.msra.mxu0 0.0
    %1293 = vmatprep.subr.mxu0 0.0
    %1294 = vmatpush1.msra.mxu0 0.0
    %1295 = vmatprep.subr.mxu0 0.0
    %1296 = vmatpush1.msra.mxu0 0.0
    %1297 = vmatprep.mubr.f32.mxu0 0.0
    %1298 = vmatmul.mubr.f32.gmra.mrb[0].mxu0 %v1231
    %v1299 = vpop.f32.mrb[0].mxu0
    %v1300 = vadd.f32 0.0, %v1299
    %v1301 = vpop.f32.mrb[0].mxu0
    %1302 = vdwg.mxu0
    %1303 = vst.msk [vmem:[#allocation3 + $0x4] sm:$0x1] %vm430, %v1300
    %1304 = vmatprep.subr.mxu0 0.0
    %1305 = vmatpush1.msra.mxu0 %v276
    %1306 = vmatprep.subr.mxu0 0.0
    %1307 = vmatpush1.msra.mxu0 %v277
    %1308 = vmatprep.subr.mxu0 0.0
    %1309 = vmatpush1.msra.mxu0 %v278
    %1310 = vmatprep.subr.mxu0 0.0
    %1311 = vmatpush1.msra.mxu0 %v279
    %1312 = vmatprep.subr.mxu0 0.0
    %1313 = vmatpush1.msra.mxu0 %v280
    %1314 = vmatprep.subr.mxu0 0.0
    %1315 = vmatpush1.msra.mxu0 0.0
    %1316 = vmatprep.subr.mxu0 0.0
    %1317 = vmatpush1.msra.mxu0 0.0
    %1318 = vmatprep.subr.mxu0 0.0
    %1319 = vmatpush1.msra.mxu0 0.0
    %1320 = vmatprep.subr.mxu0 0.0
    %1321 = vmatpush1.msra.mxu0 0.0
    %1322 = vmatprep.subr.mxu0 0.0
    %1323 = vmatpush1.msra.mxu0 0.0
    %1324 = vmatprep.subr.mxu0 0.0
    %1325 = vmatpush1.msra.mxu0 0.0
    %1326 = vmatprep.subr.mxu0 0.0
    %1327 = vmatpush1.msra.mxu0 0.0
    %1328 = vmatprep.subr.mxu0 0.0
    %1329 = vmatpush1.msra.mxu0 0.0
    %1330 = vmatprep.subr.mxu0 0.0
    %1331 = vmatpush1.msra.mxu0 0.0
    %1332 = vmatprep.subr.mxu0 0.0
    %1333 = vmatpush1.msra.mxu0 0.0
    %1334 = vmatprep.subr.mxu0 0.0
    %1335 = vmatpush1.msra.mxu0 0.0
    %1336 = vmatprep.subr.mxu0 0.0
    %1337 = vmatpush1.msra.mxu0 0.0
    %1338 = vmatprep.subr.mxu0 0.0
    %1339 = vmatpush1.msra.mxu0 0.0
    %1340 = vmatprep.subr.mxu0 0.0
    %1341 = vmatpush1.msra.mxu0 0.0
    %1342 = vmatprep.subr.mxu0 0.0
    %1343 = vmatpush1.msra.mxu0 0.0
    %1344 = vmatprep.subr.mxu0 0.0
    %1345 = vmatpush1.msra.mxu0 0.0
    %1346 = vmatprep.subr.mxu0 0.0
    %1347 = vmatpush1.msra.mxu0 0.0
    %1348 = vmatprep.subr.mxu0 0.0
    %1349 = vmatpush1.msra.mxu0 0.0
    %1350 = vmatprep.subr.mxu0 0.0
    %1351 = vmatpush1.msra.mxu0 0.0
    %1352 = vmatprep.subr.mxu0 0.0
    %1353 = vmatpush1.msra.mxu0 0.0
    %1354 = vmatprep.subr.mxu0 0.0
    %1355 = vmatpush1.msra.mxu0 0.0
    %1356 = vmatprep.subr.mxu0 0.0
    %1357 = vmatpush1.msra.mxu0 0.0
    %1358 = vmatprep.subr.mxu0 0.0
    %1359 = vmatpush1.msra.mxu0 0.0
    %1360 = vmatprep.subr.mxu0 0.0
    %1361 = vmatpush1.msra.mxu0 0.0
    %1362 = vmatprep.subr.mxu0 0.0
    %1363 = vmatpush1.msra.mxu0 0.0
    %1364 = vmatprep.subr.mxu0 0.0
    %1365 = vmatpush1.msra.mxu0 0.0
    %1366 = vmatprep.subr.mxu0 0.0
    %1367 = vmatpush1.msra.mxu0 0.0
    %1368 = vmatprep.mubr.f32.mxu0 0.0
    %1369 = vmatmul.mubr.f32.gmra.mrb[0].mxu0 %v1231
    %v1370 = vpop.f32.mrb[0].mxu0
    %v1371 = vadd.f32 0.0, %v1370
    %v1372 = vpop.f32.mrb[0].mxu0
    %1373 = vdwg.mxu0
    %1374 = vst.msk [vmem:[#allocation4 + $0xf] sm:$0x1] %vm430, %v1371
    %v1375 = vld [vmem:[#allocation2 + $0x5] sm:$0x1]
    %1376 = vmatprep.subr.mxu0 0.0
    %1377 = vmatpush1.msra.mxu0 %v266
    %1378 = vmatprep.subr.mxu0 0.0
    %1379 = vmatpush1.msra.mxu0 %v267
    %1380 = vmatprep.subr.mxu0 0.0
    %1381 = vmatpush1.msra.mxu0 %v268
    %1382 = vmatprep.subr.mxu0 0.0
    %1383 = vmatpush1.msra.mxu0 %v269
    %1384 = vmatprep.subr.mxu0 0.0
    %1385 = vmatpush1.msra.mxu0 %v270
    %1386 = vmatprep.subr.mxu0 0.0
    %1387 = vmatpush1.msra.mxu0 0.0
    %1388 = vmatprep.subr.mxu0 0.0
    %1389 = vmatpush1.msra.mxu0 0.0
    %1390 = vmatprep.subr.mxu0 0.0
    %1391 = vmatpush1.msra.mxu0 0.0
    %1392 = vmatprep.subr.mxu0 0.0
    %1393 = vmatpush1.msra.mxu0 0.0
    %1394 = vmatprep.subr.mxu0 0.0
    %1395 = vmatpush1.msra.mxu0 0.0
    %1396 = vmatprep.subr.mxu0 0.0
    %1397 = vmatpush1.msra.mxu0 0.0
    %1398 = vmatprep.subr.mxu0 0.0
    %1399 = vmatpush1.msra.mxu0 0.0
    %1400 = vmatprep.subr.mxu0 0.0
    %1401 = vmatpush1.msra.mxu0 0.0
    %1402 = vmatprep.subr.mxu0 0.0
    %1403 = vmatpush1.msra.mxu0 0.0
    %1404 = vmatprep.subr.mxu0 0.0
    %1405 = vmatpush1.msra.mxu0 0.0
    %1406 = vmatprep.subr.mxu0 0.0
    %1407 = vmatpush1.msra.mxu0 0.0
    %1408 = vmatprep.subr.mxu0 0.0
    %1409 = vmatpush1.msra.mxu0 0.0
    %1410 = vmatprep.subr.mxu0 0.0
    %1411 = vmatpush1.msra.mxu0 0.0
    %1412 = vmatprep.subr.mxu0 0.0
    %1413 = vmatpush1.msra.mxu0 0.0
    %1414 = vmatprep.subr.mxu0 0.0
    %1415 = vmatpush1.msra.mxu0 0.0
    %1416 = vmatprep.subr.mxu0 0.0
    %1417 = vmatpush1.msra.mxu0 0.0
    %1418 = vmatprep.subr.mxu0 0.0
    %1419 = vmatpush1.msra.mxu0 0.0
    %1420 = vmatprep.subr.mxu0 0.0
    %1421 = vmatpush1.msra.mxu0 0.0
    %1422 = vmatprep.subr.mxu0 0.0
    %1423 = vmatpush1.msra.mxu0 0.0
    %1424 = vmatprep.subr.mxu0 0.0
    %1425 = vmatpush1.msra.mxu0 0.0
    %1426 = vmatprep.subr.mxu0 0.0
    %1427 = vmatpush1.msra.mxu0 0.0
    %1428 = vmatprep.subr.mxu0 0.0
    %1429 = vmatpush1.msra.mxu0 0.0
    %1430 = vmatprep.subr.mxu0 0.0
    %1431 = vmatpush1.msra.mxu0 0.0
    %1432 = vmatprep.subr.mxu0 0.0
    %1433 = vmatpush1.msra.mxu0 0.0
    %1434 = vmatprep.subr.mxu0 0.0
    %1435 = vmatpush1.msra.mxu0 0.0
    %1436 = vmatprep.subr.mxu0 0.0
    %1437 = vmatpush1.msra.mxu0 0.0
    %1438 = vmatprep.subr.mxu0 0.0
    %1439 = vmatpush1.msra.mxu0 0.0
    %1440 = vmatprep.mubr.f32.mxu0 0.0
    %1441 = vmatmul.mubr.f32.gmra.mrb[0].mxu0 %v1231
    %v1442 = vpop.f32.mrb[0].mxu0
    %v1443 = vadd.f32 0.0, %v1442
    %v1444 = vpop.f32.mrb[0].mxu0
    %1445 = vdwg.mxu0
    %v1446 = vadd.f32 %v1375, %v1443
    %v1447 = vtanh.pop %v1446
    %v1449 = vsel %vm261, %v1447, 0
    %1451 = vmatprep.subr.mxu0 0.0
    %1452 = vmatpush1.msra.mxu0 %v271
    %1453 = vmatprep.subr.mxu0 0.0
    %1454 = vmatpush1.msra.mxu0 %v272
    %1455 = vmatprep.subr.mxu0 0.0
    %1456 = vmatpush1.msra.mxu0 %v273
    %1457 = vmatprep.subr.mxu0 0.0
    %1458 = vmatpush1.msra.mxu0 %v274
    %1459 = vmatprep.subr.mxu0 0.0
    %1460 = vmatpush1.msra.mxu0 %v275
    %1461 = vmatprep.subr.mxu0 0.0
    %1462 = vmatpush1.msra.mxu0 0.0
    %1463 = vmatprep.subr.mxu0 0.0
    %1464 = vmatpush1.msra.mxu0 0.0
    %1465 = vmatprep.subr.mxu0 0.0
    %1466 = vmatpush1.msra.mxu0 0.0
    %1467 = vmatprep.subr.mxu0 0.0
    %1468 = vmatpush1.msra.mxu0 0.0
    %1469 = vmatprep.subr.mxu0 0.0
    %1470 = vmatpush1.msra.mxu0 0.0
    %1471 = vmatprep.subr.mxu0 0.0
    %1472 = vmatpush1.msra.mxu0 0.0
    %1473 = vmatprep.subr.mxu0 0.0
    %1474 = vmatpush1.msra.mxu0 0.0
    %1475 = vmatprep.subr.mxu0 0.0
    %1476 = vmatpush1.msra.mxu0 0.0
    %1477 = vmatprep.subr.mxu0 0.0
    %1478 = vmatpush1.msra.mxu0 0.0
    %1479 = vmatprep.subr.mxu0 0.0
    %1480 = vmatpush1.msra.mxu0 0.0
    %1481 = vmatprep.subr.mxu0 0.0
    %1482 = vmatpush1.msra.mxu0 0.0
    %1483 = vmatprep.subr.mxu0 0.0
    %1484 = vmatpush1.msra.mxu0 0.0
    %1485 = vmatprep.subr.mxu0 0.0
    %1486 = vmatpush1.msra.mxu0 0.0
    %1487 = vmatprep.subr.mxu0 0.0
    %1488 = vmatpush1.msra.mxu0 0.0
    %1489 = vmatprep.subr.mxu0 0.0
    %1490 = vmatpush1.msra.mxu0 0.0
    %1491 = vmatprep.subr.mxu0 0.0
    %1492 = vmatpush1.msra.mxu0 0.0
    %1493 = vmatprep.subr.mxu0 0.0
    %1494 = vmatpush1.msra.mxu0 0.0
    %1495 = vmatprep.subr.mxu0 0.0
    %1496 = vmatpush1.msra.mxu0 0.0
    %1497 = vmatprep.subr.mxu0 0.0
    %1498 = vmatpush1.msra.mxu0 0.0
    %1499 = vmatprep.subr.mxu0 0.0
    %1500 = vmatpush1.msra.mxu0 0.0
    %1501 = vmatprep.subr.mxu0 0.0
    %1502 = vmatpush1.msra.mxu0 0.0
    %1503 = vmatprep.subr.mxu0 0.0
    %1504 = vmatpush1.msra.mxu0 0.0
    %1505 = vmatprep.subr.mxu0 0.0
    %1506 = vmatpush1.msra.mxu0 0.0
    %1507 = vmatprep.subr.mxu0 0.0
    %1508 = vmatpush1.msra.mxu0 0.0
    %1509 = vmatprep.subr.mxu0 0.0
    %1510 = vmatpush1.msra.mxu0 0.0
    %1511 = vmatprep.subr.mxu0 0.0
    %1512 = vmatpush1.msra.mxu0 0.0
    %1513 = vmatprep.subr.mxu0 0.0
    %1514 = vmatpush1.msra.mxu0 0.0
    %1515 = vmatprep.mubr.f32.mxu0 0.0
    %1516 = vmatmul.mubr.f32.gmra.mrb[0].mxu0 %v1449
    %v1517 = vpop.f32.mrb[0].mxu0
    %v1518 = vadd.f32 0.0, %v1517
    %v1519 = vpop.f32.mrb[0].mxu0
    %1520 = vdwg.mxu0
    %1521 = vst.msk [vmem:[#allocation3 + $0x5] sm:$0x1] %vm430, %v1518
    %1522 = vmatprep.subr.mxu0 0.0
    %1523 = vmatpush1.msra.mxu0 %v276
    %1524 = vmatprep.subr.mxu0 0.0
    %1525 = vmatpush1.msra.mxu0 %v277
    %1526 = vmatprep.subr.mxu0 0.0
    %1527 = vmatpush1.msra.mxu0 %v278
    %1528 = vmatprep.subr.mxu0 0.0
    %1529 = vmatpush1.msra.mxu0 %v279
    %1530 = vmatprep.subr.mxu0 0.0
    %1531 = vmatpush1.msra.mxu0 %v280
    %1532 = vmatprep.subr.mxu0 0.0
    %1533 = vmatpush1.msra.mxu0 0.0
    %1534 = vmatprep.subr.mxu0 0.0
    %1535 = vmatpush1.msra.mxu0 0.0
    %1536 = vmatprep.subr.mxu0 0.0
    %1537 = vmatpush1.msra.mxu0 0.0
    %1538 = vmatprep.subr.mxu0 0.0
    %1539 = vmatpush1.msra.mxu0 0.0
    %1540 = vmatprep.subr.mxu0 0.0
    %1541 = vmatpush1.msra.mxu0 0.0
    %1542 = vmatprep.subr.mxu0 0.0
    %1543 = vmatpush1.msra.mxu0 0.0
    %1544 = vmatprep.subr.mxu0 0.0
    %1545 = vmatpush1.msra.mxu0 0.0
    %1546 = vmatprep.subr.mxu0 0.0
    %1547 = vmatpush1.msra.mxu0 0.0
    %1548 = vmatprep.subr.mxu0 0.0
    %1549 = vmatpush1.msra.mxu0 0.0
    %1550 = vmatprep.subr.mxu0 0.0
    %1551 = vmatpush1.msra.mxu0 0.0
    %1552 = vmatprep.subr.mxu0 0.0
    %1553 = vmatpush1.msra.mxu0 0.0
    %1554 = vmatprep.subr.mxu0 0.0
    %1555 = vmatpush1.msra.mxu0 0.0
    %1556 = vmatprep.subr.mxu0 0.0
    %1557 = vmatpush1.msra.mxu0 0.0
    %1558 = vmatprep.subr.mxu0 0.0
    %1559 = vmatpush1.msra.mxu0 0.0
    %1560 = vmatprep.subr.mxu0 0.0
    %1561 = vmatpush1.msra.mxu0 0.0
    %1562 = vmatprep.subr.mxu0 0.0
    %1563 = vmatpush1.msra.mxu0 0.0
    %1564 = vmatprep.subr.mxu0 0.0
    %1565 = vmatpush1.msra.mxu0 0.0
    %1566 = vmatprep.subr.mxu0 0.0
    %1567 = vmatpush1.msra.mxu0 0.0
    %1568 = vmatprep.subr.mxu0 0.0
    %1569 = vmatpush1.msra.mxu0 0.0
    %1570 = vmatprep.subr.mxu0 0.0
    %1571 = vmatpush1.msra.mxu0 0.0
    %1572 = vmatprep.subr.mxu0 0.0
    %1573 = vmatpush1.msra.mxu0 0.0
    %1574 = vmatprep.subr.mxu0 0.0
    %1575 = vmatpush1.msra.mxu0 0.0
    %1576 = vmatprep.subr.mxu0 0.0
    %1577 = vmatpush1.msra.mxu0 0.0
    %1578 = vmatprep.subr.mxu0 0.0
    %1579 = vmatpush1.msra.mxu0 0.0
    %1580 = vmatprep.subr.mxu0 0.0
    %1581 = vmatpush1.msra.mxu0 0.0
    %1582 = vmatprep.subr.mxu0 0.0
    %1583 = vmatpush1.msra.mxu0 0.0
    %1584 = vmatprep.subr.mxu0 0.0
    %1585 = vmatpush1.msra.mxu0 0.0
    %1586 = vmatprep.mubr.f32.mxu0 0.0
    %1587 = vmatmul.mubr.f32.gmra.mrb[0].mxu0 %v1449
    %v1588 = vpop.f32.mrb[0].mxu0
    %v1589 = vadd.f32 0.0, %v1588
    %v1590 = vpop.f32.mrb[0].mxu0
    %1591 = vdwg.mxu0
    %1592 = vst.msk [vmem:[#allocation4 + $0xe] sm:$0x1] %vm430, %v1589
    %v1593 = vld [vmem:[#allocation2 + $0x6] sm:$0x1]
    %1594 = vmatprep.subr.mxu0 0.0
    %1595 = vmatpush1.msra.mxu0 %v266
    %1596 = vmatprep.subr.mxu0 0.0
    %1597 = vmatpush1.msra.mxu0 %v267
    %1598 = vmatprep.subr.mxu0 0.0
    %1599 = vmatpush1.msra.mxu0 %v268
    %1600 = vmatprep.subr.mxu0 0.0
    %1601 = vmatpush1.msra.mxu0 %v269
    %1602 = vmatprep.subr.mxu0 0.0
    %1603 = vmatpush1.msra.mxu0 %v270
    %1604 = vmatprep.subr.mxu0 0.0
    %1605 = vmatpush1.msra.mxu0 0.0
    %1606 = vmatprep.subr.mxu0 0.0
    %1607 = vmatpush1.msra.mxu0 0.0
    %1608 = vmatprep.subr.mxu0 0.0
    %1609 = vmatpush1.msra.mxu0 0.0
    %1610 = vmatprep.subr.mxu0 0.0
    %1611 = vmatpush1.msra.mxu0 0.0
    %1612 = vmatprep.subr.mxu0 0.0
    %1613 = vmatpush1.msra.mxu0 0.0
    %1614 = vmatprep.subr.mxu0 0.0
    %1615 = vmatpush1.msra.mxu0 0.0
    %1616 = vmatprep.subr.mxu0 0.0
    %1617 = vmatpush1.msra.mxu0 0.0
    %1618 = vmatprep.subr.mxu0 0.0
    %1619 = vmatpush1.msra.mxu0 0.0
    %1620 = vmatprep.subr.mxu0 0.0
    %1621 = vmatpush1.msra.mxu0 0.0
    %1622 = vmatprep.subr.mxu0 0.0
    %1623 = vmatpush1.msra.mxu0 0.0
    %1624 = vmatprep.subr.mxu0 0.0
    %1625 = vmatpush1.msra.mxu0 0.0
    %1626 = vmatprep.subr.mxu0 0.0
    %1627 = vmatpush1.msra.mxu0 0.0
    %1628 = vmatprep.subr.mxu0 0.0
    %1629 = vmatpush1.msra.mxu0 0.0
    %1630 = vmatprep.subr.mxu0 0.0
    %1631 = vmatpush1.msra.mxu0 0.0
    %1632 = vmatprep.subr.mxu0 0.0
    %1633 = vmatpush1.msra.mxu0 0.0
    %1634 = vmatprep.subr.mxu0 0.0
    %1635 = vmatpush1.msra.mxu0 0.0
    %1636 = vmatprep.subr.mxu0 0.0
    %1637 = vmatpush1.msra.mxu0 0.0
    %1638 = vmatprep.subr.mxu0 0.0
    %1639 = vmatpush1.msra.mxu0 0.0
    %1640 = vmatprep.subr.mxu0 0.0
    %1641 = vmatpush1.msra.mxu0 0.0
    %1642 = vmatprep.subr.mxu0 0.0
    %1643 = vmatpush1.msra.mxu0 0.0
    %1644 = vmatprep.subr.mxu0 0.0
    %1645 = vmatpush1.msra.mxu0 0.0
    %1646 = vmatprep.subr.mxu0 0.0
    %1647 = vmatpush1.msra.mxu0 0.0
    %1648 = vmatprep.subr.mxu0 0.0
    %1649 = vmatpush1.msra.mxu0 0.0
    %1650 = vmatprep.subr.mxu0 0.0
    %1651 = vmatpush1.msra.mxu0 0.0
    %1652 = vmatprep.subr.mxu0 0.0
    %1653 = vmatpush1.msra.mxu0 0.0
    %1654 = vmatprep.subr.mxu0 0.0
    %1655 = vmatpush1.msra.mxu0 0.0
    %1656 = vmatprep.subr.mxu0 0.0
    %1657 = vmatpush1.msra.mxu0 0.0
    %1658 = vmatprep.mubr.f32.mxu0 0.0
    %1659 = vmatmul.mubr.f32.gmra.mrb[0].mxu0 %v1449
    %v1660 = vpop.f32.mrb[0].mxu0
    %v1661 = vadd.f32 0.0, %v1660
    %v1662 = vpop.f32.mrb[0].mxu0
    %1663 = vdwg.mxu0
    %v1664 = vadd.f32 %v1593, %v1661
    %v1665 = vtanh.pop %v1664
    %v1667 = vsel %vm261, %v1665, 0
    %1669 = vmatprep.subr.mxu0 0.0
    %1670 = vmatpush1.msra.mxu0 %v271
    %1671 = vmatprep.subr.mxu0 0.0
    %1672 = vmatpush1.msra.mxu0 %v272
    %1673 = vmatprep.subr.mxu0 0.0
    %1674 = vmatpush1.msra.mxu0 %v273
    %1675 = vmatprep.subr.mxu0 0.0
    %1676 = vmatpush1.msra.mxu0 %v274
    %1677 = vmatprep.subr.mxu0 0.0
    %1678 = vmatpush1.msra.mxu0 %v275
    %1679 = vmatprep.subr.mxu0 0.0
    %1680 = vmatpush1.msra.mxu0 0.0
    %1681 = vmatprep.subr.mxu0 0.0
    %1682 = vmatpush1.msra.mxu0 0.0
    %1683 = vmatprep.subr.mxu0 0.0
    %1684 = vmatpush1.msra.mxu0 0.0
    %1685 = vmatprep.subr.mxu0 0.0
    %1686 = vmatpush1.msra.mxu0 0.0
    %1687 = vmatprep.subr.mxu0 0.0
    %1688 = vmatpush1.msra.mxu0 0.0
    %1689 = vmatprep.subr.mxu0 0.0
    %1690 = vmatpush1.msra.mxu0 0.0
    %1691 = vmatprep.subr.mxu0 0.0
    %1692 = vmatpush1.msra.mxu0 0.0
    %1693 = vmatprep.subr.mxu0 0.0
    %1694 = vmatpush1.msra.mxu0 0.0
    %1695 = vmatprep.subr.mxu0 0.0
    %1696 = vmatpush1.msra.mxu0 0.0
    %1697 = vmatprep.subr.mxu0 0.0
    %1698 = vmatpush1.msra.mxu0 0.0
    %1699 = vmatprep.subr.mxu0 0.0
    %1700 = vmatpush1.msra.mxu0 0.0
    %1701 = vmatprep.subr.mxu0 0.0
    %1702 = vmatpush1.msra.mxu0 0.0
    %1703 = vmatprep.subr.mxu0 0.0
    %1704 = vmatpush1.msra.mxu0 0.0
    %1705 = vmatprep.subr.mxu0 0.0
    %1706 = vmatpush1.msra.mxu0 0.0
    %1707 = vmatprep.subr.mxu0 0.0
    %1708 = vmatpush1.msra.mxu0 0.0
    %1709 = vmatprep.subr.mxu0 0.0
    %1710 = vmatpush1.msra.mxu0 0.0
    %1711 = vmatprep.subr.mxu0 0.0
    %1712 = vmatpush1.msra.mxu0 0.0
    %1713 = vmatprep.subr.mxu0 0.0
    %1714 = vmatpush1.msra.mxu0 0.0
    %1715 = vmatprep.subr.mxu0 0.0
    %1716 = vmatpush1.msra.mxu0 0.0
    %1717 = vmatprep.subr.mxu0 0.0
    %1718 = vmatpush1.msra.mxu0 0.0
    %1719 = vmatprep.subr.mxu0 0.0
    %1720 = vmatpush1.msra.mxu0 0.0
    %1721 = vmatprep.subr.mxu0 0.0
    %1722 = vmatpush1.msra.mxu0 0.0
    %1723 = vmatprep.subr.mxu0 0.0
    %1724 = vmatpush1.msra.mxu0 0.0
    %1725 = vmatprep.subr.mxu0 0.0
    %1726 = vmatpush1.msra.mxu0 0.0
    %1727 = vmatprep.subr.mxu0 0.0
    %1728 = vmatpush1.msra.mxu0 0.0
    %1729 = vmatprep.subr.mxu0 0.0
    %1730 = vmatpush1.msra.mxu0 0.0
    %1731 = vmatprep.subr.mxu0 0.0
    %1732 = vmatpush1.msra.mxu0 0.0
    %1733 = vmatprep.mubr.f32.mxu0 0.0
    %1734 = vmatmul.mubr.f32.gmra.mrb[0].mxu0 %v1667
    %v1735 = vpop.f32.mrb[0].mxu0
    %v1736 = vadd.f32 0.0, %v1735
    %v1737 = vpop.f32.mrb[0].mxu0
    %1738 = vdwg.mxu0
    %1739 = vst.msk [vmem:[#allocation3 + $0x6] sm:$0x1] %vm430, %v1736
    %1740 = vmatprep.subr.mxu0 0.0
    %1741 = vmatpush1.msra.mxu0 %v276
    %1742 = vmatprep.subr.mxu0 0.0
    %1743 = vmatpush1.msra.mxu0 %v277
    %1744 = vmatprep.subr.mxu0 0.0
    %1745 = vmatpush1.msra.mxu0 %v278
    %1746 = vmatprep.subr.mxu0 0.0
    %1747 = vmatpush1.msra.mxu0 %v279
    %1748 = vmatprep.subr.mxu0 0.0
    %1749 = vmatpush1.msra.mxu0 %v280
    %1750 = vmatprep.subr.mxu0 0.0
    %1751 = vmatpush1.msra.mxu0 0.0
    %1752 = vmatprep.subr.mxu0 0.0
    %1753 = vmatpush1.msra.mxu0 0.0
    %1754 = vmatprep.subr.mxu0 0.0
    %1755 = vmatpush1.msra.mxu0 0.0
    %1756 = vmatprep.subr.mxu0 0.0
    %1757 = vmatpush1.msra.mxu0 0.0
    %1758 = vmatprep.subr.mxu0 0.0
    %1759 = vmatpush1.msra.mxu0 0.0
    %1760 = vmatprep.subr.mxu0 0.0
    %1761 = vmatpush1.msra.mxu0 0.0
    %1762 = vmatprep.subr.mxu0 0.0
    %1763 = vmatpush1.msra.mxu0 0.0
    %1764 = vmatprep.subr.mxu0 0.0
    %1765 = vmatpush1.msra.mxu0 0.0
    %1766 = vmatprep.subr.mxu0 0.0
    %1767 = vmatpush1.msra.mxu0 0.0
    %1768 = vmatprep.subr.mxu0 0.0
    %1769 = vmatpush1.msra.mxu0 0.0
    %1770 = vmatprep.subr.mxu0 0.0
    %1771 = vmatpush1.msra.mxu0 0.0
    %1772 = vmatprep.subr.mxu0 0.0
    %1773 = vmatpush1.msra.mxu0 0.0
    %1774 = vmatprep.subr.mxu0 0.0
    %1775 = vmatpush1.msra.mxu0 0.0
    %1776 = vmatprep.subr.mxu0 0.0
    %1777 = vmatpush1.msra.mxu0 0.0
    %1778 = vmatprep.subr.mxu0 0.0
    %1779 = vmatpush1.msra.mxu0 0.0
    %1780 = vmatprep.subr.mxu0 0.0
    %1781 = vmatpush1.msra.mxu0 0.0
    %1782 = vmatprep.subr.mxu0 0.0
    %1783 = vmatpush1.msra.mxu0 0.0
    %1784 = vmatprep.subr.mxu0 0.0
    %1785 = vmatpush1.msra.mxu0 0.0
    %1786 = vmatprep.subr.mxu0 0.0
    %1787 = vmatpush1.msra.mxu0 0.0
    %1788 = vmatprep.subr.mxu0 0.0
    %1789 = vmatpush1.msra.mxu0 0.0
    %1790 = vmatprep.subr.mxu0 0.0
    %1791 = vmatpush1.msra.mxu0 0.0
    %1792 = vmatprep.subr.mxu0 0.0
    %1793 = vmatpush1.msra.mxu0 0.0
    %1794 = vmatprep.subr.mxu0 0.0
    %1795 = vmatpush1.msra.mxu0 0.0
    %1796 = vmatprep.subr.mxu0 0.0
    %1797 = vmatpush1.msra.mxu0 0.0
    %1798 = vmatprep.subr.mxu0 0.0
    %1799 = vmatpush1.msra.mxu0 0.0
    %1800 = vmatprep.subr.mxu0 0.0
    %1801 = vmatpush1.msra.mxu0 0.0
    %1802 = vmatprep.subr.mxu0 0.0
    %1803 = vmatpush1.msra.mxu0 0.0
    %1804 = vmatprep.mubr.f32.mxu0 0.0
    %1805 = vmatmul.mubr.f32.gmra.mrb[0].mxu0 %v1667
    %v1806 = vpop.f32.mrb[0].mxu0
    %v1807 = vadd.f32 0.0, %v1806
    %v1808 = vpop.f32.mrb[0].mxu0
    %1809 = vdwg.mxu0
    %1810 = vst.msk [vmem:[#allocation4 + $0xd] sm:$0x1] %vm430, %v1807
    %v1811 = vld [vmem:[#allocation2 + $0x7] sm:$0x1]
    %1812 = vmatprep.subr.mxu0 0.0
    %1813 = vmatpush1.msra.mxu0 %v266
    %1814 = vmatprep.subr.mxu0 0.0
    %1815 = vmatpush1.msra.mxu0 %v267
    %1816 = vmatprep.subr.mxu0 0.0
    %1817 = vmatpush1.msra.mxu0 %v268
    %1818 = vmatprep.subr.mxu0 0.0
    %1819 = vmatpush1.msra.mxu0 %v269
    %1820 = vmatprep.subr.mxu0 0.0
    %1821 = vmatpush1.msra.mxu0 %v270
    %1822 = vmatprep.subr.mxu0 0.0
    %1823 = vmatpush1.msra.mxu0 0.0
    %1824 = vmatprep.subr.mxu0 0.0
    %1825 = vmatpush1.msra.mxu0 0.0
    %1826 = vmatprep.subr.mxu0 0.0
    %1827 = vmatpush1.msra.mxu0 0.0
    %1828 = vmatprep.subr.mxu0 0.0
    %1829 = vmatpush1.msra.mxu0 0.0
    %1830 = vmatprep.subr.mxu0 0.0
    %1831 = vmatpush1.msra.mxu0 0.0
    %1832 = vmatprep.subr.mxu0 0.0
    %1833 = vmatpush1.msra.mxu0 0.0
    %1834 = vmatprep.subr.mxu0 0.0
    %1835 = vmatpush1.msra.mxu0 0.0
    %1836 = vmatprep.subr.mxu0 0.0
    %1837 = vmatpush1.msra.mxu0 0.0
    %1838 = vmatprep.subr.mxu0 0.0
    %1839 = vmatpush1.msra.mxu0 0.0
    %1840 = vmatprep.subr.mxu0 0.0
    %1841 = vmatpush1.msra.mxu0 0.0
    %1842 = vmatprep.subr.mxu0 0.0
    %1843 = vmatpush1.msra.mxu0 0.0
    %1844 = vmatprep.subr.mxu0 0.0
    %1845 = vmatpush1.msra.mxu0 0.0
    %1846 = vmatprep.subr.mxu0 0.0
    %1847 = vmatpush1.msra.mxu0 0.0
    %1848 = vmatprep.subr.mxu0 0.0
    %1849 = vmatpush1.msra.mxu0 0.0
    %1850 = vmatprep.subr.mxu0 0.0
    %1851 = vmatpush1.msra.mxu0 0.0
    %1852 = vmatprep.subr.mxu0 0.0
    %1853 = vmatpush1.msra.mxu0 0.0
    %1854 = vmatprep.subr.mxu0 0.0
    %1855 = vmatpush1.msra.mxu0 0.0
    %1856 = vmatprep.subr.mxu0 0.0
    %1857 = vmatpush1.msra.mxu0 0.0
    %1858 = vmatprep.subr.mxu0 0.0
    %1859 = vmatpush1.msra.mxu0 0.0
    %1860 = vmatprep.subr.mxu0 0.0
    %1861 = vmatpush1.msra.mxu0 0.0
    %1862 = vmatprep.subr.mxu0 0.0
    %1863 = vmatpush1.msra.mxu0 0.0
    %1864 = vmatprep.subr.mxu0 0.0
    %1865 = vmatpush1.msra.mxu0 0.0
    %1866 = vmatprep.subr.mxu0 0.0
    %1867 = vmatpush1.msra.mxu0 0.0
    %1868 = vmatprep.subr.mxu0 0.0
    %1869 = vmatpush1.msra.mxu0 0.0
    %1870 = vmatprep.subr.mxu0 0.0
    %1871 = vmatpush1.msra.mxu0 0.0
    %1872 = vmatprep.subr.mxu0 0.0
    %1873 = vmatpush1.msra.mxu0 0.0
    %1874 = vmatprep.subr.mxu0 0.0
    %1875 = vmatpush1.msra.mxu0 0.0
    %1876 = vmatprep.mubr.f32.mxu0 0.0
    %1877 = vmatmul.mubr.f32.gmra.mrb[0].mxu0 %v1667
    %v1878 = vpop.f32.mrb[0].mxu0
    %v1879 = vadd.f32 0.0, %v1878
    %v1880 = vpop.f32.mrb[0].mxu0
    %1881 = vdwg.mxu0
    %v1882 = vadd.f32 %v1811, %v1879
    %v1883 = vtanh.pop %v1882
    %v1885 = vsel %vm261, %v1883, 0
    %1887 = vmatprep.subr.mxu0 0.0
    %1888 = vmatpush1.msra.mxu0 %v271
    %1889 = vmatprep.subr.mxu0 0.0
    %1890 = vmatpush1.msra.mxu0 %v272
    %1891 = vmatprep.subr.mxu0 0.0
    %1892 = vmatpush1.msra.mxu0 %v273
    %1893 = vmatprep.subr.mxu0 0.0
    %1894 = vmatpush1.msra.mxu0 %v274
    %1895 = vmatprep.subr.mxu0 0.0
    %1896 = vmatpush1.msra.mxu0 %v275
    %1897 = vmatprep.subr.mxu0 0.0
    %1898 = vmatpush1.msra.mxu0 0.0
    %1899 = vmatprep.subr.mxu0 0.0
    %1900 = vmatpush1.msra.mxu0 0.0
    %1901 = vmatprep.subr.mxu0 0.0
    %1902 = vmatpush1.msra.mxu0 0.0
    %1903 = vmatprep.subr.mxu0 0.0
    %1904 = vmatpush1.msra.mxu0 0.0
    %1905 = vmatprep.subr.mxu0 0.0
    %1906 = vmatpush1.msra.mxu0 0.0
    %1907 = vmatprep.subr.mxu0 0.0
    %1908 = vmatpush1.msra.mxu0 0.0
    %1909 = vmatprep.subr.mxu0 0.0
    %1910 = vmatpush1.msra.mxu0 0.0
    %1911 = vmatprep.subr.mxu0 0.0
    %1912 = vmatpush1.msra.mxu0 0.0
    %1913 = vmatprep.subr.mxu0 0.0
    %1914 = vmatpush1.msra.mxu0 0.0
    %1915 = vmatprep.subr.mxu0 0.0
    %1916 = vmatpush1.msra.mxu0 0.0
    %1917 = vmatprep.subr.mxu0 0.0
    %1918 = vmatpush1.msra.mxu0 0.0
    %1919 = vmatprep.subr.mxu0 0.0
    %1920 = vmatpush1.msra.mxu0 0.0
    %1921 = vmatprep.subr.mxu0 0.0
    %1922 = vmatpush1.msra.mxu0 0.0
    %1923 = vmatprep.subr.mxu0 0.0
    %1924 = vmatpush1.msra.mxu0 0.0
    %1925 = vmatprep.subr.mxu0 0.0
    %1926 = vmatpush1.msra.mxu0 0.0
    %1927 = vmatprep.subr.mxu0 0.0
    %1928 = vmatpush1.msra.mxu0 0.0
    %1929 = vmatprep.subr.mxu0 0.0
    %1930 = vmatpush1.msra.mxu0 0.0
    %1931 = vmatprep.subr.mxu0 0.0
    %1932 = vmatpush1.msra.mxu0 0.0
    %1933 = vmatprep.subr.mxu0 0.0
    %1934 = vmatpush1.msra.mxu0 0.0
    %1935 = vmatprep.subr.mxu0 0.0
    %1936 = vmatpush1.msra.mxu0 0.0
    %1937 = vmatprep.subr.mxu0 0.0
    %1938 = vmatpush1.msra.mxu0 0.0
    %1939 = vmatprep.subr.mxu0 0.0
    %1940 = vmatpush1.msra.mxu0 0.0
    %1941 = vmatprep.subr.mxu0 0.0
    %1942 = vmatpush1.msra.mxu0 0.0
    %1943 = vmatprep.subr.mxu0 0.0
    %1944 = vmatpush1.msra.mxu0 0.0
    %1945 = vmatprep.subr.mxu0 0.0
    %1946 = vmatpush1.msra.mxu0 0.0
    %1947 = vmatprep.subr.mxu0 0.0
    %1948 = vmatpush1.msra.mxu0 0.0
    %1949 = vmatprep.subr.mxu0 0.0
    %1950 = vmatpush1.msra.mxu0 0.0
    %1951 = vmatprep.mubr.f32.mxu0 0.0
    %1952 = vmatmul.mubr.f32.gmra.mrb[0].mxu0 %v1885
    %v1953 = vpop.f32.mrb[0].mxu0
    %v1954 = vadd.f32 0.0, %v1953
    %v1955 = vpop.f32.mrb[0].mxu0
    %1956 = vdwg.mxu0
    %1957 = vst.msk [vmem:[#allocation3 + $0x7] sm:$0x1] %vm430, %v1954
    %1958 = vmatprep.subr.mxu0 0.0
    %1959 = vmatpush1.msra.mxu0 %v276
    %1960 = vmatprep.subr.mxu0 0.0
    %1961 = vmatpush1.msra.mxu0 %v277
    %1962 = vmatprep.subr.mxu0 0.0
    %1963 = vmatpush1.msra.mxu0 %v278
    %1964 = vmatprep.subr.mxu0 0.0
    %1965 = vmatpush1.msra.mxu0 %v279
    %1966 = vmatprep.subr.mxu0 0.0
    %1967 = vmatpush1.msra.mxu0 %v280
    %1968 = vmatprep.subr.mxu0 0.0
    %1969 = vmatpush1.msra.mxu0 0.0
    %1970 = vmatprep.subr.mxu0 0.0
    %1971 = vmatpush1.msra.mxu0 0.0
    %1972 = vmatprep.subr.mxu0 0.0
    %1973 = vmatpush1.msra.mxu0 0.0
    %1974 = vmatprep.subr.mxu0 0.0
    %1975 = vmatpush1.msra.mxu0 0.0
    %1976 = vmatprep.subr.mxu0 0.0
    %1977 = vmatpush1.msra.mxu0 0.0
    %1978 = vmatprep.subr.mxu0 0.0
    %1979 = vmatpush1.msra.mxu0 0.0
    %1980 = vmatprep.subr.mxu0 0.0
    %1981 = vmatpush1.msra.mxu0 0.0
    %1982 = vmatprep.subr.mxu0 0.0
    %1983 = vmatpush1.msra.mxu0 0.0
    %1984 = vmatprep.subr.mxu0 0.0
    %1985 = vmatpush1.msra.mxu0 0.0
    %1986 = vmatprep.subr.mxu0 0.0
    %1987 = vmatpush1.msra.mxu0 0.0
    %1988 = vmatprep.subr.mxu0 0.0
    %1989 = vmatpush1.msra.mxu0 0.0
    %1990 = vmatprep.subr.mxu0 0.0
    %1991 = vmatpush1.msra.mxu0 0.0
    %1992 = vmatprep.subr.mxu0 0.0
    %1993 = vmatpush1.msra.mxu0 0.0
    %1994 = vmatprep.subr.mxu0 0.0
    %1995 = vmatpush1.msra.mxu0 0.0
    %1996 = vmatprep.subr.mxu0 0.0
    %1997 = vmatpush1.msra.mxu0 0.0
    %1998 = vmatprep.subr.mxu0 0.0
    %1999 = vmatpush1.msra.mxu0 0.0
    %2000 = vmatprep.subr.mxu0 0.0
    %2001 = vmatpush1.msra.mxu0 0.0
    %2002 = vmatprep.subr.mxu0 0.0
    %2003 = vmatpush1.msra.mxu0 0.0
    %2004 = vmatprep.subr.mxu0 0.0
    %2005 = vmatpush1.msra.mxu0 0.0
    %2006 = vmatprep.subr.mxu0 0.0
    %2007 = vmatpush1.msra.mxu0 0.0
    %2008 = vmatprep.subr.mxu0 0.0
    %2009 = vmatpush1.msra.mxu0 0.0
    %2010 = vmatprep.subr.mxu0 0.0
    %2011 = vmatpush1.msra.mxu0 0.0
    %2012 = vmatprep.subr.mxu0 0.0
    %2013 = vmatpush1.msra.mxu0 0.0
    %2014 = vmatprep.subr.mxu0 0.0
    %2015 = vmatpush1.msra.mxu0 0.0
    %2016 = vmatprep.subr.mxu0 0.0
    %2017 = vmatpush1.msra.mxu0 0.0
    %2018 = vmatprep.subr.mxu0 0.0
    %2019 = vmatpush1.msra.mxu0 0.0
    %2020 = vmatprep.subr.mxu0 0.0
    %2021 = vmatpush1.msra.mxu0 0.0
    %2022 = vmatprep.mubr.f32.mxu0 0.0
    %2023 = vmatmul.mubr.f32.gmra.mrb[0].mxu0 %v1885
    %v2024 = vpop.f32.mrb[0].mxu0
    %v2025 = vadd.f32 0.0, %v2024
    %v2026 = vpop.f32.mrb[0].mxu0
    %2027 = vdwg.mxu0
    %2028 = vst.msk [vmem:[#allocation4 + $0xc] sm:$0x1] %vm430, %v2025
    %v2029 = vld [vmem:[#allocation2 + $0x8] sm:$0x1]
    %2030 = vmatprep.subr.mxu0 0.0
    %2031 = vmatpush1.msra.mxu0 %v266
    %2032 = vmatprep.subr.mxu0 0.0
    %2033 = vmatpush1.msra.mxu0 %v267
    %2034 = vmatprep.subr.mxu0 0.0
    %2035 = vmatpush1.msra.mxu0 %v268
    %2036 = vmatprep.subr.mxu0 0.0
    %2037 = vmatpush1.msra.mxu0 %v269
    %2038 = vmatprep.subr.mxu0 0.0
    %2039 = vmatpush1.msra.mxu0 %v270
    %2040 = vmatprep.subr.mxu0 0.0
    %2041 = vmatpush1.msra.mxu0 0.0
    %2042 = vmatprep.subr.mxu0 0.0
    %2043 = vmatpush1.msra.mxu0 0.0
    %2044 = vmatprep.subr.mxu0 0.0
    %2045 = vmatpush1.msra.mxu0 0.0
    %2046 = vmatprep.subr.mxu0 0.0
    %2047 = vmatpush1.msra.mxu0 0.0
    %2048 = vmatprep.subr.mxu0 0.0
    %2049 = vmatpush1.msra.mxu0 0.0
    %2050 = vmatprep.subr.mxu0 0.0
    %2051 = vmatpush1.msra.mxu0 0.0
    %2052 = vmatprep.subr.mxu0 0.0
    %2053 = vmatpush1.msra.mxu0 0.0
    %2054 = vmatprep.subr.mxu0 0.0
    %2055 = vmatpush1.msra.mxu0 0.0
    %2056 = vmatprep.subr.mxu0 0.0
    %2057 = vmatpush1.msra.mxu0 0.0
    %2058 = vmatprep.subr.mxu0 0.0
    %2059 = vmatpush1.msra.mxu0 0.0
    %2060 = vmatprep.subr.mxu0 0.0
    %2061 = vmatpush1.msra.mxu0 0.0
    %2062 = vmatprep.subr.mxu0 0.0
    %2063 = vmatpush1.msra.mxu0 0.0
    %2064 = vmatprep.subr.mxu0 0.0
    %2065 = vmatpush1.msra.mxu0 0.0
    %2066 = vmatprep.subr.mxu0 0.0
    %2067 = vmatpush1.msra.mxu0 0.0
    %2068 = vmatprep.subr.mxu0 0.0
    %2069 = vmatpush1.msra.mxu0 0.0
    %2070 = vmatprep.subr.mxu0 0.0
    %2071 = vmatpush1.msra.mxu0 0.0
    %2072 = vmatprep.subr.mxu0 0.0
    %2073 = vmatpush1.msra.mxu0 0.0
    %2074 = vmatprep.subr.mxu0 0.0
    %2075 = vmatpush1.msra.mxu0 0.0
    %2076 = vmatprep.subr.mxu0 0.0
    %2077 = vmatpush1.msra.mxu0 0.0
    %2078 = vmatprep.subr.mxu0 0.0
    %2079 = vmatpush1.msra.mxu0 0.0
    %2080 = vmatprep.subr.mxu0 0.0
    %2081 = vmatpush1.msra.mxu0 0.0
    %2082 = vmatprep.subr.mxu0 0.0
    %2083 = vmatpush1.msra.mxu0 0.0
    %2084 = vmatprep.subr.mxu0 0.0
    %2085 = vmatpush1.msra.mxu0 0.0
    %2086 = vmatprep.subr.mxu0 0.0
    %2087 = vmatpush1.msra.mxu0 0.0
    %2088 = vmatprep.subr.mxu0 0.0
    %2089 = vmatpush1.msra.mxu0 0.0
    %2090 = vmatprep.subr.mxu0 0.0
    %2091 = vmatpush1.msra.mxu0 0.0
    %2092 = vmatprep.subr.mxu0 0.0
    %2093 = vmatpush1.msra.mxu0 0.0
    %2094 = vmatprep.mubr.f32.mxu0 0.0
    %2095 = vmatmul.mubr.f32.gmra.mrb[0].mxu0 %v1885
    %v2096 = vpop.f32.mrb[0].mxu0
    %v2097 = vadd.f32 0.0, %v2096
    %v2098 = vpop.f32.mrb[0].mxu0
    %2099 = vdwg.mxu0
    %v2100 = vadd.f32 %v2029, %v2097
    %v2101 = vtanh.pop %v2100
    %v2103 = vsel %vm261, %v2101, 0
    %2105 = vmatprep.subr.mxu0 0.0
    %2106 = vmatpush1.msra.mxu0 %v271
    %2107 = vmatprep.subr.mxu0 0.0
    %2108 = vmatpush1.msra.mxu0 %v272
    %2109 = vmatprep.subr.mxu0 0.0
    %2110 = vmatpush1.msra.mxu0 %v273
    %2111 = vmatprep.subr.mxu0 0.0
    %2112 = vmatpush1.msra.mxu0 %v274
    %2113 = vmatprep.subr.mxu0 0.0
    %2114 = vmatpush1.msra.mxu0 %v275
    %2115 = vmatprep.subr.mxu0 0.0
    %2116 = vmatpush1.msra.mxu0 0.0
    %2117 = vmatprep.subr.mxu0 0.0
    %2118 = vmatpush1.msra.mxu0 0.0
    %2119 = vmatprep.subr.mxu0 0.0
    %2120 = vmatpush1.msra.mxu0 0.0
    %2121 = vmatprep.subr.mxu0 0.0
    %2122 = vmatpush1.msra.mxu0 0.0
    %2123 = vmatprep.subr.mxu0 0.0
    %2124 = vmatpush1.msra.mxu0 0.0
    %2125 = vmatprep.subr.mxu0 0.0
    %2126 = vmatpush1.msra.mxu0 0.0
    %2127 = vmatprep.subr.mxu0 0.0
    %2128 = vmatpush1.msra.mxu0 0.0
    %2129 = vmatprep.subr.mxu0 0.0
    %2130 = vmatpush1.msra.mxu0 0.0
    %2131 = vmatprep.subr.mxu0 0.0
    %2132 = vmatpush1.msra.mxu0 0.0
    %2133 = vmatprep.subr.mxu0 0.0
    %2134 = vmatpush1.msra.mxu0 0.0
    %2135 = vmatprep.subr.mxu0 0.0
    %2136 = vmatpush1.msra.mxu0 0.0
    %2137 = vmatprep.subr.mxu0 0.0
    %2138 = vmatpush1.msra.mxu0 0.0
    %2139 = vmatprep.subr.mxu0 0.0
    %2140 = vmatpush1.msra.mxu0 0.0
    %2141 = vmatprep.subr.mxu0 0.0
    %2142 = vmatpush1.msra.mxu0 0.0
    %2143 = vmatprep.subr.mxu0 0.0
    %2144 = vmatpush1.msra.mxu0 0.0
    %2145 = vmatprep.subr.mxu0 0.0
    %2146 = vmatpush1.msra.mxu0 0.0
    %2147 = vmatprep.subr.mxu0 0.0
    %2148 = vmatpush1.msra.mxu0 0.0
    %2149 = vmatprep.subr.mxu0 0.0
    %2150 = vmatpush1.msra.mxu0 0.0
    %2151 = vmatprep.subr.mxu0 0.0
    %2152 = vmatpush1.msra.mxu0 0.0
    %2153 = vmatprep.subr.mxu0 0.0
    %2154 = vmatpush1.msra.mxu0 0.0
    %2155 = vmatprep.subr.mxu0 0.0
    %2156 = vmatpush1.msra.mxu0 0.0
    %2157 = vmatprep.subr.mxu0 0.0
    %2158 = vmatpush1.msra.mxu0 0.0
    %2159 = vmatprep.subr.mxu0 0.0
    %2160 = vmatpush1.msra.mxu0 0.0
    %2161 = vmatprep.subr.mxu0 0.0
    %2162 = vmatpush1.msra.mxu0 0.0
    %2163 = vmatprep.subr.mxu0 0.0
    %2164 = vmatpush1.msra.mxu0 0.0
    %2165 = vmatprep.subr.mxu0 0.0
    %2166 = vmatpush1.msra.mxu0 0.0
    %2167 = vmatprep.subr.mxu0 0.0
    %2168 = vmatpush1.msra.mxu0 0.0
    %2169 = vmatprep.mubr.f32.mxu0 0.0
    %2170 = vmatmul.mubr.f32.gmra.mrb[0].mxu0 %v2103
    %v2171 = vpop.f32.mrb[0].mxu0
    %v2172 = vadd.f32 0.0, %v2171
    %v2173 = vpop.f32.mrb[0].mxu0
    %2174 = vdwg.mxu0
    %2175 = vst.msk [vmem:[#allocation3 + $0x8] sm:$0x1] %vm430, %v2172
    %2176 = vmatprep.subr.mxu0 0.0
    %2177 = vmatpush1.msra.mxu0 %v276
    %2178 = vmatprep.subr.mxu0 0.0
    %2179 = vmatpush1.msra.mxu0 %v277
    %2180 = vmatprep.subr.mxu0 0.0
    %2181 = vmatpush1.msra.mxu0 %v278
    %2182 = vmatprep.subr.mxu0 0.0
    %2183 = vmatpush1.msra.mxu0 %v279
    %2184 = vmatprep.subr.mxu0 0.0
    %2185 = vmatpush1.msra.mxu0 %v280
    %2186 = vmatprep.subr.mxu0 0.0
    %2187 = vmatpush1.msra.mxu0 0.0
    %2188 = vmatprep.subr.mxu0 0.0
    %2189 = vmatpush1.msra.mxu0 0.0
    %2190 = vmatprep.subr.mxu0 0.0
    %2191 = vmatpush1.msra.mxu0 0.0
    %2192 = vmatprep.subr.mxu0 0.0
    %2193 = vmatpush1.msra.mxu0 0.0
    %2194 = vmatprep.subr.mxu0 0.0
    %2195 = vmatpush1.msra.mxu0 0.0
    %2196 = vmatprep.subr.mxu0 0.0
    %2197 = vmatpush1.msra.mxu0 0.0
    %2198 = vmatprep.subr.mxu0 0.0
    %2199 = vmatpush1.msra.mxu0 0.0
    %2200 = vmatprep.subr.mxu0 0.0
    %2201 = vmatpush1.msra.mxu0 0.0
    %2202 = vmatprep.subr.mxu0 0.0
    %2203 = vmatpush1.msra.mxu0 0.0
    %2204 = vmatprep.subr.mxu0 0.0
    %2205 = vmatpush1.msra.mxu0 0.0
    %2206 = vmatprep.subr.mxu0 0.0
    %2207 = vmatpush1.msra.mxu0 0.0
    %2208 = vmatprep.subr.mxu0 0.0
    %2209 = vmatpush1.msra.mxu0 0.0
    %2210 = vmatprep.subr.mxu0 0.0
    %2211 = vmatpush1.msra.mxu0 0.0
    %2212 = vmatprep.subr.mxu0 0.0
    %2213 = vmatpush1.msra.mxu0 0.0
    %2214 = vmatprep.subr.mxu0 0.0
    %2215 = vmatpush1.msra.mxu0 0.0
    %2216 = vmatprep.subr.mxu0 0.0
    %2217 = vmatpush1.msra.mxu0 0.0
    %2218 = vmatprep.subr.mxu0 0.0
    %2219 = vmatpush1.msra.mxu0 0.0
    %2220 = vmatprep.subr.mxu0 0.0
    %2221 = vmatpush1.msra.mxu0 0.0
    %2222 = vmatprep.subr.mxu0 0.0
    %2223 = vmatpush1.msra.mxu0 0.0
    %2224 = vmatprep.subr.mxu0 0.0
    %2225 = vmatpush1.msra.mxu0 0.0
    %2226 = vmatprep.subr.mxu0 0.0
    %2227 = vmatpush1.msra.mxu0 0.0
    %2228 = vmatprep.subr.mxu0 0.0
    %2229 = vmatpush1.msra.mxu0 0.0
    %2230 = vmatprep.subr.mxu0 0.0
    %2231 = vmatpush1.msra.mxu0 0.0
    %2232 = vmatprep.subr.mxu0 0.0
    %2233 = vmatpush1.msra.mxu0 0.0
    %2234 = vmatprep.subr.mxu0 0.0
    %2235 = vmatpush1.msra.mxu0 0.0
    %2236 = vmatprep.subr.mxu0 0.0
    %2237 = vmatpush1.msra.mxu0 0.0
    %2238 = vmatprep.subr.mxu0 0.0
    %2239 = vmatpush1.msra.mxu0 0.0
    %2240 = vmatprep.mubr.f32.mxu0 0.0
    %2241 = vmatmul.mubr.f32.gmra.mrb[0].mxu0 %v2103
    %v2242 = vpop.f32.mrb[0].mxu0
    %v2243 = vadd.f32 0.0, %v2242
    %v2244 = vpop.f32.mrb[0].mxu0
    %2245 = vdwg.mxu0
    %2246 = vst.msk [vmem:[#allocation4 + $0xb] sm:$0x1] %vm430, %v2243
    %v2247 = vld [vmem:[#allocation2 + $0x9] sm:$0x1]
    %2248 = vmatprep.subr.mxu0 0.0
    %2249 = vmatpush1.msra.mxu0 %v266
    %2250 = vmatprep.subr.mxu0 0.0
    %2251 = vmatpush1.msra.mxu0 %v267
    %2252 = vmatprep.subr.mxu0 0.0
    %2253 = vmatpush1.msra.mxu0 %v268
    %2254 = vmatprep.subr.mxu0 0.0
    %2255 = vmatpush1.msra.mxu0 %v269
    %2256 = vmatprep.subr.mxu0 0.0
    %2257 = vmatpush1.msra.mxu0 %v270
    %2258 = vmatprep.subr.mxu0 0.0
    %2259 = vmatpush1.msra.mxu0 0.0
    %2260 = vmatprep.subr.mxu0 0.0
    %2261 = vmatpush1.msra.mxu0 0.0
    %2262 = vmatprep.subr.mxu0 0.0
    %2263 = vmatpush1.msra.mxu0 0.0
    %2264 = vmatprep.subr.mxu0 0.0
    %2265 = vmatpush1.msra.mxu0 0.0
    %2266 = vmatprep.subr.mxu0 0.0
    %2267 = vmatpush1.msra.mxu0 0.0
    %2268 = vmatprep.subr.mxu0 0.0
    %2269 = vmatpush1.msra.mxu0 0.0
    %2270 = vmatprep.subr.mxu0 0.0
    %2271 = vmatpush1.msra.mxu0 0.0
    %2272 = vmatprep.subr.mxu0 0.0
    %2273 = vmatpush1.msra.mxu0 0.0
    %2274 = vmatprep.subr.mxu0 0.0
    %2275 = vmatpush1.msra.mxu0 0.0
    %2276 = vmatprep.subr.mxu0 0.0
    %2277 = vmatpush1.msra.mxu0 0.0
    %2278 = vmatprep.subr.mxu0 0.0
    %2279 = vmatpush1.msra.mxu0 0.0
    %2280 = vmatprep.subr.mxu0 0.0
    %2281 = vmatpush1.msra.mxu0 0.0
    %2282 = vmatprep.subr.mxu0 0.0
    %2283 = vmatpush1.msra.mxu0 0.0
    %2284 = vmatprep.subr.mxu0 0.0
    %2285 = vmatpush1.msra.mxu0 0.0
    %2286 = vmatprep.subr.mxu0 0.0
    %2287 = vmatpush1.msra.mxu0 0.0
    %2288 = vmatprep.subr.mxu0 0.0
    %2289 = vmatpush1.msra.mxu0 0.0
    %2290 = vmatprep.subr.mxu0 0.0
    %2291 = vmatpush1.msra.mxu0 0.0
    %2292 = vmatprep.subr.mxu0 0.0
    %2293 = vmatpush1.msra.mxu0 0.0
    %2294 = vmatprep.subr.mxu0 0.0
    %2295 = vmatpush1.msra.mxu0 0.0
    %2296 = vmatprep.subr.mxu0 0.0
    %2297 = vmatpush1.msra.mxu0 0.0
    %2298 = vmatprep.subr.mxu0 0.0
    %2299 = vmatpush1.msra.mxu0 0.0
    %2300 = vmatprep.subr.mxu0 0.0
    %2301 = vmatpush1.msra.mxu0 0.0
    %2302 = vmatprep.subr.mxu0 0.0
    %2303 = vmatpush1.msra.mxu0 0.0
    %2304 = vmatprep.subr.mxu0 0.0
    %2305 = vmatpush1.msra.mxu0 0.0
    %2306 = vmatprep.subr.mxu0 0.0
    %2307 = vmatpush1.msra.mxu0 0.0
    %2308 = vmatprep.subr.mxu0 0.0
    %2309 = vmatpush1.msra.mxu0 0.0
    %2310 = vmatprep.subr.mxu0 0.0
    %2311 = vmatpush1.msra.mxu0 0.0
    %2312 = vmatprep.mubr.f32.mxu0 0.0
    %2313 = vmatmul.mubr.f32.gmra.mrb[0].mxu0 %v2103
    %v2314 = vpop.f32.mrb[0].mxu0
    %v2315 = vadd.f32 0.0, %v2314
    %v2316 = vpop.f32.mrb[0].mxu0
    %2317 = vdwg.mxu0
    %v2318 = vadd.f32 %v2247, %v2315
    %v2319 = vtanh.pop %v2318
    %v2321 = vsel %vm261, %v2319, 0
    %2323 = vmatprep.subr.mxu0 0.0
    %2324 = vmatpush1.msra.mxu0 %v271
    %2325 = vmatprep.subr.mxu0 0.0
    %2326 = vmatpush1.msra.mxu0 %v272
    %2327 = vmatprep.subr.mxu0 0.0
    %2328 = vmatpush1.msra.mxu0 %v273
    %2329 = vmatprep.subr.mxu0 0.0
    %2330 = vmatpush1.msra.mxu0 %v274
    %2331 = vmatprep.subr.mxu0 0.0
    %2332 = vmatpush1.msra.mxu0 %v275
    %2333 = vmatprep.subr.mxu0 0.0
    %2334 = vmatpush1.msra.mxu0 0.0
    %2335 = vmatprep.subr.mxu0 0.0
    %2336 = vmatpush1.msra.mxu0 0.0
    %2337 = vmatprep.subr.mxu0 0.0
    %2338 = vmatpush1.msra.mxu0 0.0
    %2339 = vmatprep.subr.mxu0 0.0
    %2340 = vmatpush1.msra.mxu0 0.0
    %2341 = vmatprep.subr.mxu0 0.0
    %2342 = vmatpush1.msra.mxu0 0.0
    %2343 = vmatprep.subr.mxu0 0.0
    %2344 = vmatpush1.msra.mxu0 0.0
    %2345 = vmatprep.subr.mxu0 0.0
    %2346 = vmatpush1.msra.mxu0 0.0
    %2347 = vmatprep.subr.mxu0 0.0
    %2348 = vmatpush1.msra.mxu0 0.0
    %2349 = vmatprep.subr.mxu0 0.0
    %2350 = vmatpush1.msra.mxu0 0.0
    %2351 = vmatprep.subr.mxu0 0.0
    %2352 = vmatpush1.msra.mxu0 0.0
    %2353 = vmatprep.subr.mxu0 0.0
    %2354 = vmatpush1.msra.mxu0 0.0
    %2355 = vmatprep.subr.mxu0 0.0
    %2356 = vmatpush1.msra.mxu0 0.0
    %2357 = vmatprep.subr.mxu0 0.0
    %2358 = vmatpush1.msra.mxu0 0.0
    %2359 = vmatprep.subr.mxu0 0.0
    %2360 = vmatpush1.msra.mxu0 0.0
    %2361 = vmatprep.subr.mxu0 0.0
    %2362 = vmatpush1.msra.mxu0 0.0
    %2363 = vmatprep.subr.mxu0 0.0
    %2364 = vmatpush1.msra.mxu0 0.0
    %2365 = vmatprep.subr.mxu0 0.0
    %2366 = vmatpush1.msra.mxu0 0.0
    %2367 = vmatprep.subr.mxu0 0.0
    %2368 = vmatpush1.msra.mxu0 0.0
    %2369 = vmatprep.subr.mxu0 0.0
    %2370 = vmatpush1.msra.mxu0 0.0
    %2371 = vmatprep.subr.mxu0 0.0
    %2372 = vmatpush1.msra.mxu0 0.0
    %2373 = vmatprep.subr.mxu0 0.0
    %2374 = vmatpush1.msra.mxu0 0.0
    %2375 = vmatprep.subr.mxu0 0.0
    %2376 = vmatpush1.msra.mxu0 0.0
    %2377 = vmatprep.subr.mxu0 0.0
    %2378 = vmatpush1.msra.mxu0 0.0
    %2379 = vmatprep.subr.mxu0 0.0
    %2380 = vmatpush1.msra.mxu0 0.0
    %2381 = vmatprep.subr.mxu0 0.0
    %2382 = vmatpush1.msra.mxu0 0.0
    %2383 = vmatprep.subr.mxu0 0.0
    %2384 = vmatpush1.msra.mxu0 0.0
    %2385 = vmatprep.subr.mxu0 0.0
    %2386 = vmatpush1.msra.mxu0 0.0
    %2387 = vmatprep.mubr.f32.mxu0 0.0
    %2388 = vmatmul.mubr.f32.gmra.mrb[0].mxu0 %v2321
    %v2389 = vpop.f32.mrb[0].mxu0
    %v2390 = vadd.f32 0.0, %v2389
    %v2391 = vpop.f32.mrb[0].mxu0
    %2392 = vdwg.mxu0
    %2393 = vst.msk [vmem:[#allocation3 + $0x9] sm:$0x1] %vm430, %v2390
    %2394 = vmatprep.subr.mxu0 0.0
    %2395 = vmatpush1.msra.mxu0 %v276
    %2396 = vmatprep.subr.mxu0 0.0
    %2397 = vmatpush1.msra.mxu0 %v277
    %2398 = vmatprep.subr.mxu0 0.0
    %2399 = vmatpush1.msra.mxu0 %v278
    %2400 = vmatprep.subr.mxu0 0.0
    %2401 = vmatpush1.msra.mxu0 %v279
    %2402 = vmatprep.subr.mxu0 0.0
    %2403 = vmatpush1.msra.mxu0 %v280
    %2404 = vmatprep.subr.mxu0 0.0
    %2405 = vmatpush1.msra.mxu0 0.0
    %2406 = vmatprep.subr.mxu0 0.0
    %2407 = vmatpush1.msra.mxu0 0.0
    %2408 = vmatprep.subr.mxu0 0.0
    %2409 = vmatpush1.msra.mxu0 0.0
    %2410 = vmatprep.subr.mxu0 0.0
    %2411 = vmatpush1.msra.mxu0 0.0
    %2412 = vmatprep.subr.mxu0 0.0
    %2413 = vmatpush1.msra.mxu0 0.0
    %2414 = vmatprep.subr.mxu0 0.0
    %2415 = vmatpush1.msra.mxu0 0.0
    %2416 = vmatprep.subr.mxu0 0.0
    %2417 = vmatpush1.msra.mxu0 0.0
    %2418 = vmatprep.subr.mxu0 0.0
    %2419 = vmatpush1.msra.mxu0 0.0
    %2420 = vmatprep.subr.mxu0 0.0
    %2421 = vmatpush1.msra.mxu0 0.0
    %2422 = vmatprep.subr.mxu0 0.0
    %2423 = vmatpush1.msra.mxu0 0.0
    %2424 = vmatprep.subr.mxu0 0.0
    %2425 = vmatpush1.msra.mxu0 0.0
    %2426 = vmatprep.subr.mxu0 0.0
    %2427 = vmatpush1.msra.mxu0 0.0
    %2428 = vmatprep.subr.mxu0 0.0
    %2429 = vmatpush1.msra.mxu0 0.0
    %2430 = vmatprep.subr.mxu0 0.0
    %2431 = vmatpush1.msra.mxu0 0.0
    %2432 = vmatprep.subr.mxu0 0.0
    %2433 = vmatpush1.msra.mxu0 0.0
    %2434 = vmatprep.subr.mxu0 0.0
    %2435 = vmatpush1.msra.mxu0 0.0
    %2436 = vmatprep.subr.mxu0 0.0
    %2437 = vmatpush1.msra.mxu0 0.0
    %2438 = vmatprep.subr.mxu0 0.0
    %2439 = vmatpush1.msra.mxu0 0.0
    %2440 = vmatprep.subr.mxu0 0.0
    %2441 = vmatpush1.msra.mxu0 0.0
    %2442 = vmatprep.subr.mxu0 0.0
    %2443 = vmatpush1.msra.mxu0 0.0
    %2444 = vmatprep.subr.mxu0 0.0
    %2445 = vmatpush1.msra.mxu0 0.0
    %2446 = vmatprep.subr.mxu0 0.0
    %2447 = vmatpush1.msra.mxu0 0.0
    %2448 = vmatprep.subr.mxu0 0.0
    %2449 = vmatpush1.msra.mxu0 0.0
    %2450 = vmatprep.subr.mxu0 0.0
    %2451 = vmatpush1.msra.mxu0 0.0
    %2452 = vmatprep.subr.mxu0 0.0
    %2453 = vmatpush1.msra.mxu0 0.0
    %2454 = vmatprep.subr.mxu0 0.0
    %2455 = vmatpush1.msra.mxu0 0.0
    %2456 = vmatprep.subr.mxu0 0.0
    %2457 = vmatpush1.msra.mxu0 0.0
    %2458 = vmatprep.mubr.f32.mxu0 0.0
    %2459 = vmatmul.mubr.f32.gmra.mrb[0].mxu0 %v2321
    %v2460 = vpop.f32.mrb[0].mxu0
    %v2461 = vadd.f32 0.0, %v2460
    %v2462 = vpop.f32.mrb[0].mxu0
    %2463 = vdwg.mxu0
    %2464 = vst.msk [vmem:[#allocation4 + $0xa] sm:$0x1] %vm430, %v2461
    %v2465 = vld [vmem:[#allocation2 + $0xa] sm:$0x1]
    %2466 = vmatprep.subr.mxu0 0.0
    %2467 = vmatpush1.msra.mxu0 %v266
    %2468 = vmatprep.subr.mxu0 0.0
    %2469 = vmatpush1.msra.mxu0 %v267
    %2470 = vmatprep.subr.mxu0 0.0
    %2471 = vmatpush1.msra.mxu0 %v268
    %2472 = vmatprep.subr.mxu0 0.0
    %2473 = vmatpush1.msra.mxu0 %v269
    %2474 = vmatprep.subr.mxu0 0.0
    %2475 = vmatpush1.msra.mxu0 %v270
    %2476 = vmatprep.subr.mxu0 0.0
    %2477 = vmatpush1.msra.mxu0 0.0
    %2478 = vmatprep.subr.mxu0 0.0
    %2479 = vmatpush1.msra.mxu0 0.0
    %2480 = vmatprep.subr.mxu0 0.0
    %2481 = vmatpush1.msra.mxu0 0.0
    %2482 = vmatprep.subr.mxu0 0.0
    %2483 = vmatpush1.msra.mxu0 0.0
    %2484 = vmatprep.subr.mxu0 0.0
    %2485 = vmatpush1.msra.mxu0 0.0
    %2486 = vmatprep.subr.mxu0 0.0
    %2487 = vmatpush1.msra.mxu0 0.0
    %2488 = vmatprep.subr.mxu0 0.0
    %2489 = vmatpush1.msra.mxu0 0.0
    %2490 = vmatprep.subr.mxu0 0.0
    %2491 = vmatpush1.msra.mxu0 0.0
    %2492 = vmatprep.subr.mxu0 0.0
    %2493 = vmatpush1.msra.mxu0 0.0
    %2494 = vmatprep.subr.mxu0 0.0
    %2495 = vmatpush1.msra.mxu0 0.0
    %2496 = vmatprep.subr.mxu0 0.0
    %2497 = vmatpush1.msra.mxu0 0.0
    %2498 = vmatprep.subr.mxu0 0.0
    %2499 = vmatpush1.msra.mxu0 0.0
    %2500 = vmatprep.subr.mxu0 0.0
    %2501 = vmatpush1.msra.mxu0 0.0
    %2502 = vmatprep.subr.mxu0 0.0
    %2503 = vmatpush1.msra.mxu0 0.0
    %2504 = vmatprep.subr.mxu0 0.0
    %2505 = vmatpush1.msra.mxu0 0.0
    %2506 = vmatprep.subr.mxu0 0.0
    %2507 = vmatpush1.msra.mxu0 0.0
    %2508 = vmatprep.subr.mxu0 0.0
    %2509 = vmatpush1.msra.mxu0 0.0
    %2510 = vmatprep.subr.mxu0 0.0
    %2511 = vmatpush1.msra.mxu0 0.0
    %2512 = vmatprep.subr.mxu0 0.0
    %2513 = vmatpush1.msra.mxu0 0.0
    %2514 = vmatprep.subr.mxu0 0.0
    %2515 = vmatpush1.msra.mxu0 0.0
    %2516 = vmatprep.subr.mxu0 0.0
    %2517 = vmatpush1.msra.mxu0 0.0
    %2518 = vmatprep.subr.mxu0 0.0
    %2519 = vmatpush1.msra.mxu0 0.0
    %2520 = vmatprep.subr.mxu0 0.0
    %2521 = vmatpush1.msra.mxu0 0.0
    %2522 = vmatprep.subr.mxu0 0.0
    %2523 = vmatpush1.msra.mxu0 0.0
    %2524 = vmatprep.subr.mxu0 0.0
    %2525 = vmatpush1.msra.mxu0 0.0
    %2526 = vmatprep.subr.mxu0 0.0
    %2527 = vmatpush1.msra.mxu0 0.0
    %2528 = vmatprep.subr.mxu0 0.0
    %2529 = vmatpush1.msra.mxu0 0.0
    %2530 = vmatprep.mubr.f32.mxu0 0.0
    %2531 = vmatmul.mubr.f32.gmra.mrb[0].mxu0 %v2321
    %v2532 = vpop.f32.mrb[0].mxu0
    %v2533 = vadd.f32 0.0, %v2532
    %v2534 = vpop.f32.mrb[0].mxu0
    %2535 = vdwg.mxu0
    %v2536 = vadd.f32 %v2465, %v2533
    %v2537 = vtanh.pop %v2536
    %v2539 = vsel %vm261, %v2537, 0
    %2541 = vmatprep.subr.mxu0 0.0
    %2542 = vmatpush1.msra.mxu0 %v271
    %2543 = vmatprep.subr.mxu0 0.0
    %2544 = vmatpush1.msra.mxu0 %v272
    %2545 = vmatprep.subr.mxu0 0.0
    %2546 = vmatpush1.msra.mxu0 %v273
    %2547 = vmatprep.subr.mxu0 0.0
    %2548 = vmatpush1.msra.mxu0 %v274
    %2549 = vmatprep.subr.mxu0 0.0
    %2550 = vmatpush1.msra.mxu0 %v275
    %2551 = vmatprep.subr.mxu0 0.0
    %2552 = vmatpush1.msra.mxu0 0.0
    %2553 = vmatprep.subr.mxu0 0.0
    %2554 = vmatpush1.msra.mxu0 0.0
    %2555 = vmatprep.subr.mxu0 0.0
    %2556 = vmatpush1.msra.mxu0 0.0
    %2557 = vmatprep.subr.mxu0 0.0
    %2558 = vmatpush1.msra.mxu0 0.0
    %2559 = vmatprep.subr.mxu0 0.0
    %2560 = vmatpush1.msra.mxu0 0.0
    %2561 = vmatprep.subr.mxu0 0.0
    %2562 = vmatpush1.msra.mxu0 0.0
    %2563 = vmatprep.subr.mxu0 0.0
    %2564 = vmatpush1.msra.mxu0 0.0
    %2565 = vmatprep.subr.mxu0 0.0
    %2566 = vmatpush1.msra.mxu0 0.0
    %2567 = vmatprep.subr.mxu0 0.0
    %2568 = vmatpush1.msra.mxu0 0.0
    %2569 = vmatprep.subr.mxu0 0.0
    %2570 = vmatpush1.msra.mxu0 0.0
    %2571 = vmatprep.subr.mxu0 0.0
    %2572 = vmatpush1.msra.mxu0 0.0
    %2573 = vmatprep.subr.mxu0 0.0
    %2574 = vmatpush1.msra.mxu0 0.0
    %2575 = vmatprep.subr.mxu0 0.0
    %2576 = vmatpush1.msra.mxu0 0.0
    %2577 = vmatprep.subr.mxu0 0.0
    %2578 = vmatpush1.msra.mxu0 0.0
    %2579 = vmatprep.subr.mxu0 0.0
    %2580 = vmatpush1.msra.mxu0 0.0
    %2581 = vmatprep.subr.mxu0 0.0
    %2582 = vmatpush1.msra.mxu0 0.0
    %2583 = vmatprep.subr.mxu0 0.0
    %2584 = vmatpush1.msra.mxu0 0.0
    %2585 = vmatprep.subr.mxu0 0.0
    %2586 = vmatpush1.msra.mxu0 0.0
    %2587 = vmatprep.subr.mxu0 0.0
    %2588 = vmatpush1.msra.mxu0 0.0
    %2589 = vmatprep.subr.mxu0 0.0
    %2590 = vmatpush1.msra.mxu0 0.0
    %2591 = vmatprep.subr.mxu0 0.0
    %2592 = vmatpush1.msra.mxu0 0.0
    %2593 = vmatprep.subr.mxu0 0.0
    %2594 = vmatpush1.msra.mxu0 0.0
    %2595 = vmatprep.subr.mxu0 0.0
    %2596 = vmatpush1.msra.mxu0 0.0
    %2597 = vmatprep.subr.mxu0 0.0
    %2598 = vmatpush1.msra.mxu0 0.0
    %2599 = vmatprep.subr.mxu0 0.0
    %2600 = vmatpush1.msra.mxu0 0.0
    %2601 = vmatprep.subr.mxu0 0.0
    %2602 = vmatpush1.msra.mxu0 0.0
    %2603 = vmatprep.subr.mxu0 0.0
    %2604 = vmatpush1.msra.mxu0 0.0
    %2605 = vmatprep.mubr.f32.mxu0 0.0
    %2606 = vmatmul.mubr.f32.gmra.mrb[0].mxu0 %v2539
    %v2607 = vpop.f32.mrb[0].mxu0
    %v2608 = vadd.f32 0.0, %v2607
    %v2609 = vpop.f32.mrb[0].mxu0
    %2610 = vdwg.mxu0
    %2611 = vst.msk [vmem:[#allocation3 + $0xa] sm:$0x1] %vm430, %v2608
    %2612 = vmatprep.subr.mxu0 0.0
    %2613 = vmatpush1.msra.mxu0 %v276
    %2614 = vmatprep.subr.mxu0 0.0
    %2615 = vmatpush1.msra.mxu0 %v277
    %2616 = vmatprep.subr.mxu0 0.0
    %2617 = vmatpush1.msra.mxu0 %v278
    %2618 = vmatprep.subr.mxu0 0.0
    %2619 = vmatpush1.msra.mxu0 %v279
    %2620 = vmatprep.subr.mxu0 0.0
    %2621 = vmatpush1.msra.mxu0 %v280
    %2622 = vmatprep.subr.mxu0 0.0
    %2623 = vmatpush1.msra.mxu0 0.0
    %2624 = vmatprep.subr.mxu0 0.0
    %2625 = vmatpush1.msra.mxu0 0.0
    %2626 = vmatprep.subr.mxu0 0.0
    %2627 = vmatpush1.msra.mxu0 0.0
    %2628 = vmatprep.subr.mxu0 0.0
    %2629 = vmatpush1.msra.mxu0 0.0
    %2630 = vmatprep.subr.mxu0 0.0
    %2631 = vmatpush1.msra.mxu0 0.0
    %2632 = vmatprep.subr.mxu0 0.0
    %2633 = vmatpush1.msra.mxu0 0.0
    %2634 = vmatprep.subr.mxu0 0.0
    %2635 = vmatpush1.msra.mxu0 0.0
    %2636 = vmatprep.subr.mxu0 0.0
    %2637 = vmatpush1.msra.mxu0 0.0
    %2638 = vmatprep.subr.mxu0 0.0
    %2639 = vmatpush1.msra.mxu0 0.0
    %2640 = vmatprep.subr.mxu0 0.0
    %2641 = vmatpush1.msra.mxu0 0.0
    %2642 = vmatprep.subr.mxu0 0.0
    %2643 = vmatpush1.msra.mxu0 0.0
    %2644 = vmatprep.subr.mxu0 0.0
    %2645 = vmatpush1.msra.mxu0 0.0
    %2646 = vmatprep.subr.mxu0 0.0
    %2647 = vmatpush1.msra.mxu0 0.0
    %2648 = vmatprep.subr.mxu0 0.0
    %2649 = vmatpush1.msra.mxu0 0.0
    %2650 = vmatprep.subr.mxu0 0.0
    %2651 = vmatpush1.msra.mxu0 0.0
    %2652 = vmatprep.subr.mxu0 0.0
    %2653 = vmatpush1.msra.mxu0 0.0
    %2654 = vmatprep.subr.mxu0 0.0
    %2655 = vmatpush1.msra.mxu0 0.0
    %2656 = vmatprep.subr.mxu0 0.0
    %2657 = vmatpush1.msra.mxu0 0.0
    %2658 = vmatprep.subr.mxu0 0.0
    %2659 = vmatpush1.msra.mxu0 0.0
    %2660 = vmatprep.subr.mxu0 0.0
    %2661 = vmatpush1.msra.mxu0 0.0
    %2662 = vmatprep.subr.mxu0 0.0
    %2663 = vmatpush1.msra.mxu0 0.0
    %2664 = vmatprep.subr.mxu0 0.0
    %2665 = vmatpush1.msra.mxu0 0.0
    %2666 = vmatprep.subr.mxu0 0.0
    %2667 = vmatpush1.msra.mxu0 0.0
    %2668 = vmatprep.subr.mxu0 0.0
    %2669 = vmatpush1.msra.mxu0 0.0
    %2670 = vmatprep.subr.mxu0 0.0
    %2671 = vmatpush1.msra.mxu0 0.0
    %2672 = vmatprep.subr.mxu0 0.0
    %2673 = vmatpush1.msra.mxu0 0.0
    %2674 = vmatprep.subr.mxu0 0.0
    %2675 = vmatpush1.msra.mxu0 0.0
    %2676 = vmatprep.mubr.f32.mxu0 0.0
    %2677 = vmatmul.mubr.f32.gmra.mrb[0].mxu0 %v2539
    %v2678 = vpop.f32.mrb[0].mxu0
    %v2679 = vadd.f32 0.0, %v2678
    %v2680 = vpop.f32.mrb[0].mxu0
    %2681 = vdwg.mxu0
    %2682 = vst.msk [vmem:[#allocation4 + $0x9] sm:$0x1] %vm430, %v2679
    %v2683 = vld [vmem:[#allocation2 + $0xb] sm:$0x1]
    %2684 = vmatprep.subr.mxu0 0.0
    %2685 = vmatpush1.msra.mxu0 %v266
    %2686 = vmatprep.subr.mxu0 0.0
    %2687 = vmatpush1.msra.mxu0 %v267
    %2688 = vmatprep.subr.mxu0 0.0
    %2689 = vmatpush1.msra.mxu0 %v268
    %2690 = vmatprep.subr.mxu0 0.0
    %2691 = vmatpush1.msra.mxu0 %v269
    %2692 = vmatprep.subr.mxu0 0.0
    %2693 = vmatpush1.msra.mxu0 %v270
    %2694 = vmatprep.subr.mxu0 0.0
    %2695 = vmatpush1.msra.mxu0 0.0
    %2696 = vmatprep.subr.mxu0 0.0
    %2697 = vmatpush1.msra.mxu0 0.0
    %2698 = vmatprep.subr.mxu0 0.0
    %2699 = vmatpush1.msra.mxu0 0.0
    %2700 = vmatprep.subr.mxu0 0.0
    %2701 = vmatpush1.msra.mxu0 0.0
    %2702 = vmatprep.subr.mxu0 0.0
    %2703 = vmatpush1.msra.mxu0 0.0
    %2704 = vmatprep.subr.mxu0 0.0
    %2705 = vmatpush1.msra.mxu0 0.0
    %2706 = vmatprep.subr.mxu0 0.0
    %2707 = vmatpush1.msra.mxu0 0.0
    %2708 = vmatprep.subr.mxu0 0.0
    %2709 = vmatpush1.msra.mxu0 0.0
    %2710 = vmatprep.subr.mxu0 0.0
    %2711 = vmatpush1.msra.mxu0 0.0
    %2712 = vmatprep.subr.mxu0 0.0
    %2713 = vmatpush1.msra.mxu0 0.0
    %2714 = vmatprep.subr.mxu0 0.0
    %2715 = vmatpush1.msra.mxu0 0.0
    %2716 = vmatprep.subr.mxu0 0.0
    %2717 = vmatpush1.msra.mxu0 0.0
    %2718 = vmatprep.subr.mxu0 0.0
    %2719 = vmatpush1.msra.mxu0 0.0
    %2720 = vmatprep.subr.mxu0 0.0
    %2721 = vmatpush1.msra.mxu0 0.0
    %2722 = vmatprep.subr.mxu0 0.0
    %2723 = vmatpush1.msra.mxu0 0.0
    %2724 = vmatprep.subr.mxu0 0.0
    %2725 = vmatpush1.msra.mxu0 0.0
    %2726 = vmatprep.subr.mxu0 0.0
    %2727 = vmatpush1.msra.mxu0 0.0
    %2728 = vmatprep.subr.mxu0 0.0
    %2729 = vmatpush1.msra.mxu0 0.0
    %2730 = vmatprep.subr.mxu0 0.0
    %2731 = vmatpush1.msra.mxu0 0.0
    %2732 = vmatprep.subr.mxu0 0.0
    %2733 = vmatpush1.msra.mxu0 0.0
    %2734 = vmatprep.subr.mxu0 0.0
    %2735 = vmatpush1.msra.mxu0 0.0
    %2736 = vmatprep.subr.mxu0 0.0
    %2737 = vmatpush1.msra.mxu0 0.0
    %2738 = vmatprep.subr.mxu0 0.0
    %2739 = vmatpush1.msra.mxu0 0.0
    %2740 = vmatprep.subr.mxu0 0.0
    %2741 = vmatpush1.msra.mxu0 0.0
    %2742 = vmatprep.subr.mxu0 0.0
    %2743 = vmatpush1.msra.mxu0 0.0
    %2744 = vmatprep.subr.mxu0 0.0
    %2745 = vmatpush1.msra.mxu0 0.0
    %2746 = vmatprep.subr.mxu0 0.0
    %2747 = vmatpush1.msra.mxu0 0.0
    %2748 = vmatprep.mubr.f32.mxu0 0.0
    %2749 = vmatmul.mubr.f32.gmra.mrb[0].mxu0 %v2539
    %v2750 = vpop.f32.mrb[0].mxu0
    %v2751 = vadd.f32 0.0, %v2750
    %v2752 = vpop.f32.mrb[0].mxu0
    %2753 = vdwg.mxu0
    %v2754 = vadd.f32 %v2683, %v2751
    %v2755 = vtanh.pop %v2754
    %v2757 = vsel %vm261, %v2755, 0
    %2759 = vmatprep.subr.mxu0 0.0
    %2760 = vmatpush1.msra.mxu0 %v271
    %2761 = vmatprep.subr.mxu0 0.0
    %2762 = vmatpush1.msra.mxu0 %v272
    %2763 = vmatprep.subr.mxu0 0.0
    %2764 = vmatpush1.msra.mxu0 %v273
    %2765 = vmatprep.subr.mxu0 0.0
    %2766 = vmatpush1.msra.mxu0 %v274
    %2767 = vmatprep.subr.mxu0 0.0
    %2768 = vmatpush1.msra.mxu0 %v275
    %2769 = vmatprep.subr.mxu0 0.0
    %2770 = vmatpush1.msra.mxu0 0.0
    %2771 = vmatprep.subr.mxu0 0.0
    %2772 = vmatpush1.msra.mxu0 0.0
    %2773 = vmatprep.subr.mxu0 0.0
    %2774 = vmatpush1.msra.mxu0 0.0
    %2775 = vmatprep.subr.mxu0 0.0
    %2776 = vmatpush1.msra.mxu0 0.0
    %2777 = vmatprep.subr.mxu0 0.0
    %2778 = vmatpush1.msra.mxu0 0.0
    %2779 = vmatprep.subr.mxu0 0.0
    %2780 = vmatpush1.msra.mxu0 0.0
    %2781 = vmatprep.subr.mxu0 0.0
    %2782 = vmatpush1.msra.mxu0 0.0
    %2783 = vmatprep.subr.mxu0 0.0
    %2784 = vmatpush1.msra.mxu0 0.0
    %2785 = vmatprep.subr.mxu0 0.0
    %2786 = vmatpush1.msra.mxu0 0.0
    %2787 = vmatprep.subr.mxu0 0.0
    %2788 = vmatpush1.msra.mxu0 0.0
    %2789 = vmatprep.subr.mxu0 0.0
    %2790 = vmatpush1.msra.mxu0 0.0
    %2791 = vmatprep.subr.mxu0 0.0
    %2792 = vmatpush1.msra.mxu0 0.0
    %2793 = vmatprep.subr.mxu0 0.0
    %2794 = vmatpush1.msra.mxu0 0.0
    %2795 = vmatprep.subr.mxu0 0.0
    %2796 = vmatpush1.msra.mxu0 0.0
    %2797 = vmatprep.subr.mxu0 0.0
    %2798 = vmatpush1.msra.mxu0 0.0
    %2799 = vmatprep.subr.mxu0 0.0
    %2800 = vmatpush1.msra.mxu0 0.0
    %2801 = vmatprep.subr.mxu0 0.0
    %2802 = vmatpush1.msra.mxu0 0.0
    %2803 = vmatprep.subr.mxu0 0.0
    %2804 = vmatpush1.msra.mxu0 0.0
    %2805 = vmatprep.subr.mxu0 0.0
    %2806 = vmatpush1.msra.mxu0 0.0
    %2807 = vmatprep.subr.mxu0 0.0
    %2808 = vmatpush1.msra.mxu0 0.0
    %2809 = vmatprep.subr.mxu0 0.0
    %2810 = vmatpush1.msra.mxu0 0.0
    %2811 = vmatprep.subr.mxu0 0.0
    %2812 = vmatpush1.msra.mxu0 0.0
    %2813 = vmatprep.subr.mxu0 0.0
    %2814 = vmatpush1.msra.mxu0 0.0
    %2815 = vmatprep.subr.mxu0 0.0
    %2816 = vmatpush1.msra.mxu0 0.0
    %2817 = vmatprep.subr.mxu0 0.0
    %2818 = vmatpush1.msra.mxu0 0.0
    %2819 = vmatprep.subr.mxu0 0.0
    %2820 = vmatpush1.msra.mxu0 0.0
    %2821 = vmatprep.subr.mxu0 0.0
    %2822 = vmatpush1.msra.mxu0 0.0
    %2823 = vmatprep.mubr.f32.mxu0 0.0
    %2824 = vmatmul.mubr.f32.gmra.mrb[0].mxu0 %v2757
    %v2825 = vpop.f32.mrb[0].mxu0
    %v2826 = vadd.f32 0.0, %v2825
    %v2827 = vpop.f32.mrb[0].mxu0
    %2828 = vdwg.mxu0
    %2829 = vst.msk [vmem:[#allocation3 + $0xb] sm:$0x1] %vm430, %v2826
    %2830 = vmatprep.subr.mxu0 0.0
    %2831 = vmatpush1.msra.mxu0 %v276
    %2832 = vmatprep.subr.mxu0 0.0
    %2833 = vmatpush1.msra.mxu0 %v277
    %2834 = vmatprep.subr.mxu0 0.0
    %2835 = vmatpush1.msra.mxu0 %v278
    %2836 = vmatprep.subr.mxu0 0.0
    %2837 = vmatpush1.msra.mxu0 %v279
    %2838 = vmatprep.subr.mxu0 0.0
    %2839 = vmatpush1.msra.mxu0 %v280
    %2840 = vmatprep.subr.mxu0 0.0
    %2841 = vmatpush1.msra.mxu0 0.0
    %2842 = vmatprep.subr.mxu0 0.0
    %2843 = vmatpush1.msra.mxu0 0.0
    %2844 = vmatprep.subr.mxu0 0.0
    %2845 = vmatpush1.msra.mxu0 0.0
    %2846 = vmatprep.subr.mxu0 0.0
    %2847 = vmatpush1.msra.mxu0 0.0
    %2848 = vmatprep.subr.mxu0 0.0
    %2849 = vmatpush1.msra.mxu0 0.0
    %2850 = vmatprep.subr.mxu0 0.0
    %2851 = vmatpush1.msra.mxu0 0.0
    %2852 = vmatprep.subr.mxu0 0.0
    %2853 = vmatpush1.msra.mxu0 0.0
    %2854 = vmatprep.subr.mxu0 0.0
    %2855 = vmatpush1.msra.mxu0 0.0
    %2856 = vmatprep.subr.mxu0 0.0
    %2857 = vmatpush1.msra.mxu0 0.0
    %2858 = vmatprep.subr.mxu0 0.0
    %2859 = vmatpush1.msra.mxu0 0.0
    %2860 = vmatprep.subr.mxu0 0.0
    %2861 = vmatpush1.msra.mxu0 0.0
    %2862 = vmatprep.subr.mxu0 0.0
    %2863 = vmatpush1.msra.mxu0 0.0
    %2864 = vmatprep.subr.mxu0 0.0
    %2865 = vmatpush1.msra.mxu0 0.0
    %2866 = vmatprep.subr.mxu0 0.0
    %2867 = vmatpush1.msra.mxu0 0.0
    %2868 = vmatprep.subr.mxu0 0.0
    %2869 = vmatpush1.msra.mxu0 0.0
    %2870 = vmatprep.subr.mxu0 0.0
    %2871 = vmatpush1.msra.mxu0 0.0
    %2872 = vmatprep.subr.mxu0 0.0
    %2873 = vmatpush1.msra.mxu0 0.0
    %2874 = vmatprep.subr.mxu0 0.0
    %2875 = vmatpush1.msra.mxu0 0.0
    %2876 = vmatprep.subr.mxu0 0.0
    %2877 = vmatpush1.msra.mxu0 0.0
    %2878 = vmatprep.subr.mxu0 0.0
    %2879 = vmatpush1.msra.mxu0 0.0
    %2880 = vmatprep.subr.mxu0 0.0
    %2881 = vmatpush1.msra.mxu0 0.0
    %2882 = vmatprep.subr.mxu0 0.0
    %2883 = vmatpush1.msra.mxu0 0.0
    %2884 = vmatprep.subr.mxu0 0.0
    %2885 = vmatpush1.msra.mxu0 0.0
    %2886 = vmatprep.subr.mxu0 0.0
    %2887 = vmatpush1.msra.mxu0 0.0
    %2888 = vmatprep.subr.mxu0 0.0
    %2889 = vmatpush1.msra.mxu0 0.0
    %2890 = vmatprep.subr.mxu0 0.0
    %2891 = vmatpush1.msra.mxu0 0.0
    %2892 = vmatprep.subr.mxu0 0.0
    %2893 = vmatpush1.msra.mxu0 0.0
    %2894 = vmatprep.mubr.f32.mxu0 0.0
    %2895 = vmatmul.mubr.f32.gmra.mrb[0].mxu0 %v2757
    %v2896 = vpop.f32.mrb[0].mxu0
    %v2897 = vadd.f32 0.0, %v2896
    %v2898 = vpop.f32.mrb[0].mxu0
    %2899 = vdwg.mxu0
    %2900 = vst.msk [vmem:[#allocation4 + $0x8] sm:$0x1] %vm430, %v2897
    %v2901 = vld [vmem:[#allocation2 + $0xc] sm:$0x1]
    %2902 = vmatprep.subr.mxu0 0.0
    %2903 = vmatpush1.msra.mxu0 %v266
    %2904 = vmatprep.subr.mxu0 0.0
    %2905 = vmatpush1.msra.mxu0 %v267
    %2906 = vmatprep.subr.mxu0 0.0
    %2907 = vmatpush1.msra.mxu0 %v268
    %2908 = vmatprep.subr.mxu0 0.0
    %2909 = vmatpush1.msra.mxu0 %v269
    %2910 = vmatprep.subr.mxu0 0.0
    %2911 = vmatpush1.msra.mxu0 %v270
    %2912 = vmatprep.subr.mxu0 0.0
    %2913 = vmatpush1.msra.mxu0 0.0
    %2914 = vmatprep.subr.mxu0 0.0
    %2915 = vmatpush1.msra.mxu0 0.0
    %2916 = vmatprep.subr.mxu0 0.0
    %2917 = vmatpush1.msra.mxu0 0.0
    %2918 = vmatprep.subr.mxu0 0.0
    %2919 = vmatpush1.msra.mxu0 0.0
    %2920 = vmatprep.subr.mxu0 0.0
    %2921 = vmatpush1.msra.mxu0 0.0
    %2922 = vmatprep.subr.mxu0 0.0
    %2923 = vmatpush1.msra.mxu0 0.0
    %2924 = vmatprep.subr.mxu0 0.0
    %2925 = vmatpush1.msra.mxu0 0.0
    %2926 = vmatprep.subr.mxu0 0.0
    %2927 = vmatpush1.msra.mxu0 0.0
    %2928 = vmatprep.subr.mxu0 0.0
    %2929 = vmatpush1.msra.mxu0 0.0
    %2930 = vmatprep.subr.mxu0 0.0
    %2931 = vmatpush1.msra.mxu0 0.0
    %2932 = vmatprep.subr.mxu0 0.0
    %2933 = vmatpush1.msra.mxu0 0.0
    %2934 = vmatprep.subr.mxu0 0.0
    %2935 = vmatpush1.msra.mxu0 0.0
    %2936 = vmatprep.subr.mxu0 0.0
    %2937 = vmatpush1.msra.mxu0 0.0
    %2938 = vmatprep.subr.mxu0 0.0
    %2939 = vmatpush1.msra.mxu0 0.0
    %2940 = vmatprep.subr.mxu0 0.0
    %2941 = vmatpush1.msra.mxu0 0.0
    %2942 = vmatprep.subr.mxu0 0.0
    %2943 = vmatpush1.msra.mxu0 0.0
    %2944 = vmatprep.subr.mxu0 0.0
    %2945 = vmatpush1.msra.mxu0 0.0
    %2946 = vmatprep.subr.mxu0 0.0
    %2947 = vmatpush1.msra.mxu0 0.0
    %2948 = vmatprep.subr.mxu0 0.0
    %2949 = vmatpush1.msra.mxu0 0.0
    %2950 = vmatprep.subr.mxu0 0.0
    %2951 = vmatpush1.msra.mxu0 0.0
    %2952 = vmatprep.subr.mxu0 0.0
    %2953 = vmatpush1.msra.mxu0 0.0
    %2954 = vmatprep.subr.mxu0 0.0
    %2955 = vmatpush1.msra.mxu0 0.0
    %2956 = vmatprep.subr.mxu0 0.0
    %2957 = vmatpush1.msra.mxu0 0.0
    %2958 = vmatprep.subr.mxu0 0.0
    %2959 = vmatpush1.msra.mxu0 0.0
    %2960 = vmatprep.subr.mxu0 0.0
    %2961 = vmatpush1.msra.mxu0 0.0
    %2962 = vmatprep.subr.mxu0 0.0
    %2963 = vmatpush1.msra.mxu0 0.0
    %2964 = vmatprep.subr.mxu0 0.0
    %2965 = vmatpush1.msra.mxu0 0.0
    %2966 = vmatprep.mubr.f32.mxu0 0.0
    %2967 = vmatmul.mubr.f32.gmra.mrb[0].mxu0 %v2757
    %v2968 = vpop.f32.mrb[0].mxu0
    %v2969 = vadd.f32 0.0, %v2968
    %v2970 = vpop.f32.mrb[0].mxu0
    %2971 = vdwg.mxu0
    %v2972 = vadd.f32 %v2901, %v2969
    %v2973 = vtanh.pop %v2972
    %v2975 = vsel %vm261, %v2973, 0
    %2977 = vmatprep.subr.mxu0 0.0
    %2978 = vmatpush1.msra.mxu0 %v271
    %2979 = vmatprep.subr.mxu0 0.0
    %2980 = vmatpush1.msra.mxu0 %v272
    %2981 = vmatprep.subr.mxu0 0.0
    %2982 = vmatpush1.msra.mxu0 %v273
    %2983 = vmatprep.subr.mxu0 0.0
    %2984 = vmatpush1.msra.mxu0 %v274
    %2985 = vmatprep.subr.mxu0 0.0
    %2986 = vmatpush1.msra.mxu0 %v275
    %2987 = vmatprep.subr.mxu0 0.0
    %2988 = vmatpush1.msra.mxu0 0.0
    %2989 = vmatprep.subr.mxu0 0.0
    %2990 = vmatpush1.msra.mxu0 0.0
    %2991 = vmatprep.subr.mxu0 0.0
    %2992 = vmatpush1.msra.mxu0 0.0
    %2993 = vmatprep.subr.mxu0 0.0
    %2994 = vmatpush1.msra.mxu0 0.0
    %2995 = vmatprep.subr.mxu0 0.0
    %2996 = vmatpush1.msra.mxu0 0.0
    %2997 = vmatprep.subr.mxu0 0.0
    %2998 = vmatpush1.msra.mxu0 0.0
    %2999 = vmatprep.subr.mxu0 0.0
    %3000 = vmatpush1.msra.mxu0 0.0
    %3001 = vmatprep.subr.mxu0 0.0
    %3002 = vmatpush1.msra.mxu0 0.0
    %3003 = vmatprep.subr.mxu0 0.0
    %3004 = vmatpush1.msra.mxu0 0.0
    %3005 = vmatprep.subr.mxu0 0.0
    %3006 = vmatpush1.msra.mxu0 0.0
    %3007 = vmatprep.subr.mxu0 0.0
    %3008 = vmatpush1.msra.mxu0 0.0
    %3009 = vmatprep.subr.mxu0 0.0
    %3010 = vmatpush1.msra.mxu0 0.0
    %3011 = vmatprep.subr.mxu0 0.0
    %3012 = vmatpush1.msra.mxu0 0.0
    %3013 = vmatprep.subr.mxu0 0.0
    %3014 = vmatpush1.msra.mxu0 0.0
    %3015 = vmatprep.subr.mxu0 0.0
    %3016 = vmatpush1.msra.mxu0 0.0
    %3017 = vmatprep.subr.mxu0 0.0
    %3018 = vmatpush1.msra.mxu0 0.0
    %3019 = vmatprep.subr.mxu0 0.0
    %3020 = vmatpush1.msra.mxu0 0.0
    %3021 = vmatprep.subr.mxu0 0.0
    %3022 = vmatpush1.msra.mxu0 0.0
    %3023 = vmatprep.subr.mxu0 0.0
    %3024 = vmatpush1.msra.mxu0 0.0
    %3025 = vmatprep.subr.mxu0 0.0
    %3026 = vmatpush1.msra.mxu0 0.0
    %3027 = vmatprep.subr.mxu0 0.0
    %3028 = vmatpush1.msra.mxu0 0.0
    %3029 = vmatprep.subr.mxu0 0.0
    %3030 = vmatpush1.msra.mxu0 0.0
    %3031 = vmatprep.subr.mxu0 0.0
    %3032 = vmatpush1.msra.mxu0 0.0
    %3033 = vmatprep.subr.mxu0 0.0
    %3034 = vmatpush1.msra.mxu0 0.0
    %3035 = vmatprep.subr.mxu0 0.0
    %3036 = vmatpush1.msra.mxu0 0.0
    %3037 = vmatprep.subr.mxu0 0.0
    %3038 = vmatpush1.msra.mxu0 0.0
    %3039 = vmatprep.subr.mxu0 0.0
    %3040 = vmatpush1.msra.mxu0 0.0
    %3041 = vmatprep.mubr.f32.mxu0 0.0
    %3042 = vmatmul.mubr.f32.gmra.mrb[0].mxu0 %v2975
    %v3043 = vpop.f32.mrb[0].mxu0
    %v3044 = vadd.f32 0.0, %v3043
    %v3045 = vpop.f32.mrb[0].mxu0
    %3046 = vdwg.mxu0
    %3047 = vst.msk [vmem:[#allocation3 + $0xc] sm:$0x1] %vm430, %v3044
    %3048 = vmatprep.subr.mxu0 0.0
    %3049 = vmatpush1.msra.mxu0 %v276
    %3050 = vmatprep.subr.mxu0 0.0
    %3051 = vmatpush1.msra.mxu0 %v277
    %3052 = vmatprep.subr.mxu0 0.0
    %3053 = vmatpush1.msra.mxu0 %v278
    %3054 = vmatprep.subr.mxu0 0.0
    %3055 = vmatpush1.msra.mxu0 %v279
    %3056 = vmatprep.subr.mxu0 0.0
    %3057 = vmatpush1.msra.mxu0 %v280
    %3058 = vmatprep.subr.mxu0 0.0
    %3059 = vmatpush1.msra.mxu0 0.0
    %3060 = vmatprep.subr.mxu0 0.0
    %3061 = vmatpush1.msra.mxu0 0.0
    %3062 = vmatprep.subr.mxu0 0.0
    %3063 = vmatpush1.msra.mxu0 0.0
    %3064 = vmatprep.subr.mxu0 0.0
    %3065 = vmatpush1.msra.mxu0 0.0
    %3066 = vmatprep.subr.mxu0 0.0
    %3067 = vmatpush1.msra.mxu0 0.0
    %3068 = vmatprep.subr.mxu0 0.0
    %3069 = vmatpush1.msra.mxu0 0.0
    %3070 = vmatprep.subr.mxu0 0.0
    %3071 = vmatpush1.msra.mxu0 0.0
    %3072 = vmatprep.subr.mxu0 0.0
    %3073 = vmatpush1.msra.mxu0 0.0
    %3074 = vmatprep.subr.mxu0 0.0
    %3075 = vmatpush1.msra.mxu0 0.0
    %3076 = vmatprep.subr.mxu0 0.0
    %3077 = vmatpush1.msra.mxu0 0.0
    %3078 = vmatprep.subr.mxu0 0.0
    %3079 = vmatpush1.msra.mxu0 0.0
    %3080 = vmatprep.subr.mxu0 0.0
    %3081 = vmatpush1.msra.mxu0 0.0
    %3082 = vmatprep.subr.mxu0 0.0
    %3083 = vmatpush1.msra.mxu0 0.0
    %3084 = vmatprep.subr.mxu0 0.0
    %3085 = vmatpush1.msra.mxu0 0.0
    %3086 = vmatprep.subr.mxu0 0.0
    %3087 = vmatpush1.msra.mxu0 0.0
    %3088 = vmatprep.subr.mxu0 0.0
    %3089 = vmatpush1.msra.mxu0 0.0
    %3090 = vmatprep.subr.mxu0 0.0
    %3091 = vmatpush1.msra.mxu0 0.0
    %3092 = vmatprep.subr.mxu0 0.0
    %3093 = vmatpush1.msra.mxu0 0.0
    %3094 = vmatprep.subr.mxu0 0.0
    %3095 = vmatpush1.msra.mxu0 0.0
    %3096 = vmatprep.subr.mxu0 0.0
    %3097 = vmatpush1.msra.mxu0 0.0
    %3098 = vmatprep.subr.mxu0 0.0
    %3099 = vmatpush1.msra.mxu0 0.0
    %3100 = vmatprep.subr.mxu0 0.0
    %3101 = vmatpush1.msra.mxu0 0.0
    %3102 = vmatprep.subr.mxu0 0.0
    %3103 = vmatpush1.msra.mxu0 0.0
    %3104 = vmatprep.subr.mxu0 0.0
    %3105 = vmatpush1.msra.mxu0 0.0
    %3106 = vmatprep.subr.mxu0 0.0
    %3107 = vmatpush1.msra.mxu0 0.0
    %3108 = vmatprep.subr.mxu0 0.0
    %3109 = vmatpush1.msra.mxu0 0.0
    %3110 = vmatprep.subr.mxu0 0.0
    %3111 = vmatpush1.msra.mxu0 0.0
    %3112 = vmatprep.mubr.f32.mxu0 0.0
    %3113 = vmatmul.mubr.f32.gmra.mrb[0].mxu0 %v2975
    %v3114 = vpop.f32.mrb[0].mxu0
    %v3115 = vadd.f32 0.0, %v3114
    %v3116 = vpop.f32.mrb[0].mxu0
    %3117 = vdwg.mxu0
    %3118 = vst.msk [vmem:[#allocation4 + $0x7] sm:$0x1] %vm430, %v3115
    %v3119 = vld [vmem:[#allocation2 + $0xd] sm:$0x1]
    %3120 = vmatprep.subr.mxu0 0.0
    %3121 = vmatpush1.msra.mxu0 %v266
    %3122 = vmatprep.subr.mxu0 0.0
    %3123 = vmatpush1.msra.mxu0 %v267
    %3124 = vmatprep.subr.mxu0 0.0
    %3125 = vmatpush1.msra.mxu0 %v268
    %3126 = vmatprep.subr.mxu0 0.0
    %3127 = vmatpush1.msra.mxu0 %v269
    %3128 = vmatprep.subr.mxu0 0.0
    %3129 = vmatpush1.msra.mxu0 %v270
    %3130 = vmatprep.subr.mxu0 0.0
    %3131 = vmatpush1.msra.mxu0 0.0
    %3132 = vmatprep.subr.mxu0 0.0
    %3133 = vmatpush1.msra.mxu0 0.0
    %3134 = vmatprep.subr.mxu0 0.0
    %3135 = vmatpush1.msra.mxu0 0.0
    %3136 = vmatprep.subr.mxu0 0.0
    %3137 = vmatpush1.msra.mxu0 0.0
    %3138 = vmatprep.subr.mxu0 0.0
    %3139 = vmatpush1.msra.mxu0 0.0
    %3140 = vmatprep.subr.mxu0 0.0
    %3141 = vmatpush1.msra.mxu0 0.0
    %3142 = vmatprep.subr.mxu0 0.0
    %3143 = vmatpush1.msra.mxu0 0.0
    %3144 = vmatprep.subr.mxu0 0.0
    %3145 = vmatpush1.msra.mxu0 0.0
    %3146 = vmatprep.subr.mxu0 0.0
    %3147 = vmatpush1.msra.mxu0 0.0
    %3148 = vmatprep.subr.mxu0 0.0
    %3149 = vmatpush1.msra.mxu0 0.0
    %3150 = vmatprep.subr.mxu0 0.0
    %3151 = vmatpush1.msra.mxu0 0.0
    %3152 = vmatprep.subr.mxu0 0.0
    %3153 = vmatpush1.msra.mxu0 0.0
    %3154 = vmatprep.subr.mxu0 0.0
    %3155 = vmatpush1.msra.mxu0 0.0
    %3156 = vmatprep.subr.mxu0 0.0
    %3157 = vmatpush1.msra.mxu0 0.0
    %3158 = vmatprep.subr.mxu0 0.0
    %3159 = vmatpush1.msra.mxu0 0.0
    %3160 = vmatprep.subr.mxu0 0.0
    %3161 = vmatpush1.msra.mxu0 0.0
    %3162 = vmatprep.subr.mxu0 0.0
    %3163 = vmatpush1.msra.mxu0 0.0
    %3164 = vmatprep.subr.mxu0 0.0
    %3165 = vmatpush1.msra.mxu0 0.0
    %3166 = vmatprep.subr.mxu0 0.0
    %3167 = vmatpush1.msra.mxu0 0.0
    %3168 = vmatprep.subr.mxu0 0.0
    %3169 = vmatpush1.msra.mxu0 0.0
    %3170 = vmatprep.subr.mxu0 0.0
    %3171 = vmatpush1.msra.mxu0 0.0
    %3172 = vmatprep.subr.mxu0 0.0
    %3173 = vmatpush1.msra.mxu0 0.0
    %3174 = vmatprep.subr.mxu0 0.0
    %3175 = vmatpush1.msra.mxu0 0.0
    %3176 = vmatprep.subr.mxu0 0.0
    %3177 = vmatpush1.msra.mxu0 0.0
    %3178 = vmatprep.subr.mxu0 0.0
    %3179 = vmatpush1.msra.mxu0 0.0
    %3180 = vmatprep.subr.mxu0 0.0
    %3181 = vmatpush1.msra.mxu0 0.0
    %3182 = vmatprep.subr.mxu0 0.0
    %3183 = vmatpush1.msra.mxu0 0.0
    %3184 = vmatprep.mubr.f32.mxu0 0.0
    %3185 = vmatmul.mubr.f32.gmra.mrb[0].mxu0 %v2975
    %v3186 = vpop.f32.mrb[0].mxu0
    %v3187 = vadd.f32 0.0, %v3186
    %v3188 = vpop.f32.mrb[0].mxu0
    %3189 = vdwg.mxu0
    %v3190 = vadd.f32 %v3119, %v3187
    %v3191 = vtanh.pop %v3190
    %v3193 = vsel %vm261, %v3191, 0
    %3195 = vmatprep.subr.mxu0 0.0
    %3196 = vmatpush1.msra.mxu0 %v271
    %3197 = vmatprep.subr.mxu0 0.0
    %3198 = vmatpush1.msra.mxu0 %v272
    %3199 = vmatprep.subr.mxu0 0.0
    %3200 = vmatpush1.msra.mxu0 %v273
    %3201 = vmatprep.subr.mxu0 0.0
    %3202 = vmatpush1.msra.mxu0 %v274
    %3203 = vmatprep.subr.mxu0 0.0
    %3204 = vmatpush1.msra.mxu0 %v275
    %3205 = vmatprep.subr.mxu0 0.0
    %3206 = vmatpush1.msra.mxu0 0.0
    %3207 = vmatprep.subr.mxu0 0.0
    %3208 = vmatpush1.msra.mxu0 0.0
    %3209 = vmatprep.subr.mxu0 0.0
    %3210 = vmatpush1.msra.mxu0 0.0
    %3211 = vmatprep.subr.mxu0 0.0
    %3212 = vmatpush1.msra.mxu0 0.0
    %3213 = vmatprep.subr.mxu0 0.0
    %3214 = vmatpush1.msra.mxu0 0.0
    %3215 = vmatprep.subr.mxu0 0.0
    %3216 = vmatpush1.msra.mxu0 0.0
    %3217 = vmatprep.subr.mxu0 0.0
    %3218 = vmatpush1.msra.mxu0 0.0
    %3219 = vmatprep.subr.mxu0 0.0
    %3220 = vmatpush1.msra.mxu0 0.0
    %3221 = vmatprep.subr.mxu0 0.0
    %3222 = vmatpush1.msra.mxu0 0.0
    %3223 = vmatprep.subr.mxu0 0.0
    %3224 = vmatpush1.msra.mxu0 0.0
    %3225 = vmatprep.subr.mxu0 0.0
    %3226 = vmatpush1.msra.mxu0 0.0
    %3227 = vmatprep.subr.mxu0 0.0
    %3228 = vmatpush1.msra.mxu0 0.0
    %3229 = vmatprep.subr.mxu0 0.0
    %3230 = vmatpush1.msra.mxu0 0.0
    %3231 = vmatprep.subr.mxu0 0.0
    %3232 = vmatpush1.msra.mxu0 0.0
    %3233 = vmatprep.subr.mxu0 0.0
    %3234 = vmatpush1.msra.mxu0 0.0
    %3235 = vmatprep.subr.mxu0 0.0
    %3236 = vmatpush1.msra.mxu0 0.0
    %3237 = vmatprep.subr.mxu0 0.0
    %3238 = vmatpush1.msra.mxu0 0.0
    %3239 = vmatprep.subr.mxu0 0.0
    %3240 = vmatpush1.msra.mxu0 0.0
    %3241 = vmatprep.subr.mxu0 0.0
    %3242 = vmatpush1.msra.mxu0 0.0
    %3243 = vmatprep.subr.mxu0 0.0
    %3244 = vmatpush1.msra.mxu0 0.0
    %3245 = vmatprep.subr.mxu0 0.0
    %3246 = vmatpush1.msra.mxu0 0.0
    %3247 = vmatprep.subr.mxu0 0.0
    %3248 = vmatpush1.msra.mxu0 0.0
    %3249 = vmatprep.subr.mxu0 0.0
    %3250 = vmatpush1.msra.mxu0 0.0
    %3251 = vmatprep.subr.mxu0 0.0
    %3252 = vmatpush1.msra.mxu0 0.0
    %3253 = vmatprep.subr.mxu0 0.0
    %3254 = vmatpush1.msra.mxu0 0.0
    %3255 = vmatprep.subr.mxu0 0.0
    %3256 = vmatpush1.msra.mxu0 0.0
    %3257 = vmatprep.subr.mxu0 0.0
    %3258 = vmatpush1.msra.mxu0 0.0
    %3259 = vmatprep.mubr.f32.mxu0 0.0
    %3260 = vmatmul.mubr.f32.gmra.mrb[0].mxu0 %v3193
    %v3261 = vpop.f32.mrb[0].mxu0
    %v3262 = vadd.f32 0.0, %v3261
    %v3263 = vpop.f32.mrb[0].mxu0
    %3264 = vdwg.mxu0
    %3265 = vst.msk [vmem:[#allocation3 + $0xd] sm:$0x1] %vm430, %v3262
    %3266 = vmatprep.subr.mxu0 0.0
    %3267 = vmatpush1.msra.mxu0 %v276
    %3268 = vmatprep.subr.mxu0 0.0
    %3269 = vmatpush1.msra.mxu0 %v277
    %3270 = vmatprep.subr.mxu0 0.0
    %3271 = vmatpush1.msra.mxu0 %v278
    %3272 = vmatprep.subr.mxu0 0.0
    %3273 = vmatpush1.msra.mxu0 %v279
    %3274 = vmatprep.subr.mxu0 0.0
    %3275 = vmatpush1.msra.mxu0 %v280
    %3276 = vmatprep.subr.mxu0 0.0
    %3277 = vmatpush1.msra.mxu0 0.0
    %3278 = vmatprep.subr.mxu0 0.0
    %3279 = vmatpush1.msra.mxu0 0.0
    %3280 = vmatprep.subr.mxu0 0.0
    %3281 = vmatpush1.msra.mxu0 0.0
    %3282 = vmatprep.subr.mxu0 0.0
    %3283 = vmatpush1.msra.mxu0 0.0
    %3284 = vmatprep.subr.mxu0 0.0
    %3285 = vmatpush1.msra.mxu0 0.0
    %3286 = vmatprep.subr.mxu0 0.0
    %3287 = vmatpush1.msra.mxu0 0.0
    %3288 = vmatprep.subr.mxu0 0.0
    %3289 = vmatpush1.msra.mxu0 0.0
    %3290 = vmatprep.subr.mxu0 0.0
    %3291 = vmatpush1.msra.mxu0 0.0
    %3292 = vmatprep.subr.mxu0 0.0
    %3293 = vmatpush1.msra.mxu0 0.0
    %3294 = vmatprep.subr.mxu0 0.0
    %3295 = vmatpush1.msra.mxu0 0.0
    %3296 = vmatprep.subr.mxu0 0.0
    %3297 = vmatpush1.msra.mxu0 0.0
    %3298 = vmatprep.subr.mxu0 0.0
    %3299 = vmatpush1.msra.mxu0 0.0
    %3300 = vmatprep.subr.mxu0 0.0
    %3301 = vmatpush1.msra.mxu0 0.0
    %3302 = vmatprep.subr.mxu0 0.0
    %3303 = vmatpush1.msra.mxu0 0.0
    %3304 = vmatprep.subr.mxu0 0.0
    %3305 = vmatpush1.msra.mxu0 0.0
    %3306 = vmatprep.subr.mxu0 0.0
    %3307 = vmatpush1.msra.mxu0 0.0
    %3308 = vmatprep.subr.mxu0 0.0
    %3309 = vmatpush1.msra.mxu0 0.0
    %3310 = vmatprep.subr.mxu0 0.0
    %3311 = vmatpush1.msra.mxu0 0.0
    %3312 = vmatprep.subr.mxu0 0.0
    %3313 = vmatpush1.msra.mxu0 0.0
    %3314 = vmatprep.subr.mxu0 0.0
    %3315 = vmatpush1.msra.mxu0 0.0
    %3316 = vmatprep.subr.mxu0 0.0
    %3317 = vmatpush1.msra.mxu0 0.0
    %3318 = vmatprep.subr.mxu0 0.0
    %3319 = vmatpush1.msra.mxu0 0.0
    %3320 = vmatprep.subr.mxu0 0.0
    %3321 = vmatpush1.msra.mxu0 0.0
    %3322 = vmatprep.subr.mxu0 0.0
    %3323 = vmatpush1.msra.mxu0 0.0
    %3324 = vmatprep.subr.mxu0 0.0
    %3325 = vmatpush1.msra.mxu0 0.0
    %3326 = vmatprep.subr.mxu0 0.0
    %3327 = vmatpush1.msra.mxu0 0.0
    %3328 = vmatprep.subr.mxu0 0.0
    %3329 = vmatpush1.msra.mxu0 0.0
    %3330 = vmatprep.mubr.f32.mxu0 0.0
    %3331 = vmatmul.mubr.f32.gmra.mrb[0].mxu0 %v3193
    %v3332 = vpop.f32.mrb[0].mxu0
    %v3333 = vadd.f32 0.0, %v3332
    %v3334 = vpop.f32.mrb[0].mxu0
    %3335 = vdwg.mxu0
    %3336 = vst.msk [vmem:[#allocation4 + $0x6] sm:$0x1] %vm430, %v3333
    %v3337 = vld [vmem:[#allocation2 + $0xe] sm:$0x1]
    %3338 = vmatprep.subr.mxu0 0.0
    %3339 = vmatpush1.msra.mxu0 %v266
    %3340 = vmatprep.subr.mxu0 0.0
    %3341 = vmatpush1.msra.mxu0 %v267
    %3342 = vmatprep.subr.mxu0 0.0
    %3343 = vmatpush1.msra.mxu0 %v268
    %3344 = vmatprep.subr.mxu0 0.0
    %3345 = vmatpush1.msra.mxu0 %v269
    %3346 = vmatprep.subr.mxu0 0.0
    %3347 = vmatpush1.msra.mxu0 %v270
    %3348 = vmatprep.subr.mxu0 0.0
    %3349 = vmatpush1.msra.mxu0 0.0
    %3350 = vmatprep.subr.mxu0 0.0
    %3351 = vmatpush1.msra.mxu0 0.0
    %3352 = vmatprep.subr.mxu0 0.0
    %3353 = vmatpush1.msra.mxu0 0.0
    %3354 = vmatprep.subr.mxu0 0.0
    %3355 = vmatpush1.msra.mxu0 0.0
    %3356 = vmatprep.subr.mxu0 0.0
    %3357 = vmatpush1.msra.mxu0 0.0
    %3358 = vmatprep.subr.mxu0 0.0
    %3359 = vmatpush1.msra.mxu0 0.0
    %3360 = vmatprep.subr.mxu0 0.0
    %3361 = vmatpush1.msra.mxu0 0.0
    %3362 = vmatprep.subr.mxu0 0.0
    %3363 = vmatpush1.msra.mxu0 0.0
    %3364 = vmatprep.subr.mxu0 0.0
    %3365 = vmatpush1.msra.mxu0 0.0
    %3366 = vmatprep.subr.mxu0 0.0
    %3367 = vmatpush1.msra.mxu0 0.0
    %3368 = vmatprep.subr.mxu0 0.0
    %3369 = vmatpush1.msra.mxu0 0.0
    %3370 = vmatprep.subr.mxu0 0.0
    %3371 = vmatpush1.msra.mxu0 0.0
    %3372 = vmatprep.subr.mxu0 0.0
    %3373 = vmatpush1.msra.mxu0 0.0
    %3374 = vmatprep.subr.mxu0 0.0
    %3375 = vmatpush1.msra.mxu0 0.0
    %3376 = vmatprep.subr.mxu0 0.0
    %3377 = vmatpush1.msra.mxu0 0.0
    %3378 = vmatprep.subr.mxu0 0.0
    %3379 = vmatpush1.msra.mxu0 0.0
    %3380 = vmatprep.subr.mxu0 0.0
    %3381 = vmatpush1.msra.mxu0 0.0
    %3382 = vmatprep.subr.mxu0 0.0
    %3383 = vmatpush1.msra.mxu0 0.0
    %3384 = vmatprep.subr.mxu0 0.0
    %3385 = vmatpush1.msra.mxu0 0.0
    %3386 = vmatprep.subr.mxu0 0.0
    %3387 = vmatpush1.msra.mxu0 0.0
    %3388 = vmatprep.subr.mxu0 0.0
    %3389 = vmatpush1.msra.mxu0 0.0
    %3390 = vmatprep.subr.mxu0 0.0
    %3391 = vmatpush1.msra.mxu0 0.0
    %3392 = vmatprep.subr.mxu0 0.0
    %3393 = vmatpush1.msra.mxu0 0.0
    %3394 = vmatprep.subr.mxu0 0.0
    %3395 = vmatpush1.msra.mxu0 0.0
    %3396 = vmatprep.subr.mxu0 0.0
    %3397 = vmatpush1.msra.mxu0 0.0
    %3398 = vmatprep.subr.mxu0 0.0
    %3399 = vmatpush1.msra.mxu0 0.0
    %3400 = vmatprep.subr.mxu0 0.0
    %3401 = vmatpush1.msra.mxu0 0.0
    %3402 = vmatprep.mubr.f32.mxu0 0.0
    %3403 = vmatmul.mubr.f32.gmra.mrb[0].mxu0 %v3193
    %v3404 = vpop.f32.mrb[0].mxu0
    %v3405 = vadd.f32 0.0, %v3404
    %v3406 = vpop.f32.mrb[0].mxu0
    %3407 = vdwg.mxu0
    %v3408 = vadd.f32 %v3337, %v3405
    %v3409 = vtanh.pop %v3408
    %v3411 = vsel %vm261, %v3409, 0
    %3413 = vmatprep.subr.mxu0 0.0
    %3414 = vmatpush1.msra.mxu0 %v271
    %3415 = vmatprep.subr.mxu0 0.0
    %3416 = vmatpush1.msra.mxu0 %v272
    %3417 = vmatprep.subr.mxu0 0.0
    %3418 = vmatpush1.msra.mxu0 %v273
    %3419 = vmatprep.subr.mxu0 0.0
    %3420 = vmatpush1.msra.mxu0 %v274
    %3421 = vmatprep.subr.mxu0 0.0
    %3422 = vmatpush1.msra.mxu0 %v275
    %3423 = vmatprep.subr.mxu0 0.0
    %3424 = vmatpush1.msra.mxu0 0.0
    %3425 = vmatprep.subr.mxu0 0.0
    %3426 = vmatpush1.msra.mxu0 0.0
    %3427 = vmatprep.subr.mxu0 0.0
    %3428 = vmatpush1.msra.mxu0 0.0
    %3429 = vmatprep.subr.mxu0 0.0
    %3430 = vmatpush1.msra.mxu0 0.0
    %3431 = vmatprep.subr.mxu0 0.0
    %3432 = vmatpush1.msra.mxu0 0.0
    %3433 = vmatprep.subr.mxu0 0.0
    %3434 = vmatpush1.msra.mxu0 0.0
    %3435 = vmatprep.subr.mxu0 0.0
    %3436 = vmatpush1.msra.mxu0 0.0
    %3437 = vmatprep.subr.mxu0 0.0
    %3438 = vmatpush1.msra.mxu0 0.0
    %3439 = vmatprep.subr.mxu0 0.0
    %3440 = vmatpush1.msra.mxu0 0.0
    %3441 = vmatprep.subr.mxu0 0.0
    %3442 = vmatpush1.msra.mxu0 0.0
    %3443 = vmatprep.subr.mxu0 0.0
    %3444 = vmatpush1.msra.mxu0 0.0
    %3445 = vmatprep.subr.mxu0 0.0
    %3446 = vmatpush1.msra.mxu0 0.0
    %3447 = vmatprep.subr.mxu0 0.0
    %3448 = vmatpush1.msra.mxu0 0.0
    %3449 = vmatprep.subr.mxu0 0.0
    %3450 = vmatpush1.msra.mxu0 0.0
    %3451 = vmatprep.subr.mxu0 0.0
    %3452 = vmatpush1.msra.mxu0 0.0
    %3453 = vmatprep.subr.mxu0 0.0
    %3454 = vmatpush1.msra.mxu0 0.0
    %3455 = vmatprep.subr.mxu0 0.0
    %3456 = vmatpush1.msra.mxu0 0.0
    %3457 = vmatprep.subr.mxu0 0.0
    %3458 = vmatpush1.msra.mxu0 0.0
    %3459 = vmatprep.subr.mxu0 0.0
    %3460 = vmatpush1.msra.mxu0 0.0
    %3461 = vmatprep.subr.mxu0 0.0
    %3462 = vmatpush1.msra.mxu0 0.0
    %3463 = vmatprep.subr.mxu0 0.0
    %3464 = vmatpush1.msra.mxu0 0.0
    %3465 = vmatprep.subr.mxu0 0.0
    %3466 = vmatpush1.msra.mxu0 0.0
    %3467 = vmatprep.subr.mxu0 0.0
    %3468 = vmatpush1.msra.mxu0 0.0
    %3469 = vmatprep.subr.mxu0 0.0
    %3470 = vmatpush1.msra.mxu0 0.0
    %3471 = vmatprep.subr.mxu0 0.0
    %3472 = vmatpush1.msra.mxu0 0.0
    %3473 = vmatprep.subr.mxu0 0.0
    %3474 = vmatpush1.msra.mxu0 0.0
    %3475 = vmatprep.subr.mxu0 0.0
    %3476 = vmatpush1.msra.mxu0 0.0
    %3477 = vmatprep.mubr.f32.mxu0 0.0
    %3478 = vmatmul.mubr.f32.gmra.mrb[0].mxu0 %v3411
    %v3479 = vpop.f32.mrb[0].mxu0
    %v3480 = vadd.f32 0.0, %v3479
    %v3481 = vpop.f32.mrb[0].mxu0
    %3482 = vdwg.mxu0
    %3483 = vst.msk [vmem:[#allocation3 + $0xe] sm:$0x1] %vm430, %v3480
    %3484 = vmatprep.subr.mxu0 0.0
    %3485 = vmatpush1.msra.mxu0 %v276
    %3486 = vmatprep.subr.mxu0 0.0
    %3487 = vmatpush1.msra.mxu0 %v277
    %3488 = vmatprep.subr.mxu0 0.0
    %3489 = vmatpush1.msra.mxu0 %v278
    %3490 = vmatprep.subr.mxu0 0.0
    %3491 = vmatpush1.msra.mxu0 %v279
    %3492 = vmatprep.subr.mxu0 0.0
    %3493 = vmatpush1.msra.mxu0 %v280
    %3494 = vmatprep.subr.mxu0 0.0
    %3495 = vmatpush1.msra.mxu0 0.0
    %3496 = vmatprep.subr.mxu0 0.0
    %3497 = vmatpush1.msra.mxu0 0.0
    %3498 = vmatprep.subr.mxu0 0.0
    %3499 = vmatpush1.msra.mxu0 0.0
    %3500 = vmatprep.subr.mxu0 0.0
    %3501 = vmatpush1.msra.mxu0 0.0
    %3502 = vmatprep.subr.mxu0 0.0
    %3503 = vmatpush1.msra.mxu0 0.0
    %3504 = vmatprep.subr.mxu0 0.0
    %3505 = vmatpush1.msra.mxu0 0.0
    %3506 = vmatprep.subr.mxu0 0.0
    %3507 = vmatpush1.msra.mxu0 0.0
    %3508 = vmatprep.subr.mxu0 0.0
    %3509 = vmatpush1.msra.mxu0 0.0
    %3510 = vmatprep.subr.mxu0 0.0
    %3511 = vmatpush1.msra.mxu0 0.0
    %3512 = vmatprep.subr.mxu0 0.0
    %3513 = vmatpush1.msra.mxu0 0.0
    %3514 = vmatprep.subr.mxu0 0.0
    %3515 = vmatpush1.msra.mxu0 0.0
    %3516 = vmatprep.subr.mxu0 0.0
    %3517 = vmatpush1.msra.mxu0 0.0
    %3518 = vmatprep.subr.mxu0 0.0
    %3519 = vmatpush1.msra.mxu0 0.0
    %3520 = vmatprep.subr.mxu0 0.0
    %3521 = vmatpush1.msra.mxu0 0.0
    %3522 = vmatprep.subr.mxu0 0.0
    %3523 = vmatpush1.msra.mxu0 0.0
    %3524 = vmatprep.subr.mxu0 0.0
    %3525 = vmatpush1.msra.mxu0 0.0
    %3526 = vmatprep.subr.mxu0 0.0
    %3527 = vmatpush1.msra.mxu0 0.0
    %3528 = vmatprep.subr.mxu0 0.0
    %3529 = vmatpush1.msra.mxu0 0.0
    %3530 = vmatprep.subr.mxu0 0.0
    %3531 = vmatpush1.msra.mxu0 0.0
    %3532 = vmatprep.subr.mxu0 0.0
    %3533 = vmatpush1.msra.mxu0 0.0
    %3534 = vmatprep.subr.mxu0 0.0
    %3535 = vmatpush1.msra.mxu0 0.0
    %3536 = vmatprep.subr.mxu0 0.0
    %3537 = vmatpush1.msra.mxu0 0.0
    %3538 = vmatprep.subr.mxu0 0.0
    %3539 = vmatpush1.msra.mxu0 0.0
    %3540 = vmatprep.subr.mxu0 0.0
    %3541 = vmatpush1.msra.mxu0 0.0
    %3542 = vmatprep.subr.mxu0 0.0
    %3543 = vmatpush1.msra.mxu0 0.0
    %3544 = vmatprep.subr.mxu0 0.0
    %3545 = vmatpush1.msra.mxu0 0.0
    %3546 = vmatprep.subr.mxu0 0.0
    %3547 = vmatpush1.msra.mxu0 0.0
    %3548 = vmatprep.mubr.f32.mxu0 0.0
    %3549 = vmatmul.mubr.f32.gmra.mrb[0].mxu0 %v3411
    %v3550 = vpop.f32.mrb[0].mxu0
    %v3551 = vadd.f32 0.0, %v3550
    %v3552 = vpop.f32.mrb[0].mxu0
    %3553 = vdwg.mxu0
    %3554 = vst.msk [vmem:[#allocation4 + $0x5] sm:$0x1] %vm430, %v3551
    %v3555 = vld [vmem:[#allocation2 + $0xf] sm:$0x1]
    %3556 = vmatprep.subr.mxu0 0.0
    %3557 = vmatpush1.msra.mxu0 %v266
    %3558 = vmatprep.subr.mxu0 0.0
    %3559 = vmatpush1.msra.mxu0 %v267
    %3560 = vmatprep.subr.mxu0 0.0
    %3561 = vmatpush1.msra.mxu0 %v268
    %3562 = vmatprep.subr.mxu0 0.0
    %3563 = vmatpush1.msra.mxu0 %v269
    %3564 = vmatprep.subr.mxu0 0.0
    %3565 = vmatpush1.msra.mxu0 %v270
    %3566 = vmatprep.subr.mxu0 0.0
    %3567 = vmatpush1.msra.mxu0 0.0
    %3568 = vmatprep.subr.mxu0 0.0
    %3569 = vmatpush1.msra.mxu0 0.0
    %3570 = vmatprep.subr.mxu0 0.0
    %3571 = vmatpush1.msra.mxu0 0.0
    %3572 = vmatprep.subr.mxu0 0.0
    %3573 = vmatpush1.msra.mxu0 0.0
    %3574 = vmatprep.subr.mxu0 0.0
    %3575 = vmatpush1.msra.mxu0 0.0
    %3576 = vmatprep.subr.mxu0 0.0
    %3577 = vmatpush1.msra.mxu0 0.0
    %3578 = vmatprep.subr.mxu0 0.0
    %3579 = vmatpush1.msra.mxu0 0.0
    %3580 = vmatprep.subr.mxu0 0.0
    %3581 = vmatpush1.msra.mxu0 0.0
    %3582 = vmatprep.subr.mxu0 0.0
    %3583 = vmatpush1.msra.mxu0 0.0
    %3584 = vmatprep.subr.mxu0 0.0
    %3585 = vmatpush1.msra.mxu0 0.0
    %3586 = vmatprep.subr.mxu0 0.0
    %3587 = vmatpush1.msra.mxu0 0.0
    %3588 = vmatprep.subr.mxu0 0.0
    %3589 = vmatpush1.msra.mxu0 0.0
    %3590 = vmatprep.subr.mxu0 0.0
    %3591 = vmatpush1.msra.mxu0 0.0
    %3592 = vmatprep.subr.mxu0 0.0
    %3593 = vmatpush1.msra.mxu0 0.0
    %3594 = vmatprep.subr.mxu0 0.0
    %3595 = vmatpush1.msra.mxu0 0.0
    %3596 = vmatprep.subr.mxu0 0.0
    %3597 = vmatpush1.msra.mxu0 0.0
    %3598 = vmatprep.subr.mxu0 0.0
    %3599 = vmatpush1.msra.mxu0 0.0
    %3600 = vmatprep.subr.mxu0 0.0
    %3601 = vmatpush1.msra.mxu0 0.0
    %3602 = vmatprep.subr.mxu0 0.0
    %3603 = vmatpush1.msra.mxu0 0.0
    %3604 = vmatprep.subr.mxu0 0.0
    %3605 = vmatpush1.msra.mxu0 0.0
    %3606 = vmatprep.subr.mxu0 0.0
    %3607 = vmatpush1.msra.mxu0 0.0
    %3608 = vmatprep.subr.mxu0 0.0
    %3609 = vmatpush1.msra.mxu0 0.0
    %3610 = vmatprep.subr.mxu0 0.0
    %3611 = vmatpush1.msra.mxu0 0.0
    %3612 = vmatprep.subr.mxu0 0.0
    %3613 = vmatpush1.msra.mxu0 0.0
    %3614 = vmatprep.subr.mxu0 0.0
    %3615 = vmatpush1.msra.mxu0 0.0
    %3616 = vmatprep.subr.mxu0 0.0
    %3617 = vmatpush1.msra.mxu0 0.0
    %3618 = vmatprep.subr.mxu0 0.0
    %3619 = vmatpush1.msra.mxu0 0.0
    %3620 = vmatprep.mubr.f32.mxu0 0.0
    %3621 = vmatmul.mubr.f32.gmra.mrb[0].mxu0 %v3411
    %v3622 = vpop.f32.mrb[0].mxu0
    %v3623 = vadd.f32 0.0, %v3622
    %v3624 = vpop.f32.mrb[0].mxu0
    %3625 = vdwg.mxu0
    %v3626 = vadd.f32 %v3555, %v3623
    %v3627 = vtanh.pop %v3626
    %v3629 = vsel %vm261, %v3627, 0
    %3631 = vmatprep.subr.mxu0 0.0
    %3632 = vmatpush1.msra.mxu0 %v271
    %3633 = vmatprep.subr.mxu0 0.0
    %3634 = vmatpush1.msra.mxu0 %v272
    %3635 = vmatprep.subr.mxu0 0.0
    %3636 = vmatpush1.msra.mxu0 %v273
    %3637 = vmatprep.subr.mxu0 0.0
    %3638 = vmatpush1.msra.mxu0 %v274
    %3639 = vmatprep.subr.mxu0 0.0
    %3640 = vmatpush1.msra.mxu0 %v275
    %3641 = vmatprep.subr.mxu0 0.0
    %3642 = vmatpush1.msra.mxu0 0.0
    %3643 = vmatprep.subr.mxu0 0.0
    %3644 = vmatpush1.msra.mxu0 0.0
    %3645 = vmatprep.subr.mxu0 0.0
    %3646 = vmatpush1.msra.mxu0 0.0
    %3647 = vmatprep.subr.mxu0 0.0
    %3648 = vmatpush1.msra.mxu0 0.0
    %3649 = vmatprep.subr.mxu0 0.0
    %3650 = vmatpush1.msra.mxu0 0.0
    %3651 = vmatprep.subr.mxu0 0.0
    %3652 = vmatpush1.msra.mxu0 0.0
    %3653 = vmatprep.subr.mxu0 0.0
    %3654 = vmatpush1.msra.mxu0 0.0
    %3655 = vmatprep.subr.mxu0 0.0
    %3656 = vmatpush1.msra.mxu0 0.0
    %3657 = vmatprep.subr.mxu0 0.0
    %3658 = vmatpush1.msra.mxu0 0.0
    %3659 = vmatprep.subr.mxu0 0.0
    %3660 = vmatpush1.msra.mxu0 0.0
    %3661 = vmatprep.subr.mxu0 0.0
    %3662 = vmatpush1.msra.mxu0 0.0
    %3663 = vmatprep.subr.mxu0 0.0
    %3664 = vmatpush1.msra.mxu0 0.0
    %3665 = vmatprep.subr.mxu0 0.0
    %3666 = vmatpush1.msra.mxu0 0.0
    %3667 = vmatprep.subr.mxu0 0.0
    %3668 = vmatpush1.msra.mxu0 0.0
    %3669 = vmatprep.subr.mxu0 0.0
    %3670 = vmatpush1.msra.mxu0 0.0
    %3671 = vmatprep.subr.mxu0 0.0
    %3672 = vmatpush1.msra.mxu0 0.0
    %3673 = vmatprep.subr.mxu0 0.0
    %3674 = vmatpush1.msra.mxu0 0.0
    %3675 = vmatprep.subr.mxu0 0.0
    %3676 = vmatpush1.msra.mxu0 0.0
    %3677 = vmatprep.subr.mxu0 0.0
    %3678 = vmatpush1.msra.mxu0 0.0
    %3679 = vmatprep.subr.mxu0 0.0
    %3680 = vmatpush1.msra.mxu0 0.0
    %3681 = vmatprep.subr.mxu0 0.0
    %3682 = vmatpush1.msra.mxu0 0.0
    %3683 = vmatprep.subr.mxu0 0.0
    %3684 = vmatpush1.msra.mxu0 0.0
    %3685 = vmatprep.subr.mxu0 0.0
    %3686 = vmatpush1.msra.mxu0 0.0
    %3687 = vmatprep.subr.mxu0 0.0
    %3688 = vmatpush1.msra.mxu0 0.0
    %3689 = vmatprep.subr.mxu0 0.0
    %3690 = vmatpush1.msra.mxu0 0.0
    %3691 = vmatprep.subr.mxu0 0.0
    %3692 = vmatpush1.msra.mxu0 0.0
    %3693 = vmatprep.subr.mxu0 0.0
    %3694 = vmatpush1.msra.mxu0 0.0
    %3695 = vmatprep.mubr.f32.mxu0 0.0
    %3696 = vmatmul.mubr.f32.gmra.mrb[0].mxu0 %v3629
    %v3697 = vpop.f32.mrb[0].mxu0
    %v3698 = vadd.f32 0.0, %v3697
    %v3699 = vpop.f32.mrb[0].mxu0
    %3700 = vdwg.mxu0
    %3701 = vst.msk [vmem:[#allocation3 + $0xf] sm:$0x1] %vm430, %v3698
    %3702 = vmatprep.subr.mxu0 0.0
    %3703 = vmatpush1.msra.mxu0 %v276
    %3704 = vmatprep.subr.mxu0 0.0
    %3705 = vmatpush1.msra.mxu0 %v277
    %3706 = vmatprep.subr.mxu0 0.0
    %3707 = vmatpush1.msra.mxu0 %v278
    %3708 = vmatprep.subr.mxu0 0.0
    %3709 = vmatpush1.msra.mxu0 %v279
    %3710 = vmatprep.subr.mxu0 0.0
    %3711 = vmatpush1.msra.mxu0 %v280
    %3712 = vmatprep.subr.mxu0 0.0
    %3713 = vmatpush1.msra.mxu0 0.0
    %3714 = vmatprep.subr.mxu0 0.0
    %3715 = vmatpush1.msra.mxu0 0.0
    %3716 = vmatprep.subr.mxu0 0.0
    %3717 = vmatpush1.msra.mxu0 0.0
    %3718 = vmatprep.subr.mxu0 0.0
    %3719 = vmatpush1.msra.mxu0 0.0
    %3720 = vmatprep.subr.mxu0 0.0
    %3721 = vmatpush1.msra.mxu0 0.0
    %3722 = vmatprep.subr.mxu0 0.0
    %3723 = vmatpush1.msra.mxu0 0.0
    %3724 = vmatprep.subr.mxu0 0.0
    %3725 = vmatpush1.msra.mxu0 0.0
    %3726 = vmatprep.subr.mxu0 0.0
    %3727 = vmatpush1.msra.mxu0 0.0
    %3728 = vmatprep.subr.mxu0 0.0
    %3729 = vmatpush1.msra.mxu0 0.0
    %3730 = vmatprep.subr.mxu0 0.0
    %3731 = vmatpush1.msra.mxu0 0.0
    %3732 = vmatprep.subr.mxu0 0.0
    %3733 = vmatpush1.msra.mxu0 0.0
    %3734 = vmatprep.subr.mxu0 0.0
    %3735 = vmatpush1.msra.mxu0 0.0
    %3736 = vmatprep.subr.mxu0 0.0
    %3737 = vmatpush1.msra.mxu0 0.0
    %3738 = vmatprep.subr.mxu0 0.0
    %3739 = vmatpush1.msra.mxu0 0.0
    %3740 = vmatprep.subr.mxu0 0.0
    %3741 = vmatpush1.msra.mxu0 0.0
    %3742 = vmatprep.subr.mxu0 0.0
    %3743 = vmatpush1.msra.mxu0 0.0
    %3744 = vmatprep.subr.mxu0 0.0
    %3745 = vmatpush1.msra.mxu0 0.0
    %3746 = vmatprep.subr.mxu0 0.0
    %3747 = vmatpush1.msra.mxu0 0.0
    %3748 = vmatprep.subr.mxu0 0.0
    %3749 = vmatpush1.msra.mxu0 0.0
    %3750 = vmatprep.subr.mxu0 0.0
    %3751 = vmatpush1.msra.mxu0 0.0
    %3752 = vmatprep.subr.mxu0 0.0
    %3753 = vmatpush1.msra.mxu0 0.0
    %3754 = vmatprep.subr.mxu0 0.0
    %3755 = vmatpush1.msra.mxu0 0.0
    %3756 = vmatprep.subr.mxu0 0.0
    %3757 = vmatpush1.msra.mxu0 0.0
    %3758 = vmatprep.subr.mxu0 0.0
    %3759 = vmatpush1.msra.mxu0 0.0
    %3760 = vmatprep.subr.mxu0 0.0
    %3761 = vmatpush1.msra.mxu0 0.0
    %3762 = vmatprep.subr.mxu0 0.0
    %3763 = vmatpush1.msra.mxu0 0.0
    %3764 = vmatprep.subr.mxu0 0.0
    %3765 = vmatpush1.msra.mxu0 0.0
    %3766 = vmatprep.mubr.f32.mxu0 0.0
    %3767 = vmatmul.mubr.f32.gmra.mrb[0].mxu0 %v3629
    %v3768 = vpop.f32.mrb[0].mxu0
    %v3769 = vadd.f32 0.0, %v3768
    %v3770 = vpop.f32.mrb[0].mxu0
    %3771 = vdwg.mxu0
    %3772 = vst.msk [vmem:[#allocation4 + $0x4] sm:$0x1] %vm430, %v3769
    %v3773 = vld [vmem:[#allocation2 + $0x10] sm:$0x1]
    %3774 = vmatprep.subr.mxu0 0.0
    %3775 = vmatpush1.msra.mxu0 %v266
    %3776 = vmatprep.subr.mxu0 0.0
    %3777 = vmatpush1.msra.mxu0 %v267
    %3778 = vmatprep.subr.mxu0 0.0
    %3779 = vmatpush1.msra.mxu0 %v268
    %3780 = vmatprep.subr.mxu0 0.0
    %3781 = vmatpush1.msra.mxu0 %v269
    %3782 = vmatprep.subr.mxu0 0.0
    %3783 = vmatpush1.msra.mxu0 %v270
    %3784 = vmatprep.subr.mxu0 0.0
    %3785 = vmatpush1.msra.mxu0 0.0
    %3786 = vmatprep.subr.mxu0 0.0
    %3787 = vmatpush1.msra.mxu0 0.0
    %3788 = vmatprep.subr.mxu0 0.0
    %3789 = vmatpush1.msra.mxu0 0.0
    %3790 = vmatprep.subr.mxu0 0.0
    %3791 = vmatpush1.msra.mxu0 0.0
    %3792 = vmatprep.subr.mxu0 0.0
    %3793 = vmatpush1.msra.mxu0 0.0
    %3794 = vmatprep.subr.mxu0 0.0
    %3795 = vmatpush1.msra.mxu0 0.0
    %3796 = vmatprep.subr.mxu0 0.0
    %3797 = vmatpush1.msra.mxu0 0.0
    %3798 = vmatprep.subr.mxu0 0.0
    %3799 = vmatpush1.msra.mxu0 0.0
    %3800 = vmatprep.subr.mxu0 0.0
    %3801 = vmatpush1.msra.mxu0 0.0
    %3802 = vmatprep.subr.mxu0 0.0
    %3803 = vmatpush1.msra.mxu0 0.0
    %3804 = vmatprep.subr.mxu0 0.0
    %3805 = vmatpush1.msra.mxu0 0.0
    %3806 = vmatprep.subr.mxu0 0.0
    %3807 = vmatpush1.msra.mxu0 0.0
    %3808 = vmatprep.subr.mxu0 0.0
    %3809 = vmatpush1.msra.mxu0 0.0
    %3810 = vmatprep.subr.mxu0 0.0
    %3811 = vmatpush1.msra.mxu0 0.0
    %3812 = vmatprep.subr.mxu0 0.0
    %3813 = vmatpush1.msra.mxu0 0.0
    %3814 = vmatprep.subr.mxu0 0.0
    %3815 = vmatpush1.msra.mxu0 0.0
    %3816 = vmatprep.subr.mxu0 0.0
    %3817 = vmatpush1.msra.mxu0 0.0
    %3818 = vmatprep.subr.mxu0 0.0
    %3819 = vmatpush1.msra.mxu0 0.0
    %3820 = vmatprep.subr.mxu0 0.0
    %3821 = vmatpush1.msra.mxu0 0.0
    %3822 = vmatprep.subr.mxu0 0.0
    %3823 = vmatpush1.msra.mxu0 0.0
    %3824 = vmatprep.subr.mxu0 0.0
    %3825 = vmatpush1.msra.mxu0 0.0
    %3826 = vmatprep.subr.mxu0 0.0
    %3827 = vmatpush1.msra.mxu0 0.0
    %3828 = vmatprep.subr.mxu0 0.0
    %3829 = vmatpush1.msra.mxu0 0.0
    %3830 = vmatprep.subr.mxu0 0.0
    %3831 = vmatpush1.msra.mxu0 0.0
    %3832 = vmatprep.subr.mxu0 0.0
    %3833 = vmatpush1.msra.mxu0 0.0
    %3834 = vmatprep.subr.mxu0 0.0
    %3835 = vmatpush1.msra.mxu0 0.0
    %3836 = vmatprep.subr.mxu0 0.0
    %3837 = vmatpush1.msra.mxu0 0.0
    %3838 = vmatprep.mubr.f32.mxu0 0.0
    %3839 = vmatmul.mubr.f32.gmra.mrb[0].mxu0 %v3629
    %v3840 = vpop.f32.mrb[0].mxu0
    %v3841 = vadd.f32 0.0, %v3840
    %v3842 = vpop.f32.mrb[0].mxu0
    %3843 = vdwg.mxu0
    %v3844 = vadd.f32 %v3773, %v3841
    %v3845 = vtanh.pop %v3844
    %v3847 = vsel %vm261, %v3845, 0
    %3849 = vmatprep.subr.mxu0 0.0
    %3850 = vmatpush1.msra.mxu0 %v271
    %3851 = vmatprep.subr.mxu0 0.0
    %3852 = vmatpush1.msra.mxu0 %v272
    %3853 = vmatprep.subr.mxu0 0.0
    %3854 = vmatpush1.msra.mxu0 %v273
    %3855 = vmatprep.subr.mxu0 0.0
    %3856 = vmatpush1.msra.mxu0 %v274
    %3857 = vmatprep.subr.mxu0 0.0
    %3858 = vmatpush1.msra.mxu0 %v275
    %3859 = vmatprep.subr.mxu0 0.0
    %3860 = vmatpush1.msra.mxu0 0.0
    %3861 = vmatprep.subr.mxu0 0.0
    %3862 = vmatpush1.msra.mxu0 0.0
    %3863 = vmatprep.subr.mxu0 0.0
    %3864 = vmatpush1.msra.mxu0 0.0
    %3865 = vmatprep.subr.mxu0 0.0
    %3866 = vmatpush1.msra.mxu0 0.0
    %3867 = vmatprep.subr.mxu0 0.0
    %3868 = vmatpush1.msra.mxu0 0.0
    %3869 = vmatprep.subr.mxu0 0.0
    %3870 = vmatpush1.msra.mxu0 0.0
    %3871 = vmatprep.subr.mxu0 0.0
    %3872 = vmatpush1.msra.mxu0 0.0
    %3873 = vmatprep.subr.mxu0 0.0
    %3874 = vmatpush1.msra.mxu0 0.0
    %3875 = vmatprep.subr.mxu0 0.0
    %3876 = vmatpush1.msra.mxu0 0.0
    %3877 = vmatprep.subr.mxu0 0.0
    %3878 = vmatpush1.msra.mxu0 0.0
    %3879 = vmatprep.subr.mxu0 0.0
    %3880 = vmatpush1.msra.mxu0 0.0
    %3881 = vmatprep.subr.mxu0 0.0
    %3882 = vmatpush1.msra.mxu0 0.0
    %3883 = vmatprep.subr.mxu0 0.0
    %3884 = vmatpush1.msra.mxu0 0.0
    %3885 = vmatprep.subr.mxu0 0.0
    %3886 = vmatpush1.msra.mxu0 0.0
    %3887 = vmatprep.subr.mxu0 0.0
    %3888 = vmatpush1.msra.mxu0 0.0
    %3889 = vmatprep.subr.mxu0 0.0
    %3890 = vmatpush1.msra.mxu0 0.0
    %3891 = vmatprep.subr.mxu0 0.0
    %3892 = vmatpush1.msra.mxu0 0.0
    %3893 = vmatprep.subr.mxu0 0.0
    %3894 = vmatpush1.msra.mxu0 0.0
    %3895 = vmatprep.subr.mxu0 0.0
    %3896 = vmatpush1.msra.mxu0 0.0
    %3897 = vmatprep.subr.mxu0 0.0
    %3898 = vmatpush1.msra.mxu0 0.0
    %3899 = vmatprep.subr.mxu0 0.0
    %3900 = vmatpush1.msra.mxu0 0.0
    %3901 = vmatprep.subr.mxu0 0.0
    %3902 = vmatpush1.msra.mxu0 0.0
    %3903 = vmatprep.subr.mxu0 0.0
    %3904 = vmatpush1.msra.mxu0 0.0
    %3905 = vmatprep.subr.mxu0 0.0
    %3906 = vmatpush1.msra.mxu0 0.0
    %3907 = vmatprep.subr.mxu0 0.0
    %3908 = vmatpush1.msra.mxu0 0.0
    %3909 = vmatprep.subr.mxu0 0.0
    %3910 = vmatpush1.msra.mxu0 0.0
    %3911 = vmatprep.subr.mxu0 0.0
    %3912 = vmatpush1.msra.mxu0 0.0
    %3913 = vmatprep.mubr.f32.mxu0 0.0
    %3914 = vmatmul.mubr.f32.gmra.mrb[0].mxu0 %v3847
    %v3915 = vpop.f32.mrb[0].mxu0
    %v3916 = vadd.f32 0.0, %v3915
    %v3917 = vpop.f32.mrb[0].mxu0
    %3918 = vdwg.mxu0
    %3919 = vst.msk [vmem:[#allocation3 + $0x10] sm:$0x1] %vm430, %v3916
    %3920 = vmatprep.subr.mxu0 0.0
    %3921 = vmatpush1.msra.mxu0 %v276
    %3922 = vmatprep.subr.mxu0 0.0
    %3923 = vmatpush1.msra.mxu0 %v277
    %3924 = vmatprep.subr.mxu0 0.0
    %3925 = vmatpush1.msra.mxu0 %v278
    %3926 = vmatprep.subr.mxu0 0.0
    %3927 = vmatpush1.msra.mxu0 %v279
    %3928 = vmatprep.subr.mxu0 0.0
    %3929 = vmatpush1.msra.mxu0 %v280
    %3930 = vmatprep.subr.mxu0 0.0
    %3931 = vmatpush1.msra.mxu0 0.0
    %3932 = vmatprep.subr.mxu0 0.0
    %3933 = vmatpush1.msra.mxu0 0.0
    %3934 = vmatprep.subr.mxu0 0.0
    %3935 = vmatpush1.msra.mxu0 0.0
    %3936 = vmatprep.subr.mxu0 0.0
    %3937 = vmatpush1.msra.mxu0 0.0
    %3938 = vmatprep.subr.mxu0 0.0
    %3939 = vmatpush1.msra.mxu0 0.0
    %3940 = vmatprep.subr.mxu0 0.0
    %3941 = vmatpush1.msra.mxu0 0.0
    %3942 = vmatprep.subr.mxu0 0.0
    %3943 = vmatpush1.msra.mxu0 0.0
    %3944 = vmatprep.subr.mxu0 0.0
    %3945 = vmatpush1.msra.mxu0 0.0
    %3946 = vmatprep.subr.mxu0 0.0
    %3947 = vmatpush1.msra.mxu0 0.0
    %3948 = vmatprep.subr.mxu0 0.0
    %3949 = vmatpush1.msra.mxu0 0.0
    %3950 = vmatprep.subr.mxu0 0.0
    %3951 = vmatpush1.msra.mxu0 0.0
    %3952 = vmatprep.subr.mxu0 0.0
    %3953 = vmatpush1.msra.mxu0 0.0
    %3954 = vmatprep.subr.mxu0 0.0
    %3955 = vmatpush1.msra.mxu0 0.0
    %3956 = vmatprep.subr.mxu0 0.0
    %3957 = vmatpush1.msra.mxu0 0.0
    %3958 = vmatprep.subr.mxu0 0.0
    %3959 = vmatpush1.msra.mxu0 0.0
    %3960 = vmatprep.subr.mxu0 0.0
    %3961 = vmatpush1.msra.mxu0 0.0
    %3962 = vmatprep.subr.mxu0 0.0
    %3963 = vmatpush1.msra.mxu0 0.0
    %3964 = vmatprep.subr.mxu0 0.0
    %3965 = vmatpush1.msra.mxu0 0.0
    %3966 = vmatprep.subr.mxu0 0.0
    %3967 = vmatpush1.msra.mxu0 0.0
    %3968 = vmatprep.subr.mxu0 0.0
    %3969 = vmatpush1.msra.mxu0 0.0
    %3970 = vmatprep.subr.mxu0 0.0
    %3971 = vmatpush1.msra.mxu0 0.0
    %3972 = vmatprep.subr.mxu0 0.0
    %3973 = vmatpush1.msra.mxu0 0.0
    %3974 = vmatprep.subr.mxu0 0.0
    %3975 = vmatpush1.msra.mxu0 0.0
    %3976 = vmatprep.subr.mxu0 0.0
    %3977 = vmatpush1.msra.mxu0 0.0
    %3978 = vmatprep.subr.mxu0 0.0
    %3979 = vmatpush1.msra.mxu0 0.0
    %3980 = vmatprep.subr.mxu0 0.0
    %3981 = vmatpush1.msra.mxu0 0.0
    %3982 = vmatprep.subr.mxu0 0.0
    %3983 = vmatpush1.msra.mxu0 0.0
    %3984 = vmatprep.mubr.f32.mxu0 0.0
    %3985 = vmatmul.mubr.f32.gmra.mrb[0].mxu0 %v3847
    %v3986 = vpop.f32.mrb[0].mxu0
    %v3987 = vadd.f32 0.0, %v3986
    %v3988 = vpop.f32.mrb[0].mxu0
    %3989 = vdwg.mxu0
    %3990 = vst.msk [vmem:[#allocation4 + $0x3] sm:$0x1] %vm430, %v3987
    %v3991 = vld [vmem:[#allocation2 + $0x11] sm:$0x1]
    %3992 = vmatprep.subr.mxu0 0.0
    %3993 = vmatpush1.msra.mxu0 %v266
    %3994 = vmatprep.subr.mxu0 0.0
    %3995 = vmatpush1.msra.mxu0 %v267
    %3996 = vmatprep.subr.mxu0 0.0
    %3997 = vmatpush1.msra.mxu0 %v268
    %3998 = vmatprep.subr.mxu0 0.0
    %3999 = vmatpush1.msra.mxu0 %v269
    %4000 = vmatprep.subr.mxu0 0.0
    %4001 = vmatpush1.msra.mxu0 %v270
    %4002 = vmatprep.subr.mxu0 0.0
    %4003 = vmatpush1.msra.mxu0 0.0
    %4004 = vmatprep.subr.mxu0 0.0
    %4005 = vmatpush1.msra.mxu0 0.0
    %4006 = vmatprep.subr.mxu0 0.0
    %4007 = vmatpush1.msra.mxu0 0.0
    %4008 = vmatprep.subr.mxu0 0.0
    %4009 = vmatpush1.msra.mxu0 0.0
    %4010 = vmatprep.subr.mxu0 0.0
    %4011 = vmatpush1.msra.mxu0 0.0
    %4012 = vmatprep.subr.mxu0 0.0
    %4013 = vmatpush1.msra.mxu0 0.0
    %4014 = vmatprep.subr.mxu0 0.0
    %4015 = vmatpush1.msra.mxu0 0.0
    %4016 = vmatprep.subr.mxu0 0.0
    %4017 = vmatpush1.msra.mxu0 0.0
    %4018 = vmatprep.subr.mxu0 0.0
    %4019 = vmatpush1.msra.mxu0 0.0
    %4020 = vmatprep.subr.mxu0 0.0
    %4021 = vmatpush1.msra.mxu0 0.0
    %4022 = vmatprep.subr.mxu0 0.0
    %4023 = vmatpush1.msra.mxu0 0.0
    %4024 = vmatprep.subr.mxu0 0.0
    %4025 = vmatpush1.msra.mxu0 0.0
    %4026 = vmatprep.subr.mxu0 0.0
    %4027 = vmatpush1.msra.mxu0 0.0
    %4028 = vmatprep.subr.mxu0 0.0
    %4029 = vmatpush1.msra.mxu0 0.0
    %4030 = vmatprep.subr.mxu0 0.0
    %4031 = vmatpush1.msra.mxu0 0.0
    %4032 = vmatprep.subr.mxu0 0.0
    %4033 = vmatpush1.msra.mxu0 0.0
    %4034 = vmatprep.subr.mxu0 0.0
    %4035 = vmatpush1.msra.mxu0 0.0
    %4036 = vmatprep.subr.mxu0 0.0
    %4037 = vmatpush1.msra.mxu0 0.0
    %4038 = vmatprep.subr.mxu0 0.0
    %4039 = vmatpush1.msra.mxu0 0.0
    %4040 = vmatprep.subr.mxu0 0.0
    %4041 = vmatpush1.msra.mxu0 0.0
    %4042 = vmatprep.subr.mxu0 0.0
    %4043 = vmatpush1.msra.mxu0 0.0
    %4044 = vmatprep.subr.mxu0 0.0
    %4045 = vmatpush1.msra.mxu0 0.0
    %4046 = vmatprep.subr.mxu0 0.0
    %4047 = vmatpush1.msra.mxu0 0.0
    %4048 = vmatprep.subr.mxu0 0.0
    %4049 = vmatpush1.msra.mxu0 0.0
    %4050 = vmatprep.subr.mxu0 0.0
    %4051 = vmatpush1.msra.mxu0 0.0
    %4052 = vmatprep.subr.mxu0 0.0
    %4053 = vmatpush1.msra.mxu0 0.0
    %4054 = vmatprep.subr.mxu0 0.0
    %4055 = vmatpush1.msra.mxu0 0.0
    %4056 = vmatprep.mubr.f32.mxu0 0.0
    %4057 = vmatmul.mubr.f32.gmra.mrb[0].mxu0 %v3847
    %v4058 = vpop.f32.mrb[0].mxu0
    %v4059 = vadd.f32 0.0, %v4058
    %v4060 = vpop.f32.mrb[0].mxu0
    %4061 = vdwg.mxu0
    %v4062 = vadd.f32 %v3991, %v4059
    %v4063 = vtanh.pop %v4062
    %v4065 = vsel %vm261, %v4063, 0
    %4067 = vmatprep.subr.mxu0 0.0
    %4068 = vmatpush1.msra.mxu0 %v271
    %4069 = vmatprep.subr.mxu0 0.0
    %4070 = vmatpush1.msra.mxu0 %v272
    %4071 = vmatprep.subr.mxu0 0.0
    %4072 = vmatpush1.msra.mxu0 %v273
    %4073 = vmatprep.subr.mxu0 0.0
    %4074 = vmatpush1.msra.mxu0 %v274
    %4075 = vmatprep.subr.mxu0 0.0
    %4076 = vmatpush1.msra.mxu0 %v275
    %4077 = vmatprep.subr.mxu0 0.0
    %4078 = vmatpush1.msra.mxu0 0.0
    %4079 = vmatprep.subr.mxu0 0.0
    %4080 = vmatpush1.msra.mxu0 0.0
    %4081 = vmatprep.subr.mxu0 0.0
    %4082 = vmatpush1.msra.mxu0 0.0
    %4083 = vmatprep.subr.mxu0 0.0
    %4084 = vmatpush1.msra.mxu0 0.0
    %4085 = vmatprep.subr.mxu0 0.0
    %4086 = vmatpush1.msra.mxu0 0.0
    %4087 = vmatprep.subr.mxu0 0.0
    %4088 = vmatpush1.msra.mxu0 0.0
    %4089 = vmatprep.subr.mxu0 0.0
    %4090 = vmatpush1.msra.mxu0 0.0
    %4091 = vmatprep.subr.mxu0 0.0
    %4092 = vmatpush1.msra.mxu0 0.0
    %4093 = vmatprep.subr.mxu0 0.0
    %4094 = vmatpush1.msra.mxu0 0.0
    %4095 = vmatprep.subr.mxu0 0.0
    %4096 = vmatpush1.msra.mxu0 0.0
    %4097 = vmatprep.subr.mxu0 0.0
    %4098 = vmatpush1.msra.mxu0 0.0
    %4099 = vmatprep.subr.mxu0 0.0
    %4100 = vmatpush1.msra.mxu0 0.0
    %4101 = vmatprep.subr.mxu0 0.0
    %4102 = vmatpush1.msra.mxu0 0.0
    %4103 = vmatprep.subr.mxu0 0.0
    %4104 = vmatpush1.msra.mxu0 0.0
    %4105 = vmatprep.subr.mxu0 0.0
    %4106 = vmatpush1.msra.mxu0 0.0
    %4107 = vmatprep.subr.mxu0 0.0
    %4108 = vmatpush1.msra.mxu0 0.0
    %4109 = vmatprep.subr.mxu0 0.0
    %4110 = vmatpush1.msra.mxu0 0.0
    %4111 = vmatprep.subr.mxu0 0.0
    %4112 = vmatpush1.msra.mxu0 0.0
    %4113 = vmatprep.subr.mxu0 0.0
    %4114 = vmatpush1.msra.mxu0 0.0
    %4115 = vmatprep.subr.mxu0 0.0
    %4116 = vmatpush1.msra.mxu0 0.0
    %4117 = vmatprep.subr.mxu0 0.0
    %4118 = vmatpush1.msra.mxu0 0.0
    %4119 = vmatprep.subr.mxu0 0.0
    %4120 = vmatpush1.msra.mxu0 0.0
    %4121 = vmatprep.subr.mxu0 0.0
    %4122 = vmatpush1.msra.mxu0 0.0
    %4123 = vmatprep.subr.mxu0 0.0
    %4124 = vmatpush1.msra.mxu0 0.0
    %4125 = vmatprep.subr.mxu0 0.0
    %4126 = vmatpush1.msra.mxu0 0.0
    %4127 = vmatprep.subr.mxu0 0.0
    %4128 = vmatpush1.msra.mxu0 0.0
    %4129 = vmatprep.subr.mxu0 0.0
    %4130 = vmatpush1.msra.mxu0 0.0
    %4131 = vmatprep.mubr.f32.mxu0 0.0
    %4132 = vmatmul.mubr.f32.gmra.mrb[0].mxu0 %v4065
    %v4133 = vpop.f32.mrb[0].mxu0
    %v4134 = vadd.f32 0.0, %v4133
    %v4135 = vpop.f32.mrb[0].mxu0
    %4136 = vdwg.mxu0
    %4137 = vst.msk [vmem:[#allocation3 + $0x11] sm:$0x1] %vm430, %v4134
    %4138 = vmatprep.subr.mxu0 0.0
    %4139 = vmatpush1.msra.mxu0 %v276
    %4140 = vmatprep.subr.mxu0 0.0
    %4141 = vmatpush1.msra.mxu0 %v277
    %4142 = vmatprep.subr.mxu0 0.0
    %4143 = vmatpush1.msra.mxu0 %v278
    %4144 = vmatprep.subr.mxu0 0.0
    %4145 = vmatpush1.msra.mxu0 %v279
    %4146 = vmatprep.subr.mxu0 0.0
    %4147 = vmatpush1.msra.mxu0 %v280
    %4148 = vmatprep.subr.mxu0 0.0
    %4149 = vmatpush1.msra.mxu0 0.0
    %4150 = vmatprep.subr.mxu0 0.0
    %4151 = vmatpush1.msra.mxu0 0.0
    %4152 = vmatprep.subr.mxu0 0.0
    %4153 = vmatpush1.msra.mxu0 0.0
    %4154 = vmatprep.subr.mxu0 0.0
    %4155 = vmatpush1.msra.mxu0 0.0
    %4156 = vmatprep.subr.mxu0 0.0
    %4157 = vmatpush1.msra.mxu0 0.0
    %4158 = vmatprep.subr.mxu0 0.0
    %4159 = vmatpush1.msra.mxu0 0.0
    %4160 = vmatprep.subr.mxu0 0.0
    %4161 = vmatpush1.msra.mxu0 0.0
    %4162 = vmatprep.subr.mxu0 0.0
    %4163 = vmatpush1.msra.mxu0 0.0
    %4164 = vmatprep.subr.mxu0 0.0
    %4165 = vmatpush1.msra.mxu0 0.0
    %4166 = vmatprep.subr.mxu0 0.0
    %4167 = vmatpush1.msra.mxu0 0.0
    %4168 = vmatprep.subr.mxu0 0.0
    %4169 = vmatpush1.msra.mxu0 0.0
    %4170 = vmatprep.subr.mxu0 0.0
    %4171 = vmatpush1.msra.mxu0 0.0
    %4172 = vmatprep.subr.mxu0 0.0
    %4173 = vmatpush1.msra.mxu0 0.0
    %4174 = vmatprep.subr.mxu0 0.0
    %4175 = vmatpush1.msra.mxu0 0.0
    %4176 = vmatprep.subr.mxu0 0.0
    %4177 = vmatpush1.msra.mxu0 0.0
    %4178 = vmatprep.subr.mxu0 0.0
    %4179 = vmatpush1.msra.mxu0 0.0
    %4180 = vmatprep.subr.mxu0 0.0
    %4181 = vmatpush1.msra.mxu0 0.0
    %4182 = vmatprep.subr.mxu0 0.0
    %4183 = vmatpush1.msra.mxu0 0.0
    %4184 = vmatprep.subr.mxu0 0.0
    %4185 = vmatpush1.msra.mxu0 0.0
    %4186 = vmatprep.subr.mxu0 0.0
    %4187 = vmatpush1.msra.mxu0 0.0
    %4188 = vmatprep.subr.mxu0 0.0
    %4189 = vmatpush1.msra.mxu0 0.0
    %4190 = vmatprep.subr.mxu0 0.0
    %4191 = vmatpush1.msra.mxu0 0.0
    %4192 = vmatprep.subr.mxu0 0.0
    %4193 = vmatpush1.msra.mxu0 0.0
    %4194 = vmatprep.subr.mxu0 0.0
    %4195 = vmatpush1.msra.mxu0 0.0
    %4196 = vmatprep.subr.mxu0 0.0
    %4197 = vmatpush1.msra.mxu0 0.0
    %4198 = vmatprep.subr.mxu0 0.0
    %4199 = vmatpush1.msra.mxu0 0.0
    %4200 = vmatprep.subr.mxu0 0.0
    %4201 = vmatpush1.msra.mxu0 0.0
    %4202 = vmatprep.mubr.f32.mxu0 0.0
    %4203 = vmatmul.mubr.f32.gmra.mrb[0].mxu0 %v4065
    %v4204 = vpop.f32.mrb[0].mxu0
    %v4205 = vadd.f32 0.0, %v4204
    %v4206 = vpop.f32.mrb[0].mxu0
    %4207 = vdwg.mxu0
    %4208 = vst.msk [vmem:[#allocation4 + $0x2] sm:$0x1] %vm430, %v4205
    %v4209 = vld [vmem:[#allocation2 + $0x12] sm:$0x1]
    %4210 = vmatprep.subr.mxu0 0.0
    %4211 = vmatpush1.msra.mxu0 %v266
    %4212 = vmatprep.subr.mxu0 0.0
    %4213 = vmatpush1.msra.mxu0 %v267
    %4214 = vmatprep.subr.mxu0 0.0
    %4215 = vmatpush1.msra.mxu0 %v268
    %4216 = vmatprep.subr.mxu0 0.0
    %4217 = vmatpush1.msra.mxu0 %v269
    %4218 = vmatprep.subr.mxu0 0.0
    %4219 = vmatpush1.msra.mxu0 %v270
    %4220 = vmatprep.subr.mxu0 0.0
    %4221 = vmatpush1.msra.mxu0 0.0
    %4222 = vmatprep.subr.mxu0 0.0
    %4223 = vmatpush1.msra.mxu0 0.0
    %4224 = vmatprep.subr.mxu0 0.0
    %4225 = vmatpush1.msra.mxu0 0.0
    %4226 = vmatprep.subr.mxu0 0.0
    %4227 = vmatpush1.msra.mxu0 0.0
    %4228 = vmatprep.subr.mxu0 0.0
    %4229 = vmatpush1.msra.mxu0 0.0
    %4230 = vmatprep.subr.mxu0 0.0
    %4231 = vmatpush1.msra.mxu0 0.0
    %4232 = vmatprep.subr.mxu0 0.0
    %4233 = vmatpush1.msra.mxu0 0.0
    %4234 = vmatprep.subr.mxu0 0.0
    %4235 = vmatpush1.msra.mxu0 0.0
    %4236 = vmatprep.subr.mxu0 0.0
    %4237 = vmatpush1.msra.mxu0 0.0
    %4238 = vmatprep.subr.mxu0 0.0
    %4239 = vmatpush1.msra.mxu0 0.0
    %4240 = vmatprep.subr.mxu0 0.0
    %4241 = vmatpush1.msra.mxu0 0.0
    %4242 = vmatprep.subr.mxu0 0.0
    %4243 = vmatpush1.msra.mxu0 0.0
    %4244 = vmatprep.subr.mxu0 0.0
    %4245 = vmatpush1.msra.mxu0 0.0
    %4246 = vmatprep.subr.mxu0 0.0
    %4247 = vmatpush1.msra.mxu0 0.0
    %4248 = vmatprep.subr.mxu0 0.0
    %4249 = vmatpush1.msra.mxu0 0.0
    %4250 = vmatprep.subr.mxu0 0.0
    %4251 = vmatpush1.msra.mxu0 0.0
    %4252 = vmatprep.subr.mxu0 0.0
    %4253 = vmatpush1.msra.mxu0 0.0
    %4254 = vmatprep.subr.mxu0 0.0
    %4255 = vmatpush1.msra.mxu0 0.0
    %4256 = vmatprep.subr.mxu0 0.0
    %4257 = vmatpush1.msra.mxu0 0.0
    %4258 = vmatprep.subr.mxu0 0.0
    %4259 = vmatpush1.msra.mxu0 0.0
    %4260 = vmatprep.subr.mxu0 0.0
    %4261 = vmatpush1.msra.mxu0 0.0
    %4262 = vmatprep.subr.mxu0 0.0
    %4263 = vmatpush1.msra.mxu0 0.0
    %4264 = vmatprep.subr.mxu0 0.0
    %4265 = vmatpush1.msra.mxu0 0.0
    %4266 = vmatprep.subr.mxu0 0.0
    %4267 = vmatpush1.msra.mxu0 0.0
    %4268 = vmatprep.subr.mxu0 0.0
    %4269 = vmatpush1.msra.mxu0 0.0
    %4270 = vmatprep.subr.mxu0 0.0
    %4271 = vmatpush1.msra.mxu0 0.0
    %4272 = vmatprep.subr.mxu0 0.0
    %4273 = vmatpush1.msra.mxu0 0.0
    %4274 = vmatprep.mubr.f32.mxu0 0.0
    %4275 = vmatmul.mubr.f32.gmra.mrb[0].mxu0 %v4065
    %v4276 = vpop.f32.mrb[0].mxu0
    %v4277 = vadd.f32 0.0, %v4276
    %v4278 = vpop.f32.mrb[0].mxu0
    %4279 = vdwg.mxu0
    %v4280 = vadd.f32 %v4209, %v4277
    %v4281 = vtanh.pop %v4280
    %v4283 = vsel %vm261, %v4281, 0
    %4285 = vmatprep.subr.mxu0 0.0
    %4286 = vmatpush1.msra.mxu0 %v271
    %4287 = vmatprep.subr.mxu0 0.0
    %4288 = vmatpush1.msra.mxu0 %v272
    %4289 = vmatprep.subr.mxu0 0.0
    %4290 = vmatpush1.msra.mxu0 %v273
    %4291 = vmatprep.subr.mxu0 0.0
    %4292 = vmatpush1.msra.mxu0 %v274
    %4293 = vmatprep.subr.mxu0 0.0
    %4294 = vmatpush1.msra.mxu0 %v275
    %4295 = vmatprep.subr.mxu0 0.0
    %4296 = vmatpush1.msra.mxu0 0.0
    %4297 = vmatprep.subr.mxu0 0.0
    %4298 = vmatpush1.msra.mxu0 0.0
    %4299 = vmatprep.subr.mxu0 0.0
    %4300 = vmatpush1.msra.mxu0 0.0
    %4301 = vmatprep.subr.mxu0 0.0
    %4302 = vmatpush1.msra.mxu0 0.0
    %4303 = vmatprep.subr.mxu0 0.0
    %4304 = vmatpush1.msra.mxu0 0.0
    %4305 = vmatprep.subr.mxu0 0.0
    %4306 = vmatpush1.msra.mxu0 0.0
    %4307 = vmatprep.subr.mxu0 0.0
    %4308 = vmatpush1.msra.mxu0 0.0
    %4309 = vmatprep.subr.mxu0 0.0
    %4310 = vmatpush1.msra.mxu0 0.0
    %4311 = vmatprep.subr.mxu0 0.0
    %4312 = vmatpush1.msra.mxu0 0.0
    %4313 = vmatprep.subr.mxu0 0.0
    %4314 = vmatpush1.msra.mxu0 0.0
    %4315 = vmatprep.subr.mxu0 0.0
    %4316 = vmatpush1.msra.mxu0 0.0
    %4317 = vmatprep.subr.mxu0 0.0
    %4318 = vmatpush1.msra.mxu0 0.0
    %4319 = vmatprep.subr.mxu0 0.0
    %4320 = vmatpush1.msra.mxu0 0.0
    %4321 = vmatprep.subr.mxu0 0.0
    %4322 = vmatpush1.msra.mxu0 0.0
    %4323 = vmatprep.subr.mxu0 0.0
    %4324 = vmatpush1.msra.mxu0 0.0
    %4325 = vmatprep.subr.mxu0 0.0
    %4326 = vmatpush1.msra.mxu0 0.0
    %4327 = vmatprep.subr.mxu0 0.0
    %4328 = vmatpush1.msra.mxu0 0.0
    %4329 = vmatprep.subr.mxu0 0.0
    %4330 = vmatpush1.msra.mxu0 0.0
    %4331 = vmatprep.subr.mxu0 0.0
    %4332 = vmatpush1.msra.mxu0 0.0
    %4333 = vmatprep.subr.mxu0 0.0
    %4334 = vmatpush1.msra.mxu0 0.0
    %4335 = vmatprep.subr.mxu0 0.0
    %4336 = vmatpush1.msra.mxu0 0.0
    %4337 = vmatprep.subr.mxu0 0.0
    %4338 = vmatpush1.msra.mxu0 0.0
    %4339 = vmatprep.subr.mxu0 0.0
    %4340 = vmatpush1.msra.mxu0 0.0
    %4341 = vmatprep.subr.mxu0 0.0
    %4342 = vmatpush1.msra.mxu0 0.0
    %4343 = vmatprep.subr.mxu0 0.0
    %4344 = vmatpush1.msra.mxu0 0.0
    %4345 = vmatprep.subr.mxu0 0.0
    %4346 = vmatpush1.msra.mxu0 0.0
    %4347 = vmatprep.subr.mxu0 0.0
    %4348 = vmatpush1.msra.mxu0 0.0
    %4349 = vmatprep.mubr.f32.mxu0 0.0
    %4350 = vmatmul.mubr.f32.gmra.mrb[0].mxu0 %v4283
    %v4351 = vpop.f32.mrb[0].mxu0
    %v4352 = vadd.f32 0.0, %v4351
    %v4353 = vpop.f32.mrb[0].mxu0
    %4354 = vdwg.mxu0
    %4355 = vst.msk [vmem:[#allocation3 + $0x12] sm:$0x1] %vm430, %v4352
    %4356 = vmatprep.subr.mxu0 0.0
    %4357 = vmatpush1.msra.mxu0 %v276
    %4358 = vmatprep.subr.mxu0 0.0
    %4359 = vmatpush1.msra.mxu0 %v277
    %4360 = vmatprep.subr.mxu0 0.0
    %4361 = vmatpush1.msra.mxu0 %v278
    %4362 = vmatprep.subr.mxu0 0.0
    %4363 = vmatpush1.msra.mxu0 %v279
    %4364 = vmatprep.subr.mxu0 0.0
    %4365 = vmatpush1.msra.mxu0 %v280
    %4366 = vmatprep.subr.mxu0 0.0
    %4367 = vmatpush1.msra.mxu0 0.0
    %4368 = vmatprep.subr.mxu0 0.0
    %4369 = vmatpush1.msra.mxu0 0.0
    %4370 = vmatprep.subr.mxu0 0.0
    %4371 = vmatpush1.msra.mxu0 0.0
    %4372 = vmatprep.subr.mxu0 0.0
    %4373 = vmatpush1.msra.mxu0 0.0
    %4374 = vmatprep.subr.mxu0 0.0
    %4375 = vmatpush1.msra.mxu0 0.0
    %4376 = vmatprep.subr.mxu0 0.0
    %4377 = vmatpush1.msra.mxu0 0.0
    %4378 = vmatprep.subr.mxu0 0.0
    %4379 = vmatpush1.msra.mxu0 0.0
    %4380 = vmatprep.subr.mxu0 0.0
    %4381 = vmatpush1.msra.mxu0 0.0
    %4382 = vmatprep.subr.mxu0 0.0
    %4383 = vmatpush1.msra.mxu0 0.0
    %4384 = vmatprep.subr.mxu0 0.0
    %4385 = vmatpush1.msra.mxu0 0.0
    %4386 = vmatprep.subr.mxu0 0.0
    %4387 = vmatpush1.msra.mxu0 0.0
    %4388 = vmatprep.subr.mxu0 0.0
    %4389 = vmatpush1.msra.mxu0 0.0
    %4390 = vmatprep.subr.mxu0 0.0
    %4391 = vmatpush1.msra.mxu0 0.0
    %4392 = vmatprep.subr.mxu0 0.0
    %4393 = vmatpush1.msra.mxu0 0.0
    %4394 = vmatprep.subr.mxu0 0.0
    %4395 = vmatpush1.msra.mxu0 0.0
    %4396 = vmatprep.subr.mxu0 0.0
    %4397 = vmatpush1.msra.mxu0 0.0
    %4398 = vmatprep.subr.mxu0 0.0
    %4399 = vmatpush1.msra.mxu0 0.0
    %4400 = vmatprep.subr.mxu0 0.0
    %4401 = vmatpush1.msra.mxu0 0.0
    %4402 = vmatprep.subr.mxu0 0.0
    %4403 = vmatpush1.msra.mxu0 0.0
    %4404 = vmatprep.subr.mxu0 0.0
    %4405 = vmatpush1.msra.mxu0 0.0
    %4406 = vmatprep.subr.mxu0 0.0
    %4407 = vmatpush1.msra.mxu0 0.0
    %4408 = vmatprep.subr.mxu0 0.0
    %4409 = vmatpush1.msra.mxu0 0.0
    %4410 = vmatprep.subr.mxu0 0.0
    %4411 = vmatpush1.msra.mxu0 0.0
    %4412 = vmatprep.subr.mxu0 0.0
    %4413 = vmatpush1.msra.mxu0 0.0
    %4414 = vmatprep.subr.mxu0 0.0
    %4415 = vmatpush1.msra.mxu0 0.0
    %4416 = vmatprep.subr.mxu0 0.0
    %4417 = vmatpush1.msra.mxu0 0.0
    %4418 = vmatprep.subr.mxu0 0.0
    %4419 = vmatpush1.msra.mxu0 0.0
    %4420 = vmatprep.mubr.f32.mxu0 0.0
    %4421 = vmatmul.mubr.f32.gmra.mrb[0].mxu0 %v4283
    %v4422 = vpop.f32.mrb[0].mxu0
    %v4423 = vadd.f32 0.0, %v4422
    %v4424 = vpop.f32.mrb[0].mxu0
    %4425 = vdwg.mxu0
    %4426 = vst.msk [vmem:[#allocation4 + $0x1] sm:$0x1] %vm430, %v4423
    %v4427 = vld [vmem:[#allocation2 + $0x13] sm:$0x1]
    %4428 = vmatprep.subr.mxu0 0.0
    %4429 = vmatpush1.msra.mxu0 %v266
    %4430 = vmatprep.subr.mxu0 0.0
    %4431 = vmatpush1.msra.mxu0 %v267
    %4432 = vmatprep.subr.mxu0 0.0
    %4433 = vmatpush1.msra.mxu0 %v268
    %4434 = vmatprep.subr.mxu0 0.0
    %4435 = vmatpush1.msra.mxu0 %v269
    %4436 = vmatprep.subr.mxu0 0.0
    %4437 = vmatpush1.msra.mxu0 %v270
    %4438 = vmatprep.subr.mxu0 0.0
    %4439 = vmatpush1.msra.mxu0 0.0
    %4440 = vmatprep.subr.mxu0 0.0
    %4441 = vmatpush1.msra.mxu0 0.0
    %4442 = vmatprep.subr.mxu0 0.0
    %4443 = vmatpush1.msra.mxu0 0.0
    %4444 = vmatprep.subr.mxu0 0.0
    %4445 = vmatpush1.msra.mxu0 0.0
    %4446 = vmatprep.subr.mxu0 0.0
    %4447 = vmatpush1.msra.mxu0 0.0
    %4448 = vmatprep.subr.mxu0 0.0
    %4449 = vmatpush1.msra.mxu0 0.0
    %4450 = vmatprep.subr.mxu0 0.0
    %4451 = vmatpush1.msra.mxu0 0.0
    %4452 = vmatprep.subr.mxu0 0.0
    %4453 = vmatpush1.msra.mxu0 0.0
    %4454 = vmatprep.subr.mxu0 0.0
    %4455 = vmatpush1.msra.mxu0 0.0
    %4456 = vmatprep.subr.mxu0 0.0
    %4457 = vmatpush1.msra.mxu0 0.0
    %4458 = vmatprep.subr.mxu0 0.0
    %4459 = vmatpush1.msra.mxu0 0.0
    %4460 = vmatprep.subr.mxu0 0.0
    %4461 = vmatpush1.msra.mxu0 0.0
    %4462 = vmatprep.subr.mxu0 0.0
    %4463 = vmatpush1.msra.mxu0 0.0
    %4464 = vmatprep.subr.mxu0 0.0
    %4465 = vmatpush1.msra.mxu0 0.0
    %4466 = vmatprep.subr.mxu0 0.0
    %4467 = vmatpush1.msra.mxu0 0.0
    %4468 = vmatprep.subr.mxu0 0.0
    %4469 = vmatpush1.msra.mxu0 0.0
    %4470 = vmatprep.subr.mxu0 0.0
    %4471 = vmatpush1.msra.mxu0 0.0
    %4472 = vmatprep.subr.mxu0 0.0
    %4473 = vmatpush1.msra.mxu0 0.0
    %4474 = vmatprep.subr.mxu0 0.0
    %4475 = vmatpush1.msra.mxu0 0.0
    %4476 = vmatprep.subr.mxu0 0.0
    %4477 = vmatpush1.msra.mxu0 0.0
    %4478 = vmatprep.subr.mxu0 0.0
    %4479 = vmatpush1.msra.mxu0 0.0
    %4480 = vmatprep.subr.mxu0 0.0
    %4481 = vmatpush1.msra.mxu0 0.0
    %4482 = vmatprep.subr.mxu0 0.0
    %4483 = vmatpush1.msra.mxu0 0.0
    %4484 = vmatprep.subr.mxu0 0.0
    %4485 = vmatpush1.msra.mxu0 0.0
    %4486 = vmatprep.subr.mxu0 0.0
    %4487 = vmatpush1.msra.mxu0 0.0
    %4488 = vmatprep.subr.mxu0 0.0
    %4489 = vmatpush1.msra.mxu0 0.0
    %4490 = vmatprep.subr.mxu0 0.0
    %4491 = vmatpush1.msra.mxu0 0.0
    %4492 = vmatprep.mubr.f32.mxu0 0.0
    %4493 = vmatmul.mubr.f32.gmra.mrb[0].mxu0 %v4283
    %v4494 = vpop.f32.mrb[0].mxu0
    %v4495 = vadd.f32 0.0, %v4494
    %v4496 = vpop.f32.mrb[0].mxu0
    %4497 = vdwg.mxu0
    %v4498 = vadd.f32 %v4427, %v4495
    %v4499 = vtanh.pop %v4498
    %v4501 = vsel %vm261, %v4499, 0
    %4503 = vmatprep.subr.mxu0 0.0
    %4504 = vmatpush1.msra.mxu0 %v271
    %4505 = vmatprep.subr.mxu0 0.0
    %4506 = vmatpush1.msra.mxu0 %v272
    %4507 = vmatprep.subr.mxu0 0.0
    %4508 = vmatpush1.msra.mxu0 %v273
    %4509 = vmatprep.subr.mxu0 0.0
    %4510 = vmatpush1.msra.mxu0 %v274
    %4511 = vmatprep.subr.mxu0 0.0
    %4512 = vmatpush1.msra.mxu0 %v275
    %4513 = vmatprep.subr.mxu0 0.0
    %4514 = vmatpush1.msra.mxu0 0.0
    %4515 = vmatprep.subr.mxu0 0.0
    %4516 = vmatpush1.msra.mxu0 0.0
    %4517 = vmatprep.subr.mxu0 0.0
    %4518 = vmatpush1.msra.mxu0 0.0
    %4519 = vmatprep.subr.mxu0 0.0
    %4520 = vmatpush1.msra.mxu0 0.0
    %4521 = vmatprep.subr.mxu0 0.0
    %4522 = vmatpush1.msra.mxu0 0.0
    %4523 = vmatprep.subr.mxu0 0.0
    %4524 = vmatpush1.msra.mxu0 0.0
    %4525 = vmatprep.subr.mxu0 0.0
    %4526 = vmatpush1.msra.mxu0 0.0
    %4527 = vmatprep.subr.mxu0 0.0
    %4528 = vmatpush1.msra.mxu0 0.0
    %4529 = vmatprep.subr.mxu0 0.0
    %4530 = vmatpush1.msra.mxu0 0.0
    %4531 = vmatprep.subr.mxu0 0.0
    %4532 = vmatpush1.msra.mxu0 0.0
    %4533 = vmatprep.subr.mxu0 0.0
    %4534 = vmatpush1.msra.mxu0 0.0
    %4535 = vmatprep.subr.mxu0 0.0
    %4536 = vmatpush1.msra.mxu0 0.0
    %4537 = vmatprep.subr.mxu0 0.0
    %4538 = vmatpush1.msra.mxu0 0.0
    %4539 = vmatprep.subr.mxu0 0.0
    %4540 = vmatpush1.msra.mxu0 0.0
    %4541 = vmatprep.subr.mxu0 0.0
    %4542 = vmatpush1.msra.mxu0 0.0
    %4543 = vmatprep.subr.mxu0 0.0
    %4544 = vmatpush1.msra.mxu0 0.0
    %4545 = vmatprep.subr.mxu0 0.0
    %4546 = vmatpush1.msra.mxu0 0.0
    %4547 = vmatprep.subr.mxu0 0.0
    %4548 = vmatpush1.msra.mxu0 0.0
    %4549 = vmatprep.subr.mxu0 0.0
    %4550 = vmatpush1.msra.mxu0 0.0
    %4551 = vmatprep.subr.mxu0 0.0
    %4552 = vmatpush1.msra.mxu0 0.0
    %4553 = vmatprep.subr.mxu0 0.0
    %4554 = vmatpush1.msra.mxu0 0.0
    %4555 = vmatprep.subr.mxu0 0.0
    %4556 = vmatpush1.msra.mxu0 0.0
    %4557 = vmatprep.subr.mxu0 0.0
    %4558 = vmatpush1.msra.mxu0 0.0
    %4559 = vmatprep.subr.mxu0 0.0
    %4560 = vmatpush1.msra.mxu0 0.0
    %4561 = vmatprep.subr.mxu0 0.0
    %4562 = vmatpush1.msra.mxu0 0.0
    %4563 = vmatprep.subr.mxu0 0.0
    %4564 = vmatpush1.msra.mxu0 0.0
    %4565 = vmatprep.subr.mxu0 0.0
    %4566 = vmatpush1.msra.mxu0 0.0
    %4567 = vmatprep.mubr.f32.mxu0 0.0
    %4568 = vmatmul.mubr.f32.gmra.mrb[0].mxu0 %v4501
    %v4569 = vpop.f32.mrb[0].mxu0
    %v4570 = vadd.f32 0.0, %v4569
    %v4571 = vpop.f32.mrb[0].mxu0
    %4572 = vdwg.mxu0
    %4573 = vst.msk [vmem:[#allocation3 + $0x13] sm:$0x1] %vm430, %v4570
    %4574 = vmatprep.subr.mxu0 0.0
    %4575 = vmatpush1.msra.mxu0 %v276
    %4576 = vmatprep.subr.mxu0 0.0
    %4577 = vmatpush1.msra.mxu0 %v277
    %4578 = vmatprep.subr.mxu0 0.0
    %4579 = vmatpush1.msra.mxu0 %v278
    %4580 = vmatprep.subr.mxu0 0.0
    %4581 = vmatpush1.msra.mxu0 %v279
    %4582 = vmatprep.subr.mxu0 0.0
    %4583 = vmatpush1.msra.mxu0 %v280
    %4584 = vmatprep.subr.mxu0 0.0
    %4585 = vmatpush1.msra.mxu0 0.0
    %4586 = vmatprep.subr.mxu0 0.0
    %4587 = vmatpush1.msra.mxu0 0.0
    %4588 = vmatprep.subr.mxu0 0.0
    %4589 = vmatpush1.msra.mxu0 0.0
    %4590 = vmatprep.subr.mxu0 0.0
    %4591 = vmatpush1.msra.mxu0 0.0
    %4592 = vmatprep.subr.mxu0 0.0
    %4593 = vmatpush1.msra.mxu0 0.0
    %4594 = vmatprep.subr.mxu0 0.0
    %4595 = vmatpush1.msra.mxu0 0.0
    %4596 = vmatprep.subr.mxu0 0.0
    %4597 = vmatpush1.msra.mxu0 0.0
    %4598 = vmatprep.subr.mxu0 0.0
    %4599 = vmatpush1.msra.mxu0 0.0
    %4600 = vmatprep.subr.mxu0 0.0
    %4601 = vmatpush1.msra.mxu0 0.0
    %4602 = vmatprep.subr.mxu0 0.0
    %4603 = vmatpush1.msra.mxu0 0.0
    %4604 = vmatprep.subr.mxu0 0.0
    %4605 = vmatpush1.msra.mxu0 0.0
    %4606 = vmatprep.subr.mxu0 0.0
    %4607 = vmatpush1.msra.mxu0 0.0
    %4608 = vmatprep.subr.mxu0 0.0
    %4609 = vmatpush1.msra.mxu0 0.0
    %4610 = vmatprep.subr.mxu0 0.0
    %4611 = vmatpush1.msra.mxu0 0.0
    %4612 = vmatprep.subr.mxu0 0.0
    %4613 = vmatpush1.msra.mxu0 0.0
    %4614 = vmatprep.subr.mxu0 0.0
    %4615 = vmatpush1.msra.mxu0 0.0
    %4616 = vmatprep.subr.mxu0 0.0
    %4617 = vmatpush1.msra.mxu0 0.0
    %4618 = vmatprep.subr.mxu0 0.0
    %4619 = vmatpush1.msra.mxu0 0.0
    %4620 = vmatprep.subr.mxu0 0.0
    %4621 = vmatpush1.msra.mxu0 0.0
    %4622 = vmatprep.subr.mxu0 0.0
    %4623 = vmatpush1.msra.mxu0 0.0
    %4624 = vmatprep.subr.mxu0 0.0
    %4625 = vmatpush1.msra.mxu0 0.0
    %4626 = vmatprep.subr.mxu0 0.0
    %4627 = vmatpush1.msra.mxu0 0.0
    %4628 = vmatprep.subr.mxu0 0.0
    %4629 = vmatpush1.msra.mxu0 0.0
    %4630 = vmatprep.subr.mxu0 0.0
    %4631 = vmatpush1.msra.mxu0 0.0
    %4632 = vmatprep.subr.mxu0 0.0
    %4633 = vmatpush1.msra.mxu0 0.0
    %4634 = vmatprep.subr.mxu0 0.0
    %4635 = vmatpush1.msra.mxu0 0.0
    %4636 = vmatprep.subr.mxu0 0.0
    %4637 = vmatpush1.msra.mxu0 0.0
    %4638 = vmatprep.mubr.f32.mxu0 0.0
    %4639 = vmatmul.mubr.f32.gmra.mrb[0].mxu0 %v4501
    %v4640 = vpop.f32.mrb[0].mxu0
    %v4641 = vadd.f32 0.0, %v4640
    %v4642 = vpop.f32.mrb[0].mxu0
    %4643 = vdwg.mxu0
    %4644 = vst.msk [vmem:[#allocation4] sm:$0x1] %vm430, %v4641
    %v4645 = vld [vmem:[#allocation3] sm:$0xff]
    %v4646 = vld [vmem:[#allocation3 + $0x8] sm:$0xff]
    %v4647 = vld [vmem:[#allocation3 + $0x10] sm:$0xf]
    %v4648 = vld [vmem:[#allocation4] sm:$0xff]
    %v4649 = vld [vmem:[#allocation4 + $0x8] sm:$0xff]
    %v4650 = vld [vmem:[#allocation4 + $0x10] sm:$0xf]
    %v4651 = vadd.f32 %v4645, %v4648
    %v4652 = vadd.f32 %v4646, %v4649
    %v4653 = vadd.f32 %v4647, %v4650
    %v4654 = vld [vmem:[%s6] sm:$0x1]
    %v4656 = vlaneseq
    %v4657 = vshrl.u32 %v4656, 7
    %v4658 = vsub.s32 0, %v4657
    %v4659 = vrot.slane %v4654, %v4658
    %v4661 = vadd.f32 %v4651, %v4659
    %v4662 = vadd.f32 %v4652, %v4659
    %v4663 = vadd.f32 %v4653, %v4659
    %vm4664 = vcmask 15360
    %4665 = vst.msk [vmem:[%s7] sm:$0xff] %vm4664, %v4661
    %4666 = vst.msk [vmem:[%s7 + $0x8] sm:$0xff] %vm4664, %v4662
    %vm4667 = vcmask 11264
    %4668 = vst.msk [vmem:[%s7 + $0x10] sm:$0xf] %vm4667, %v4663
    // Predicated region
    $region34: #{tpu_custom_call.1} parent=1 // pred_check
      _
    $region35: #{tpu_custom_call.1} parent=1 // pred_check_branch
      %4670 = sbr.rel (0) target = $region37
    $region36: #{tpu_custom_call.1} parent=1 // pred_region
      _
    $region37: #{tpu_custom_call.1} parent=1 // pred_fallthru
      _
    // Predicated region
    $region38: #{tpu_custom_call.1} parent=1 // pred_check
      _
    $region39: #{tpu_custom_call.1} parent=1 // pred_check_branch
      %4672 = sbr.rel (0) target = $region41
    $region40: #{tpu_custom_call.1} parent=1 // pred_region
      _
    $region41: #{tpu_custom_call.1} parent=1 // pred_fallthru
      _
    %4673 = vsyncpa [#allocation6], 1

</llo_original>
